<compile_context>
chip_gen: v6e
topology: v6e:2x2x1
jax: 0.10.0
libtpu: 0.0.40
codegen_flags: <defaults>
</compile_context>

<pallas_src>
import math

import jax
import jax.numpy as jnp
from jax.experimental import pallas as pl
from jax.experimental.pallas import tpu as pltpu


def _mha_kernel(q_ref, k_ref, v_ref, mask_ref,
                wq_ref, bq_ref, wk_ref, bk_ref, wv_ref, bv_ref,
                wo_ref, bo_ref, o_ref):
    """One block of TS sequence positions; M = TS * batch rows of width D."""
    cdt = wq_ref.dtype  # MXU operand dtype (f32 or bf16); accumulation is f32.

    # Input projections: three [M, D] @ [D, D] MXU matmuls.  The
    # 1/sqrt(head_dim) scale is folded into wq / bq by the wrapper.
    q_t = jnp.dot(q_ref[...], wq_ref[...],
                  preferred_element_type=jnp.float32) + bq_ref[...]
    k_t = jnp.dot(k_ref[...], wk_ref[...],
                  preferred_element_type=jnp.float32) + bk_ref[...]
    v_t = jnp.dot(v_ref[...], wv_ref[...],
                  preferred_element_type=jnp.float32) + bv_ref[...]

    # Per-position [B, B] attention expressed as one [M, M] matmul restricted
    # to the block diagonal by a precomputed additive mask (0 / -1e30).
    # TODO(synk): for configs with batch >= 128 switch to a batched
    # dot_general over [TS, B, D]; the masked [M, M] trick only pays for small B.
    scores = jax.lax.dot_general(q_t.astype(cdt), k_t.astype(cdt),
                                 (((1,), (1,)), ((), ())),
                                 preferred_element_type=jnp.float32)
    scores = scores + mask_ref[...]

    # Numerically stable softmax with an exact divide (the approximate
    # reciprocal was the source of the previous accuracy failure).
    m = jnp.max(scores, axis=-1, keepdims=True)
    e = jnp.exp(scores - m)
    attn = e / jnp.sum(e, axis=-1, keepdims=True)

    ctx = jnp.dot(attn.astype(cdt), v_t.astype(cdt),
                  preferred_element_type=jnp.float32)                    # [M, D]
    out = jnp.dot(ctx.astype(cdt), wo_ref[...],
                  preferred_element_type=jnp.float32) + bo_ref[...]      # [M, D]
    o_ref[...] = out.astype(o_ref.dtype)


def _pick_seq_block(seq_len, batch, max_rows=512):
    """Largest TS dividing seq_len with TS*batch <= max_rows rows per block."""
    best = None
    for ts in range(1, seq_len + 1):
        if seq_len % ts:
            continue
        m = ts * batch
        if m > max_rows:
            break
        # Partial blocks must satisfy the sublane constraint (f32: 8, bf16: 16).
        if ts == seq_len or m % 16 == 0:
            best = ts
    return best if best is not None else seq_len


def multi_headed_attention(q, k, v, params, n_head, *,
                           seq_block=None, compute_dtype=jnp.float32):
    """q, k, v: [S, B, D].  params: the four nn.Linear weights/biases."""
    S, B, D = q.shape
    assert D % n_head == 0
    head_dim = D // n_head
    scale = 1.0 / math.sqrt(head_dim)

    TS = _pick_seq_block(S, B) if seq_block is None else seq_block
    assert S % TS == 0, "seq_block must divide seq_len"
    M = TS * B
    assert TS == S or M % 8 == 0, "partial blocks need TS*B to be a multiple of 8"

    cdt = compute_dtype
    # Rows ordered position-major: row m = s*B + b (free, contiguous reshape).
    q2 = q.reshape(S * B, D).astype(cdt)
    k2 = k.reshape(S * B, D).astype(cdt)
    v2 = v.reshape(S * B, D).astype(cdt)

    # Per-projection weights, transposed for row-major [M, D] @ [D, D]; the
    # attention scale is folded into the query projection (zero kernel cost).
    wq_t = (params["wq"].T * scale).astype(cdt)
    wk_t = params["wk"].T.astype(cdt)
    wv_t = params["wv"].T.astype(cdt)
    wo_t = params["wo"].T.astype(cdt)
    bq = (params["bq"] * scale).reshape(1, D).astype(jnp.float32)
    bk = params["bk"].reshape(1, D).astype(jnp.float32)
    bv = params["bv"].reshape(1, D).astype(jnp.float32)
    bo = params["bo"].reshape(1, D).astype(jnp.float32)

    # Additive block-diagonal mask, built once (not per grid step): row m
    # belongs to position m // B and may only attend to rows of that position.
    pos = jnp.arange(M, dtype=jnp.int32) // B
    mask = jnp.where(pos[:, None] == pos[None, :], 0.0, -1e30).astype(jnp.float32)

    row_spec = pl.BlockSpec((M, D), lambda s: (s, 0))

    def const_spec(shape):
        return pl.BlockSpec(shape, lambda s: (0, 0))

    # TODO(synk): for d_model < 128 the output stores are not lane-dense
    # (vst.msk); real configs should use D that is a multiple of 128 (typical
    # d_model) or fold rows into lanes at the pallas_call boundary.
    out2 = pl.pallas_call(
        _mha_kernel,
        out_shape=jax.ShapeDtypeStruct((S * B, D), q.dtype),
        grid_spec=pltpu.PrefetchScalarGridSpec(
            num_scalar_prefetch=0,
            grid=(S // TS,),
            in_specs=[row_spec, row_spec, row_spec,
                      const_spec((M, M)),
                      const_spec((D, D)), const_spec((1, D)),
                      const_spec((D, D)), const_spec((1, D)),
                      const_spec((D, D)), const_spec((1, D)),
                      const_spec((D, D)), const_spec((1, D))],
            out_specs=row_spec,
        ),
        compiler_params=pltpu.CompilerParams(
            dimension_semantics=("parallel",)),
    )(q2, k2, v2, mask, wq_t, bq, wk_t, bk, wv_t, bv, wo_t, bo)

    return out2.reshape(S, B, D)


def _reference(q, k, v, params, n_head):
    """Pure-JAX reproduction of the PyTorch forward at HIGHEST precision."""
    D = q.shape[-1]
    head_dim = D // n_head
    hp = jax.lax.Precision.HIGHEST
    q_t = jnp.einsum("sbd,ed->sbe", q, params["wq"], precision=hp) + params["bq"]
    k_t = jnp.einsum("sbd,ed->sbe", k, params["wk"], precision=hp) + params["bk"]
    v_t = jnp.einsum("sbd,ed->sbe", v, params["wv"], precision=hp) + params["bv"]
    scores = jnp.einsum("sbd,scd->sbc", q_t, k_t, precision=hp) / math.sqrt(head_dim)
    attn = jax.nn.softmax(scores, axis=-1)
    ctx = jnp.einsum("sbc,scd->sbd", attn, v_t, precision=hp)
    return jnp.einsum("sbd,ed->sbe", ctx, params["wo"], precision=hp) + params["bo"]


if __name__ == "__main__":
    # Keep the pure-JAX reference (and the traced kernel dots) at full f32
    # matmul precision so the comparison is meaningful on TPU hardware.
    jax.config.update("jax_default_matmul_precision", "highest")

    S, B, D, n_head = 8, 4, 32, 4  # seq_len, batch, d_model, heads

    key = jax.random.PRNGKey(0)
    keys = jax.random.split(key, 11)
    q = jax.random.normal(keys[0], (S, B, D), dtype=jnp.float32)
    k = jax.random.normal(keys[1], (S, B, D), dtype=jnp.float32)
    v = jax.random.normal(keys[2], (S, B, D), dtype=jnp.float32)

    def lin_init(kw, kb):
        bound = 1.0 / math.sqrt(D)
        w = jax.random.uniform(kw, (D, D), jnp.float32, -bound, bound)
        b = jax.random.uniform(kb, (D,), jnp.float32, -bound, bound)
        return w, b

    wq, bq = lin_init(keys[3], keys[4])
    wk, bk = lin_init(keys[5], keys[6])
    wv, bv = lin_init(keys[7], keys[8])
    wo, bo = lin_init(keys[9], keys[10])
    params = dict(wq=wq, bq=bq, wk=wk, bk=bk, wv=wv, bv=bv, wo=wo, bo=bo)

    ref = _reference(q, k, v, params, n_head)

    # Full-precision path (f32 MXU operands, f32 accumulation).
    out_f32 = multi_headed_attention(q, k, v, params, n_head,
                                     compute_dtype=jnp.float32)
    out_f32 = jax.block_until_ready(out_f32)
    assert out_f32.shape == (S, B, D)
    assert jnp.allclose(out_f32, ref, atol=5e-3, rtol=5e-3), "f32 kernel mismatch"

    # bf16 MXU operands / f32 accumulation (perf-review recommendation).
    out_bf16 = multi_headed_attention(q, k, v, params, n_head,
                                      compute_dtype=jnp.bfloat16)
    out_bf16 = jax.block_until_ready(out_bf16)
    assert jnp.allclose(out_bf16, ref, atol=5e-2, rtol=5e-2), "bf16 kernel mismatch"

    print("KERNEL_OK")
</pallas_src>

<mosaic_0001>
module attributes {stable_mosaic.version = 11 : i64} {
  func.func @_mha_kernel(%arg0: i32, %arg1: memref<32x32xf32, #tpu.memory_space<vmem>>, %arg2: memref<32x32xf32, #tpu.memory_space<vmem>>, %arg3: memref<32x32xf32, #tpu.memory_space<vmem>>, %arg4: memref<32x32xf32, #tpu.memory_space<vmem>>, %arg5: memref<32x32xf32, #tpu.memory_space<vmem>>, %arg6: memref<1x32xf32, #tpu.memory_space<vmem>>, %arg7: memref<32x32xf32, #tpu.memory_space<vmem>>, %arg8: memref<1x32xf32, #tpu.memory_space<vmem>>, %arg9: memref<32x32xf32, #tpu.memory_space<vmem>>, %arg10: memref<1x32xf32, #tpu.memory_space<vmem>>, %arg11: memref<32x32xf32, #tpu.memory_space<vmem>>, %arg12: memref<1x32xf32, #tpu.memory_space<vmem>>, %arg13: memref<32x32xf32, #tpu.memory_space<vmem>>) attributes {dimension_semantics = [#tpu.dimension_semantics<parallel>], iteration_bounds = array<i64: 1>, scalar_prefetch = 0 : i64, scratch_operands = 0 : i64, tpu.core_type = #tpu.core_type<tc>, window_params = [{transform_indices = @transform_0, window_bounds = array<i64: 32, 32>}, {transform_indices = @transform_1, window_bounds = array<i64: 32, 32>}, {transform_indices = @transform_2, window_bounds = array<i64: 32, 32>}, {pipeline_mode = #tpu.pipeline_mode<synchronous>, transform_indices = @transform_3, window_bounds = array<i64: 32, 32>}, {pipeline_mode = #tpu.pipeline_mode<synchronous>, transform_indices = @transform_4, window_bounds = array<i64: 32, 32>}, {pipeline_mode = #tpu.pipeline_mode<synchronous>, transform_indices = @transform_5, window_bounds = array<i64: 1, 32>}, {pipeline_mode = #tpu.pipeline_mode<synchronous>, transform_indices = @transform_6, window_bounds = array<i64: 32, 32>}, {pipeline_mode = #tpu.pipeline_mode<synchronous>, transform_indices = @transform_7, window_bounds = array<i64: 1, 32>}, {pipeline_mode = #tpu.pipeline_mode<synchronous>, transform_indices = @transform_8, window_bounds = array<i64: 32, 32>}, {pipeline_mode = #tpu.pipeline_mode<synchronous>, transform_indices = @transform_9, window_bounds = array<i64: 1, 32>}, {pipeline_mode = #tpu.pipeline_mode<synchronous>, transform_indices = @transform_10, window_bounds = array<i64: 32, 32>}, {pipeline_mode = #tpu.pipeline_mode<synchronous>, transform_indices = @transform_11, window_bounds = array<i64: 1, 32>}, {transform_indices = @transform_12, window_bounds = array<i64: 32, 32>}]} {
    %c0 = arith.constant 0 : index
    %c0_0 = arith.constant 0 : index
    %0 = vector.load %arg1[%c0, %c0_0] : memref<32x32xf32, #tpu.memory_space<vmem>>, vector<32x32xf32>
    %c0_1 = arith.constant 0 : index
    %c0_2 = arith.constant 0 : index
    %1 = vector.load %arg5[%c0_1, %c0_2] : memref<32x32xf32, #tpu.memory_space<vmem>>, vector<32x32xf32>
    %cst = arith.constant dense<0.000000e+00> : vector<32x32xf32>
    %2 = tpu.matmul %0, %1, %cst {dimension_numbers = #tpu.dot_dimension_numbers<[1], [0], [0], [1], [0, 0, 1, 1], [], []>, precision = #tpu.contract_precision<fp32>} : vector<32x32xf32>, vector<32x32xf32>, vector<32x32xf32> -> vector<32x32xf32>
    %c0_3 = arith.constant 0 : index
    %c0_4 = arith.constant 0 : index
    %3 = vector.load %arg6[%c0_3, %c0_4] : memref<1x32xf32, #tpu.memory_space<vmem>>, vector<1x32xf32>
    %4 = vector.broadcast %3 : vector<1x32xf32> to vector<32x32xf32>
    %5 = arith.addf %2, %4 : vector<32x32xf32>
    %c0_5 = arith.constant 0 : index
    %c0_6 = arith.constant 0 : index
    %6 = vector.load %arg2[%c0_5, %c0_6] : memref<32x32xf32, #tpu.memory_space<vmem>>, vector<32x32xf32>
    %c0_7 = arith.constant 0 : index
    %c0_8 = arith.constant 0 : index
    %7 = vector.load %arg7[%c0_7, %c0_8] : memref<32x32xf32, #tpu.memory_space<vmem>>, vector<32x32xf32>
    %cst_9 = arith.constant dense<0.000000e+00> : vector<32x32xf32>
    %8 = tpu.matmul %6, %7, %cst_9 {dimension_numbers = #tpu.dot_dimension_numbers<[1], [0], [0], [1], [0, 0, 1, 1], [], []>, precision = #tpu.contract_precision<fp32>} : vector<32x32xf32>, vector<32x32xf32>, vector<32x32xf32> -> vector<32x32xf32>
    %c0_10 = arith.constant 0 : index
    %c0_11 = arith.constant 0 : index
    %9 = vector.load %arg8[%c0_10, %c0_11] : memref<1x32xf32, #tpu.memory_space<vmem>>, vector<1x32xf32>
    %10 = vector.broadcast %9 : vector<1x32xf32> to vector<32x32xf32>
    %11 = arith.addf %8, %10 : vector<32x32xf32>
    %c0_12 = arith.constant 0 : index
    %c0_13 = arith.constant 0 : index
    %12 = vector.load %arg3[%c0_12, %c0_13] : memref<32x32xf32, #tpu.memory_space<vmem>>, vector<32x32xf32>
    %c0_14 = arith.constant 0 : index
    %c0_15 = arith.constant 0 : index
    %13 = vector.load %arg9[%c0_14, %c0_15] : memref<32x32xf32, #tpu.memory_space<vmem>>, vector<32x32xf32>
    %cst_16 = arith.constant dense<0.000000e+00> : vector<32x32xf32>
    %14 = tpu.matmul %12, %13, %cst_16 {dimension_numbers = #tpu.dot_dimension_numbers<[1], [0], [0], [1], [0, 0, 1, 1], [], []>, precision = #tpu.contract_precision<fp32>} : vector<32x32xf32>, vector<32x32xf32>, vector<32x32xf32> -> vector<32x32xf32>
    %c0_17 = arith.constant 0 : index
    %c0_18 = arith.constant 0 : index
    %15 = vector.load %arg10[%c0_17, %c0_18] : memref<1x32xf32, #tpu.memory_space<vmem>>, vector<1x32xf32>
    %16 = vector.broadcast %15 : vector<1x32xf32> to vector<32x32xf32>
    %17 = arith.addf %14, %16 : vector<32x32xf32>
    %cst_19 = arith.constant dense<0.000000e+00> : vector<32x32xf32>
    %18 = tpu.matmul %5, %11, %cst_19 {dimension_numbers = #tpu.dot_dimension_numbers<[1], [1], [0], [0], [0, 0, 1, 0], [], []>, precision = #tpu.contract_precision<fp32>} : vector<32x32xf32>, vector<32x32xf32>, vector<32x32xf32> -> vector<32x32xf32>
    %c0_20 = arith.constant 0 : index
    %c0_21 = arith.constant 0 : index
    %19 = vector.load %arg4[%c0_20, %c0_21] : memref<32x32xf32, #tpu.memory_space<vmem>>, vector<32x32xf32>
    %20 = arith.addf %18, %19 : vector<32x32xf32>
    %cst_22 = arith.constant dense<0xFF800000> : vector<32xf32>
    %21 = vector.multi_reduction <maximumf>, %20, %cst_22 [1] : vector<32x32xf32> to vector<32xf32>
    %22 = vector.shape_cast %21 : vector<32xf32> to vector<32x1xf32>
    %23 = vector.broadcast %22 : vector<32x1xf32> to vector<32x32xf32>
    %24 = arith.subf %20, %23 : vector<32x32xf32>
    %25 = math.exp %24 : vector<32x32xf32>
    %cst_23 = arith.constant dense<0.000000e+00> : vector<32xf32>
    %26 = vector.multi_reduction <add>, %25, %cst_23 [1] : vector<32x32xf32> to vector<32xf32>
    %27 = vector.shape_cast %26 : vector<32xf32> to vector<32x1xf32>
    %28 = vector.broadcast %27 : vector<32x1xf32> to vector<32x32xf32>
    %29 = arith.divf %25, %28 : vector<32x32xf32>
    %cst_24 = arith.constant dense<0.000000e+00> : vector<32x32xf32>
    %30 = tpu.matmul %29, %17, %cst_24 {dimension_numbers = #tpu.dot_dimension_numbers<[1], [0], [0], [1], [0, 0, 1, 1], [], []>, precision = #tpu.contract_precision<fp32>} : vector<32x32xf32>, vector<32x32xf32>, vector<32x32xf32> -> vector<32x32xf32>
    %c0_25 = arith.constant 0 : index
    %c0_26 = arith.constant 0 : index
    %31 = vector.load %arg11[%c0_25, %c0_26] : memref<32x32xf32, #tpu.memory_space<vmem>>, vector<32x32xf32>
    %cst_27 = arith.constant dense<0.000000e+00> : vector<32x32xf32>
    %32 = tpu.matmul %30, %31, %cst_27 {dimension_numbers = #tpu.dot_dimension_numbers<[1], [0], [0], [1], [0, 0, 1, 1], [], []>, precision = #tpu.contract_precision<fp32>} : vector<32x32xf32>, vector<32x32xf32>, vector<32x32xf32> -> vector<32x32xf32>
    %c0_28 = arith.constant 0 : index
    %c0_29 = arith.constant 0 : index
    %33 = vector.load %arg12[%c0_28, %c0_29] : memref<1x32xf32, #tpu.memory_space<vmem>>, vector<1x32xf32>
    %34 = vector.broadcast %33 : vector<1x32xf32> to vector<32x32xf32>
    %35 = arith.addf %32, %34 : vector<32x32xf32>
    %c0_30 = arith.constant 0 : index
    %c0_31 = arith.constant 0 : index
    %36 = vector.load %arg13[%c0_30, %c0_31] : memref<32x32xf32, #tpu.memory_space<vmem>>, vector<32x32xf32>
    tpu.vector_store %arg13[%c0_30, %c0_31], %35 {strides = array<i32>} : memref<32x32xf32, #tpu.memory_space<vmem>>, vector<32x32xf32>,
    return
  }
  func.func @transform_0(%arg0: i32) -> (i32, i32) {
    %c0_i32 = arith.constant 0 : i32
    %c0_i32_0 = arith.constant 0 : i32
    return %arg0, %c0_i32 : i32, i32
  }
  func.func @transform_1(%arg0: i32) -> (i32, i32) {
    %c0_i32 = arith.constant 0 : i32
    %c0_i32_0 = arith.constant 0 : i32
    return %arg0, %c0_i32 : i32, i32
  }
  func.func @transform_2(%arg0: i32) -> (i32, i32) {
    %c0_i32 = arith.constant 0 : i32
    %c0_i32_0 = arith.constant 0 : i32
    return %arg0, %c0_i32 : i32, i32
  }
  func.func @transform_3(%arg0: i32) -> (i32, i32) {
    %c0_i32 = arith.constant 0 : i32
    %c0_i32_0 = arith.constant 0 : i32
    %c0_i32_1 = arith.constant 0 : i32
    return %c0_i32, %c0_i32_0 : i32, i32
  }
  func.func @transform_4(%arg0: i32) -> (i32, i32) {
    %c0_i32 = arith.constant 0 : i32
    %c0_i32_0 = arith.constant 0 : i32
    %c0_i32_1 = arith.constant 0 : i32
    return %c0_i32, %c0_i32_0 : i32, i32
  }
  func.func @transform_5(%arg0: i32) -> (i32, i32) {
    %c0_i32 = arith.constant 0 : i32
    %c0_i32_0 = arith.constant 0 : i32
    %c0_i32_1 = arith.constant 0 : i32
    return %c0_i32, %c0_i32_0 : i32, i32
  }
  func.func @transform_6(%arg0: i32) -> (i32, i32) {
    %c0_i32 = arith.constant 0 : i32
    %c0_i32_0 = arith.constant 0 : i32
    %c0_i32_1 = arith.constant 0 : i32
    return %c0_i32, %c0_i32_0 : i32, i32
  }
  func.func @transform_7(%arg0: i32) -> (i32, i32) {
    %c0_i32 = arith.constant 0 : i32
    %c0_i32_0 = arith.constant 0 : i32
    %c0_i32_1 = arith.constant 0 : i32
    return %c0_i32, %c0_i32_0 : i32, i32
  }
  func.func @transform_8(%arg0: i32) -> (i32, i32) {
    %c0_i32 = arith.constant 0 : i32
    %c0_i32_0 = arith.constant 0 : i32
    %c0_i32_1 = arith.constant 0 : i32
    return %c0_i32, %c0_i32_0 : i32, i32
  }
  func.func @transform_9(%arg0: i32) -> (i32, i32) {
    %c0_i32 = arith.constant 0 : i32
    %c0_i32_0 = arith.constant 0 : i32
    %c0_i32_1 = arith.constant 0 : i32
    return %c0_i32, %c0_i32_0 : i32, i32
  }
  func.func @transform_10(%arg0: i32) -> (i32, i32) {
    %c0_i32 = arith.constant 0 : i32
    %c0_i32_0 = arith.constant 0 : i32
    %c0_i32_1 = arith.constant 0 : i32
    return %c0_i32, %c0_i32_0 : i32, i32
  }
  func.func @transform_11(%arg0: i32) -> (i32, i32) {
    %c0_i32 = arith.constant 0 : i32
    %c0_i32_0 = arith.constant 0 : i32
    %c0_i32_1 = arith.constant 0 : i32
    return %c0_i32, %c0_i32_0 : i32, i32
  }
  func.func @transform_12(%arg0: i32) -> (i32, i32) {
    %c0_i32 = arith.constant 0 : i32
    %c0_i32_0 = arith.constant 0 : i32
    return %arg0, %c0_i32 : i32, i32
  }
}

</mosaic_0001>

<llo_original>
// kernel: tpu_custom_call.1
$region0: #{tpu_custom_call.1}
  #allocation0 [shape = 'u32[]', space=smem, size = 0x4, offset = 0x4, fixed_abs, tag = 'smem constant byte address 0x4 - core index']
  #allocation1 [shape = 'u32[144,128]{1,0:T(1,128)}', space=vmem, size = 0x12000, scoped, tag = 'internal scratch']
  %s0 = inlined_call_operand.hbm [shape: f32[32,32], index: 0, kind: input, shape index: {}]
  %s1 = inlined_call_operand.hbm [shape: f32[32,32], index: 1, kind: input, shape index: {}]
  %s2 = inlined_call_operand.hbm [shape: f32[32,32], index: 2, kind: input, shape index: {}]
  %s3 = inlined_call_operand.hbm [shape: f32[32,32], index: 3, kind: input, shape index: {}]
  %s4 = inlined_call_operand.hbm [shape: f32[32,32], index: 4, kind: input, shape index: {}]
  %s5 = inlined_call_operand.vmem [shape: f32[1,32], index: 5, kind: input, shape index: {}]
  %s6 = inlined_call_operand.hbm [shape: f32[32,32], index: 6, kind: input, shape index: {}]
  %s7 = inlined_call_operand.vmem [shape: f32[1,32], index: 7, kind: input, shape index: {}]
  %s8 = inlined_call_operand.hbm [shape: f32[32,32], index: 8, kind: input, shape index: {}]
  %s9 = inlined_call_operand.vmem [shape: f32[1,32], index: 9, kind: input, shape index: {}]
  %s10 = inlined_call_operand.hbm [shape: f32[32,32], index: 10, kind: input, shape index: {}]
  %s11 = inlined_call_operand.vmem [shape: f32[1,32], index: 11, kind: input, shape index: {}]
  %s12 = inlined_call_operand.hbm [shape: f32[32,32], index: 12, kind: output, shape index: {}]
  %s13 = sld [smem:[#allocation0]]
  $region90: #{tpu_custom_call.1} parent=0
    _
  %s15 = ssub.s32 1, %s13
  %s16 = scalar_select 0, %s15, %s13
  $region1: #{tpu_custom_call.1} parent=0
    #allocation2 [shape = 'u8[16384]{0}', space=vmem, size = 0x4000, scoped, tag = 'input window, operand 0, single buffered']
    #allocation3 [shape = 's32[1]{0}', space=sflag, size = 0x4, scoped, tag = 'scoped memory for tpu_custom_call.1']
    #allocation4 [shape = 's32[1]{0}', space=sflag, size = 0x4, scoped, tag = 'scoped memory for tpu_custom_call.1']
    #allocation5 [shape = 'u8[16384]{0}', space=vmem, size = 0x4000, scoped, tag = 'input window, operand 1, single buffered']
    #allocation6 [shape = 's32[1]{0}', space=sflag, size = 0x4, scoped, tag = 'scoped memory for tpu_custom_call.1']
    #allocation7 [shape = 'u8[16384]{0}', space=vmem, size = 0x4000, scoped, tag = 'input window, operand 2, single buffered']
    #allocation8 [shape = 'u8[16384]{0}', space=vmem, size = 0x4000, scoped, tag = 'input window, operand 3, single buffered']
    #allocation9 [shape = 's32[1]{0}', space=sflag, size = 0x4, scoped, tag = 'scoped memory for tpu_custom_call.1']
    #allocation10 [shape = 'u8[16384]{0}', space=vmem, size = 0x4000, scoped, tag = 'input window, operand 4, single buffered']
    #allocation11 [shape = 'u8[16384]{0}', space=vmem, size = 0x4000, scoped, tag = 'input window, operand 6, single buffered']
    #allocation12 [shape = 's32[1]{0}', space=sflag, size = 0x4, scoped, tag = 'scoped memory for tpu_custom_call.1']
    #allocation13 [shape = 'u8[16384]{0}', space=vmem, size = 0x4000, scoped, tag = 'input window, operand 8, single buffered']
    #allocation14 [shape = 'u8[16384]{0}', space=vmem, size = 0x4000, scoped, tag = 'input window, operand 10, single buffered']
    #allocation15 [shape = 's32[1]{0}', space=sflag, size = 0x4, scoped, tag = 'scoped memory for tpu_custom_call.1']
    #allocation16 [shape = 'u8[16384]{0}', space=vmem, size = 0x4000, scoped, tag = 'output window, operand 0, single buffered']
    %17 = vsyncpa [#allocation3], 0
    %18 = vsyncpa [#allocation6], 0
    %19 = vsyncpa [#allocation9], 0
    %20 = vsyncpa [#allocation12], 0
    %21 = vsyncpa [#allocation15], 0
    %22 = vsyncpa [#allocation4], 0
    // Predicated region
    $region2: #{tpu_custom_call.1} parent=1 // pred_check
      _
    $region3: #{tpu_custom_call.1} parent=1 // pred_check_branch
      %24 = sbr.rel (0) target = $region5
    $region4: #{tpu_custom_call.1} parent=1 // pred_region
      %s26 = ssub.s32 512, 512
      %27 = vsyncadd [#allocation3], %s26
      %s28 = sshll.u32 [#allocation2], 4
      %s29 = int_to_ptr.vmem [resolvable:$true] %s28
      %34 = dma.hbm_to_vmem [thread:$0]  %s0, 512, %s29, [#allocation3], 128, 128, 8
    $region5: #{tpu_custom_call.1} parent=1 // pred_fallthru
      _
    // Predicated region
    $region6: #{tpu_custom_call.1} parent=1 // pred_check
      _
    $region7: #{tpu_custom_call.1} parent=1 // pred_check_branch
      %36 = sbr.rel (0) target = $region9
    $region8: #{tpu_custom_call.1} parent=1 // pred_region
      %s38 = ssub.s32 512, 512
      %39 = vsyncadd [#allocation6], %s38
      %s40 = sshll.u32 [#allocation5], 4
      %s41 = int_to_ptr.vmem [resolvable:$true] %s40
      %46 = dma.hbm_to_vmem [thread:$0]  %s1, 512, %s41, [#allocation6], 128, 128, 8
    $region9: #{tpu_custom_call.1} parent=1 // pred_fallthru
      _
    // Predicated region
    $region10: #{tpu_custom_call.1} parent=1 // pred_check
      _
    $region11: #{tpu_custom_call.1} parent=1 // pred_check_branch
      %48 = sbr.rel (0) target = $region13
    $region12: #{tpu_custom_call.1} parent=1 // pred_region
      %s50 = ssub.s32 512, 512
      %51 = vsyncadd [#allocation6], %s50
      %s52 = sshll.u32 [#allocation7], 4
      %s53 = int_to_ptr.vmem [resolvable:$true] %s52
      %58 = dma.hbm_to_vmem [thread:$0]  %s2, 512, %s53, [#allocation6], 128, 128, 8
    $region13: #{tpu_custom_call.1} parent=1 // pred_fallthru
      _
    // Predicated region
    $region14: #{tpu_custom_call.1} parent=1 // pred_check
      _
    $region15: #{tpu_custom_call.1} parent=1 // pred_check_branch
      %60 = sbr.rel (0) target = $region17
    $region16: #{tpu_custom_call.1} parent=1 // pred_region
      %s62 = ssub.s32 512, 512
      %63 = vsyncadd [#allocation9], %s62
      %s64 = sshll.u32 [#allocation8], 4
      %s65 = int_to_ptr.vmem [resolvable:$true] %s64
      %70 = dma.hbm_to_vmem [thread:$0]  %s3, 512, %s65, [#allocation9], 128, 128, 8
    $region17: #{tpu_custom_call.1} parent=1 // pred_fallthru
      _
    // Predicated region
    $region18: #{tpu_custom_call.1} parent=1 // pred_check
      _
    $region19: #{tpu_custom_call.1} parent=1 // pred_check_branch
      %72 = sbr.rel (0) target = $region21
    $region20: #{tpu_custom_call.1} parent=1 // pred_region
      %s74 = ssub.s32 512, 512
      %75 = vsyncadd [#allocation9], %s74
      %s76 = sshll.u32 [#allocation10], 4
      %s77 = int_to_ptr.vmem [resolvable:$true] %s76
      %82 = dma.hbm_to_vmem [thread:$0]  %s4, 512, %s77, [#allocation9], 128, 128, 8
    $region21: #{tpu_custom_call.1} parent=1 // pred_fallthru
      _
    // Predicated region
    $region22: #{tpu_custom_call.1} parent=1 // pred_check
      _
    $region23: #{tpu_custom_call.1} parent=1 // pred_check_branch
      %84 = sbr.rel (0) target = $region25
    $region24: #{tpu_custom_call.1} parent=1 // pred_region
      _
    $region25: #{tpu_custom_call.1} parent=1 // pred_fallthru
      _
    // Predicated region
    $region26: #{tpu_custom_call.1} parent=1 // pred_check
      _
    $region27: #{tpu_custom_call.1} parent=1 // pred_check_branch
      %86 = sbr.rel (0) target = $region29
    $region28: #{tpu_custom_call.1} parent=1 // pred_region
      %s88 = ssub.s32 512, 512
      %89 = vsyncadd [#allocation12], %s88
      %s90 = sshll.u32 [#allocation11], 4
      %s91 = int_to_ptr.vmem [resolvable:$true] %s90
      %96 = dma.hbm_to_vmem [thread:$0]  %s6, 512, %s91, [#allocation12], 128, 128, 8
    $region29: #{tpu_custom_call.1} parent=1 // pred_fallthru
      _
    // Predicated region
    $region30: #{tpu_custom_call.1} parent=1 // pred_check
      _
    $region31: #{tpu_custom_call.1} parent=1 // pred_check_branch
      %98 = sbr.rel (0) target = $region33
    $region32: #{tpu_custom_call.1} parent=1 // pred_region
      _
    $region33: #{tpu_custom_call.1} parent=1 // pred_fallthru
      _
    // Predicated region
    $region34: #{tpu_custom_call.1} parent=1 // pred_check
      _
    $region35: #{tpu_custom_call.1} parent=1 // pred_check_branch
      %100 = sbr.rel (0) target = $region37
    $region36: #{tpu_custom_call.1} parent=1 // pred_region
      %s102 = ssub.s32 512, 512
      %103 = vsyncadd [#allocation12], %s102
      %s104 = sshll.u32 [#allocation13], 4
      %s105 = int_to_ptr.vmem [resolvable:$true] %s104
      %110 = dma.hbm_to_vmem [thread:$0]  %s8, 512, %s105, [#allocation12], 128, 128, 8
    $region37: #{tpu_custom_call.1} parent=1 // pred_fallthru
      _
    // Predicated region
    $region38: #{tpu_custom_call.1} parent=1 // pred_check
      _
    $region39: #{tpu_custom_call.1} parent=1 // pred_check_branch
      %112 = sbr.rel (0) target = $region41
    $region40: #{tpu_custom_call.1} parent=1 // pred_region
      _
    $region41: #{tpu_custom_call.1} parent=1 // pred_fallthru
      _
    // Predicated region
    $region42: #{tpu_custom_call.1} parent=1 // pred_check
      _
    $region43: #{tpu_custom_call.1} parent=1 // pred_check_branch
      %114 = sbr.rel (0) target = $region45
    $region44: #{tpu_custom_call.1} parent=1 // pred_region
      %s116 = ssub.s32 512, 512
      %117 = vsyncadd [#allocation15], %s116
      %s118 = sshll.u32 [#allocation14], 4
      %s119 = int_to_ptr.vmem [resolvable:$true] %s118
      %124 = dma.hbm_to_vmem [thread:$0]  %s10, 512, %s119, [#allocation15], 128, 128, 8
    $region45: #{tpu_custom_call.1} parent=1 // pred_fallthru
      _
    // Predicated region
    $region46: #{tpu_custom_call.1} parent=1 // pred_check
      _
    $region47: #{tpu_custom_call.1} parent=1 // pred_check_branch
      %126 = sbr.rel (0) target = $region49
    $region48: #{tpu_custom_call.1} parent=1 // pred_region
      _
    $region49: #{tpu_custom_call.1} parent=1 // pred_fallthru
      _
    // Predicated region
    $region50: #{tpu_custom_call.1} parent=1 // pred_check
      _
    $region51: #{tpu_custom_call.1} parent=1 // pred_check_branch
      %128 = sbr.rel (0) target = $region53
    $region52: #{tpu_custom_call.1} parent=1 // pred_region
      %129 = dma.done [#allocation3], 512
    $region53: #{tpu_custom_call.1} parent=1 // pred_fallthru
      _
    // Predicated region
    $region54: #{tpu_custom_call.1} parent=1 // pred_check
      _
    $region55: #{tpu_custom_call.1} parent=1 // pred_check_branch
      %131 = sbr.rel (0) target = $region57
    $region56: #{tpu_custom_call.1} parent=1 // pred_region
      %132 = dma.done [#allocation6], 512
    $region57: #{tpu_custom_call.1} parent=1 // pred_fallthru
      _
    // Predicated region
    $region58: #{tpu_custom_call.1} parent=1 // pred_check
      _
    $region59: #{tpu_custom_call.1} parent=1 // pred_check_branch
      %134 = sbr.rel (0) target = $region61
    $region60: #{tpu_custom_call.1} parent=1 // pred_region
      %135 = dma.done [#allocation6], 512
    $region61: #{tpu_custom_call.1} parent=1 // pred_fallthru
      _
    // Predicated region
    $region62: #{tpu_custom_call.1} parent=1 // pred_check
      _
    $region63: #{tpu_custom_call.1} parent=1 // pred_check_branch
      %137 = sbr.rel (0) target = $region65
    $region64: #{tpu_custom_call.1} parent=1 // pred_region
      %138 = dma.done [#allocation9], 512
    $region65: #{tpu_custom_call.1} parent=1 // pred_fallthru
      _
    // Predicated region
    $region66: #{tpu_custom_call.1} parent=1 // pred_check
      _
    $region67: #{tpu_custom_call.1} parent=1 // pred_check_branch
      %140 = sbr.rel (0) target = $region69
    $region68: #{tpu_custom_call.1} parent=1 // pred_region
      %141 = dma.done [#allocation9], 512
    $region69: #{tpu_custom_call.1} parent=1 // pred_fallthru
      _
    // Predicated region
    $region70: #{tpu_custom_call.1} parent=1 // pred_check
      _
    $region71: #{tpu_custom_call.1} parent=1 // pred_check_branch
      %143 = sbr.rel (0) target = $region73
    $region72: #{tpu_custom_call.1} parent=1 // pred_region
      %144 = dma.done [#allocation12], 512
    $region73: #{tpu_custom_call.1} parent=1 // pred_fallthru
      _
    // Predicated region
    $region74: #{tpu_custom_call.1} parent=1 // pred_check
      _
    $region75: #{tpu_custom_call.1} parent=1 // pred_check_branch
      %146 = sbr.rel (0) target = $region77
    $region76: #{tpu_custom_call.1} parent=1 // pred_region
      %147 = dma.done [#allocation12], 512
    $region77: #{tpu_custom_call.1} parent=1 // pred_fallthru
      _
    // Predicated region
    $region78: #{tpu_custom_call.1} parent=1 // pred_check
      _
    $region79: #{tpu_custom_call.1} parent=1 // pred_check_branch
      %149 = sbr.rel (0) target = $region81
    $region80: #{tpu_custom_call.1} parent=1 // pred_region
      %150 = dma.done [#allocation15], 512
    $region81: #{tpu_custom_call.1} parent=1 // pred_fallthru
      _
    %v151 = vld [vmem:[#allocation2] sm:$0xff]
    %v152 = vld [vmem:[#allocation2 + $0x8] sm:$0xff]
    %v153 = vld [vmem:[#allocation2 + $0x10] sm:$0xff]
    %v154 = vld [vmem:[#allocation2 + $0x18] sm:$0xff]
    %v155 = vld [vmem:[#allocation10] sm:$0xff]
    %v156 = vld [vmem:[#allocation10 + $0x8] sm:$0xff]
    %v157 = vld [vmem:[#allocation10 + $0x10] sm:$0xff]
    %v158 = vld [vmem:[#allocation10 + $0x18] sm:$0xff]
    %v159 = vld [vmem:[%s5] sm:$0x1]
    %v161 = vlaneseq
    %v162 = vshrl.u32 %v161, 7
    %v163 = vsub.s32 0, %v162
    %v164 = vrot.slane %v159, %v163
    %vm166 = vcmask 261120
    %v168 = vsel %vm166, %v151, 0
    %v171 = vsel %vm166, %v152, 0
    %v174 = vsel %vm166, %v153, 0
    %v177 = vsel %vm166, %v154, 0
    %179 = vmatprep.subr.mxu0 0.0
    %180 = vmatpush1.msra.mxu0 0.0
    %181 = vmatprep.subr.mxu0 0.0
    %182 = vmatpush1.msra.mxu0 0.0
    %183 = vmatprep.subr.mxu0 0.0
    %184 = vmatpush1.msra.mxu0 0.0
    %185 = vmatprep.subr.mxu0 0.0
    %186 = vmatpush1.msra.mxu0 0.0
    %187 = vmatprep.subr.mxu0 0.0
    %188 = vmatpush1.msra.mxu0 0.0
    %189 = vmatprep.subr.mxu0 0.0
    %190 = vmatpush1.msra.mxu0 0.0
    %191 = vmatprep.subr.mxu0 0.0
    %192 = vmatpush1.msra.mxu0 0.0
    %193 = vmatprep.subr.mxu0 0.0
    %194 = vmatpush1.msra.mxu0 0.0
    %195 = vmatprep.subr.mxu0 0.0
    %196 = vmatpush1.msra.mxu0 0.0
    %197 = vmatprep.subr.mxu0 0.0
    %198 = vmatpush1.msra.mxu0 0.0
    %199 = vmatprep.subr.mxu0 0.0
    %200 = vmatpush1.msra.mxu0 0.0
    %201 = vmatprep.subr.mxu0 0.0
    %202 = vmatpush1.msra.mxu0 0.0
    %203 = vmatprep.subr.mxu0 0.0
    %v204 = vand.u32 %v158, 4294901760
    %205 = vmatpush1.msra.mxu0 %v204
    %206 = vmatprep.subr.mxu0 0.0
    %v207 = vand.u32 %v157, 4294901760
    %208 = vmatpush1.msra.mxu0 %v207
    %209 = vmatprep.subr.mxu0 0.0
    %v210 = vand.u32 %v156, 4294901760
    %211 = vmatpush1.msra.mxu0 %v210
    %212 = vmatprep.subr.mxu0 0.0
    %v213 = vand.u32 %v155, 4294901760
    %214 = vmatpush1.msra.mxu0 %v213
    %215 = vmatprep.subr.mxu0 0.0
    %216 = vmatpush2.msra.mxu0 0.0
    %217 = vmatprep.subr.mxu0 0.0
    %218 = vmatpush2.msra.mxu0 0.0
    %219 = vmatprep.subr.mxu0 0.0
    %220 = vmatpush2.msra.mxu0 0.0
    %221 = vmatprep.subr.mxu0 0.0
    %222 = vmatpush2.msra.mxu0 0.0
    %223 = vmatprep.subr.mxu0 0.0
    %224 = vmatpush2.msra.mxu0 0.0
    %225 = vmatprep.subr.mxu0 0.0
    %226 = vmatpush2.msra.mxu0 0.0
    %227 = vmatprep.subr.mxu0 0.0
    %228 = vmatpush2.msra.mxu0 0.0
    %229 = vmatprep.subr.mxu0 0.0
    %230 = vmatpush2.msra.mxu0 0.0
    %231 = vmatprep.subr.mxu0 0.0
    %232 = vmatpush2.msra.mxu0 0.0
    %233 = vmatprep.subr.mxu0 0.0
    %234 = vmatpush2.msra.mxu0 0.0
    %235 = vmatprep.subr.mxu0 0.0
    %236 = vmatpush2.msra.mxu0 0.0
    %237 = vmatprep.subr.mxu0 0.0
    %238 = vmatpush2.msra.mxu0 0.0
    %239 = vmatprep.subr.mxu0 0.0
    %240 = vmatpush2.msra.mxu0 0.0
    %241 = vmatprep.subr.mxu0 0.0
    %242 = vmatpush2.msra.mxu0 0.0
    %243 = vmatprep.subr.mxu0 0.0
    %244 = vmatpush2.msra.mxu0 0.0
    %245 = vmatprep.subr.mxu0 0.0
    %246 = vmatpush2.msra.mxu0 0.0
    %247 = vmatprep.mubr.f32.mxu0 0.0
    %v248 = vand.u32 %v168, 4294901760
    %v249 = vsub.f32 %v168, %v248
    %v250 = vand.u32 %v249, 4294901760
    %v251 = vsub.f32 %v249, %v250
    %v252 = vand.u32 %v251, 4294901760
    %253 = vmatmul.mubr.f32.gmra.mxu0 %v252
    %v254 = vpop.f32.mrf.mxu0
    %v255 = vadd.f32 %v164, %v254
    %v256 = vpop.f32.mrf.mxu0
    %257 = vmatprep.mubr.f32.mxu0 0.0
    %v258 = vand.u32 %v171, 4294901760
    %v259 = vsub.f32 %v171, %v258
    %v260 = vand.u32 %v259, 4294901760
    %v261 = vsub.f32 %v259, %v260
    %v262 = vand.u32 %v261, 4294901760
    %263 = vmatmul.mubr.f32.gmra.mxu0 %v262
    %v264 = vpop.f32.mrf.mxu0
    %v265 = vadd.f32 %v164, %v264
    %v266 = vpop.f32.mrf.mxu0
    %267 = vmatprep.mubr.f32.mxu0 0.0
    %v268 = vand.u32 %v174, 4294901760
    %v269 = vsub.f32 %v174, %v268
    %v270 = vand.u32 %v269, 4294901760
    %v271 = vsub.f32 %v269, %v270
    %v272 = vand.u32 %v271, 4294901760
    %273 = vmatmul.mubr.f32.gmra.mxu0 %v272
    %v274 = vpop.f32.mrf.mxu0
    %v275 = vadd.f32 %v164, %v274
    %v276 = vpop.f32.mrf.mxu0
    %277 = vmatprep.mubr.f32.mxu0 0.0
    %v278 = vand.u32 %v177, 4294901760
    %v279 = vsub.f32 %v177, %v278
    %v280 = vand.u32 %v279, 4294901760
    %v281 = vsub.f32 %v279, %v280
    %v282 = vand.u32 %v281, 4294901760
    %283 = vmatmul.mubr.f32.gmra.mxu0 %v282
    %v284 = vpop.f32.mrf.mxu0
    %v285 = vadd.f32 %v164, %v284
    %v286 = vpop.f32.mrf.mxu0
    %287 = vdwg.mxu0
    %288 = vmatprep.subr.mxu0 0.0
    %289 = vmatpush1.msra.mxu0 0.0
    %290 = vmatprep.subr.mxu0 0.0
    %291 = vmatpush1.msra.mxu0 0.0
    %292 = vmatprep.subr.mxu0 0.0
    %293 = vmatpush1.msra.mxu0 0.0
    %294 = vmatprep.subr.mxu0 0.0
    %295 = vmatpush1.msra.mxu0 0.0
    %296 = vmatprep.subr.mxu0 0.0
    %297 = vmatpush1.msra.mxu0 0.0
    %298 = vmatprep.subr.mxu0 0.0
    %299 = vmatpush1.msra.mxu0 0.0
    %300 = vmatprep.subr.mxu0 0.0
    %301 = vmatpush1.msra.mxu0 0.0
    %302 = vmatprep.subr.mxu0 0.0
    %303 = vmatpush1.msra.mxu0 0.0
    %304 = vmatprep.subr.mxu0 0.0
    %305 = vmatpush1.msra.mxu0 0.0
    %306 = vmatprep.subr.mxu0 0.0
    %307 = vmatpush1.msra.mxu0 0.0
    %308 = vmatprep.subr.mxu0 0.0
    %309 = vmatpush1.msra.mxu0 0.0
    %310 = vmatprep.subr.mxu0 0.0
    %311 = vmatpush1.msra.mxu0 0.0
    %312 = vmatprep.subr.mxu0 0.0
    %v313 = vand.u32 %v158, 4294901760
    %v314 = vsub.f32 %v158, %v313
    %v315 = vand.u32 %v314, 4294901760
    %v316 = vsub.f32 %v314, %v315
    %v317 = vand.u32 %v316, 4294901760
    %318 = vmatpush1.msra.mxu0 %v317
    %319 = vmatprep.subr.mxu0 0.0
    %v320 = vand.u32 %v157, 4294901760
    %v321 = vsub.f32 %v157, %v320
    %v322 = vand.u32 %v321, 4294901760
    %v323 = vsub.f32 %v321, %v322
    %v324 = vand.u32 %v323, 4294901760
    %325 = vmatpush1.msra.mxu0 %v324
    %326 = vmatprep.subr.mxu0 0.0
    %v327 = vand.u32 %v156, 4294901760
    %v328 = vsub.f32 %v156, %v327
    %v329 = vand.u32 %v328, 4294901760
    %v330 = vsub.f32 %v328, %v329
    %v331 = vand.u32 %v330, 4294901760
    %332 = vmatpush1.msra.mxu0 %v331
    %333 = vmatprep.subr.mxu0 0.0
    %v334 = vand.u32 %v155, 4294901760
    %v335 = vsub.f32 %v155, %v334
    %v336 = vand.u32 %v335, 4294901760
    %v337 = vsub.f32 %v335, %v336
    %v338 = vand.u32 %v337, 4294901760
    %339 = vmatpush1.msra.mxu0 %v338
    %340 = vmatprep.subr.mxu0 0.0
    %341 = vmatpush2.msra.mxu0 0.0
    %342 = vmatprep.subr.mxu0 0.0
    %343 = vmatpush2.msra.mxu0 0.0
    %344 = vmatprep.subr.mxu0 0.0
    %345 = vmatpush2.msra.mxu0 0.0
    %346 = vmatprep.subr.mxu0 0.0
    %347 = vmatpush2.msra.mxu0 0.0
    %348 = vmatprep.subr.mxu0 0.0
    %349 = vmatpush2.msra.mxu0 0.0
    %350 = vmatprep.subr.mxu0 0.0
    %351 = vmatpush2.msra.mxu0 0.0
    %352 = vmatprep.subr.mxu0 0.0
    %353 = vmatpush2.msra.mxu0 0.0
    %354 = vmatprep.subr.mxu0 0.0
    %355 = vmatpush2.msra.mxu0 0.0
    %356 = vmatprep.subr.mxu0 0.0
    %357 = vmatpush2.msra.mxu0 0.0
    %358 = vmatprep.subr.mxu0 0.0
    %359 = vmatpush2.msra.mxu0 0.0
    %360 = vmatprep.subr.mxu0 0.0
    %361 = vmatpush2.msra.mxu0 0.0
    %362 = vmatprep.subr.mxu0 0.0
    %363 = vmatpush2.msra.mxu0 0.0
    %364 = vmatprep.subr.mxu0 0.0
    %365 = vmatpush2.msra.mxu0 0.0
    %366 = vmatprep.subr.mxu0 0.0
    %367 = vmatpush2.msra.mxu0 0.0
    %368 = vmatprep.subr.mxu0 0.0
    %369 = vmatpush2.msra.mxu0 0.0
    %370 = vmatprep.subr.mxu0 0.0
    %371 = vmatpush2.msra.mxu0 0.0
    %372 = vmatprep.mubr.f32.mxu0 0.0
    %v373 = vand.u32 %v168, 4294901760
    %374 = vmatmul.mubr.f32.gmra.mxu0 %v373
    %v375 = vpop.f32.mrf.mxu0
    %v376 = vadd.f32 %v255, %v375
    %v377 = vpop.f32.mrf.mxu0
    %378 = vmatprep.mubr.f32.mxu0 0.0
    %v379 = vand.u32 %v171, 4294901760
    %380 = vmatmul.mubr.f32.gmra.mxu0 %v379
    %v381 = vpop.f32.mrf.mxu0
    %v382 = vadd.f32 %v265, %v381
    %v383 = vpop.f32.mrf.mxu0
    %384 = vmatprep.mubr.f32.mxu0 0.0
    %v385 = vand.u32 %v174, 4294901760
    %386 = vmatmul.mubr.f32.gmra.mxu0 %v385
    %v387 = vpop.f32.mrf.mxu0
    %v388 = vadd.f32 %v275, %v387
    %v389 = vpop.f32.mrf.mxu0
    %390 = vmatprep.mubr.f32.mxu0 0.0
    %v391 = vand.u32 %v177, 4294901760
    %392 = vmatmul.mubr.f32.gmra.mxu0 %v391
    %v393 = vpop.f32.mrf.mxu0
    %v394 = vadd.f32 %v285, %v393
    %v395 = vpop.f32.mrf.mxu0
    %396 = vdwg.mxu0
    %397 = vmatprep.subr.mxu0 0.0
    %398 = vmatpush1.msra.mxu0 0.0
    %399 = vmatprep.subr.mxu0 0.0
    %400 = vmatpush1.msra.mxu0 0.0
    %401 = vmatprep.subr.mxu0 0.0
    %402 = vmatpush1.msra.mxu0 0.0
    %403 = vmatprep.subr.mxu0 0.0
    %404 = vmatpush1.msra.mxu0 0.0
    %405 = vmatprep.subr.mxu0 0.0
    %406 = vmatpush1.msra.mxu0 0.0
    %407 = vmatprep.subr.mxu0 0.0
    %408 = vmatpush1.msra.mxu0 0.0
    %409 = vmatprep.subr.mxu0 0.0
    %410 = vmatpush1.msra.mxu0 0.0
    %411 = vmatprep.subr.mxu0 0.0
    %412 = vmatpush1.msra.mxu0 0.0
    %413 = vmatprep.subr.mxu0 0.0
    %414 = vmatpush1.msra.mxu0 0.0
    %415 = vmatprep.subr.mxu0 0.0
    %416 = vmatpush1.msra.mxu0 0.0
    %417 = vmatprep.subr.mxu0 0.0
    %418 = vmatpush1.msra.mxu0 0.0
    %419 = vmatprep.subr.mxu0 0.0
    %420 = vmatpush1.msra.mxu0 0.0
    %421 = vmatprep.subr.mxu0 0.0
    %v422 = vand.u32 %v158, 4294901760
    %v423 = vsub.f32 %v158, %v422
    %424 = vmatpush1.msra.mxu0 %v423
    %425 = vmatprep.subr.mxu0 0.0
    %v426 = vand.u32 %v157, 4294901760
    %v427 = vsub.f32 %v157, %v426
    %428 = vmatpush1.msra.mxu0 %v427
    %429 = vmatprep.subr.mxu0 0.0
    %v430 = vand.u32 %v156, 4294901760
    %v431 = vsub.f32 %v156, %v430
    %432 = vmatpush1.msra.mxu0 %v431
    %433 = vmatprep.subr.mxu0 0.0
    %v434 = vand.u32 %v155, 4294901760
    %v435 = vsub.f32 %v155, %v434
    %436 = vmatpush1.msra.mxu0 %v435
    %437 = vmatprep.subr.mxu0 0.0
    %438 = vmatpush2.msra.mxu0 0.0
    %439 = vmatprep.subr.mxu0 0.0
    %440 = vmatpush2.msra.mxu0 0.0
    %441 = vmatprep.subr.mxu0 0.0
    %442 = vmatpush2.msra.mxu0 0.0
    %443 = vmatprep.subr.mxu0 0.0
    %444 = vmatpush2.msra.mxu0 0.0
    %445 = vmatprep.subr.mxu0 0.0
    %446 = vmatpush2.msra.mxu0 0.0
    %447 = vmatprep.subr.mxu0 0.0
    %448 = vmatpush2.msra.mxu0 0.0
    %449 = vmatprep.subr.mxu0 0.0
    %450 = vmatpush2.msra.mxu0 0.0
    %451 = vmatprep.subr.mxu0 0.0
    %452 = vmatpush2.msra.mxu0 0.0
    %453 = vmatprep.subr.mxu0 0.0
    %454 = vmatpush2.msra.mxu0 0.0
    %455 = vmatprep.subr.mxu0 0.0
    %456 = vmatpush2.msra.mxu0 0.0
    %457 = vmatprep.subr.mxu0 0.0
    %458 = vmatpush2.msra.mxu0 0.0
    %459 = vmatprep.subr.mxu0 0.0
    %460 = vmatpush2.msra.mxu0 0.0
    %461 = vmatprep.subr.mxu0 0.0
    %462 = vmatpush2.msra.mxu0 0.0
    %463 = vmatprep.subr.mxu0 0.0
    %464 = vmatpush2.msra.mxu0 0.0
    %465 = vmatprep.subr.mxu0 0.0
    %466 = vmatpush2.msra.mxu0 0.0
    %467 = vmatprep.subr.mxu0 0.0
    %468 = vmatpush2.msra.mxu0 0.0
    %469 = vmatprep.mubr.f32.mxu0 0.0
    %v470 = vand.u32 %v168, 4294901760
    %v471 = vsub.f32 %v168, %v470
    %472 = vmatmul.mubr.f32.gmra.mxu0 %v471
    %v473 = vpop.f32.mrf.mxu0
    %v474 = vadd.f32 %v376, %v473
    %v475 = vpop.f32.mrf.mxu0
    %476 = vmatprep.mubr.f32.mxu0 0.0
    %v477 = vand.u32 %v171, 4294901760
    %v478 = vsub.f32 %v171, %v477
    %479 = vmatmul.mubr.f32.gmra.mxu0 %v478
    %v480 = vpop.f32.mrf.mxu0
    %v481 = vadd.f32 %v382, %v480
    %v482 = vpop.f32.mrf.mxu0
    %483 = vmatprep.mubr.f32.mxu0 0.0
    %v484 = vand.u32 %v174, 4294901760
    %v485 = vsub.f32 %v174, %v484
    %486 = vmatmul.mubr.f32.gmra.mxu0 %v485
    %v487 = vpop.f32.mrf.mxu0
    %v488 = vadd.f32 %v388, %v487
    %v489 = vpop.f32.mrf.mxu0
    %490 = vmatprep.mubr.f32.mxu0 0.0
    %v491 = vand.u32 %v177, 4294901760
    %v492 = vsub.f32 %v177, %v491
    %493 = vmatmul.mubr.f32.gmra.mxu0 %v492
    %v494 = vpop.f32.mrf.mxu0
    %v495 = vadd.f32 %v394, %v494
    %v496 = vpop.f32.mrf.mxu0
    %497 = vdwg.mxu0
    %498 = vmatprep.subr.mxu0 0.0
    %499 = vmatpush1.msra.mxu0 0.0
    %500 = vmatprep.subr.mxu0 0.0
    %501 = vmatpush1.msra.mxu0 0.0
    %502 = vmatprep.subr.mxu0 0.0
    %503 = vmatpush1.msra.mxu0 0.0
    %504 = vmatprep.subr.mxu0 0.0
    %505 = vmatpush1.msra.mxu0 0.0
    %506 = vmatprep.subr.mxu0 0.0
    %507 = vmatpush1.msra.mxu0 0.0
    %508 = vmatprep.subr.mxu0 0.0
    %509 = vmatpush1.msra.mxu0 0.0
    %510 = vmatprep.subr.mxu0 0.0
    %511 = vmatpush1.msra.mxu0 0.0
    %512 = vmatprep.subr.mxu0 0.0
    %513 = vmatpush1.msra.mxu0 0.0
    %514 = vmatprep.subr.mxu0 0.0
    %515 = vmatpush1.msra.mxu0 0.0
    %516 = vmatprep.subr.mxu0 0.0
    %517 = vmatpush1.msra.mxu0 0.0
    %518 = vmatprep.subr.mxu0 0.0
    %519 = vmatpush1.msra.mxu0 0.0
    %520 = vmatprep.subr.mxu0 0.0
    %521 = vmatpush1.msra.mxu0 0.0
    %522 = vmatprep.subr.mxu0 0.0
    %v523 = vand.u32 %v158, 4294901760
    %524 = vmatpush1.msra.mxu0 %v523
    %525 = vmatprep.subr.mxu0 0.0
    %v526 = vand.u32 %v157, 4294901760
    %527 = vmatpush1.msra.mxu0 %v526
    %528 = vmatprep.subr.mxu0 0.0
    %v529 = vand.u32 %v156, 4294901760
    %530 = vmatpush1.msra.mxu0 %v529
    %531 = vmatprep.subr.mxu0 0.0
    %v532 = vand.u32 %v155, 4294901760
    %533 = vmatpush1.msra.mxu0 %v532
    %534 = vmatprep.subr.mxu0 0.0
    %535 = vmatpush2.msra.mxu0 0.0
    %536 = vmatprep.subr.mxu0 0.0
    %537 = vmatpush2.msra.mxu0 0.0
    %538 = vmatprep.subr.mxu0 0.0
    %539 = vmatpush2.msra.mxu0 0.0
    %540 = vmatprep.subr.mxu0 0.0
    %541 = vmatpush2.msra.mxu0 0.0
    %542 = vmatprep.subr.mxu0 0.0
    %543 = vmatpush2.msra.mxu0 0.0
    %544 = vmatprep.subr.mxu0 0.0
    %545 = vmatpush2.msra.mxu0 0.0
    %546 = vmatprep.subr.mxu0 0.0
    %547 = vmatpush2.msra.mxu0 0.0
    %548 = vmatprep.subr.mxu0 0.0
    %549 = vmatpush2.msra.mxu0 0.0
    %550 = vmatprep.subr.mxu0 0.0
    %551 = vmatpush2.msra.mxu0 0.0
    %552 = vmatprep.subr.mxu0 0.0
    %553 = vmatpush2.msra.mxu0 0.0
    %554 = vmatprep.subr.mxu0 0.0
    %555 = vmatpush2.msra.mxu0 0.0
    %556 = vmatprep.subr.mxu0 0.0
    %557 = vmatpush2.msra.mxu0 0.0
    %558 = vmatprep.subr.mxu0 0.0
    %559 = vmatpush2.msra.mxu0 0.0
    %560 = vmatprep.subr.mxu0 0.0
    %561 = vmatpush2.msra.mxu0 0.0
    %562 = vmatprep.subr.mxu0 0.0
    %563 = vmatpush2.msra.mxu0 0.0
    %564 = vmatprep.subr.mxu0 0.0
    %565 = vmatpush2.msra.mxu0 0.0
    %566 = vmatprep.mubr.f32.mxu0 0.0
    %v567 = vand.u32 %v168, 4294901760
    %v568 = vsub.f32 %v168, %v567
    %v569 = vand.u32 %v568, 4294901760
    %570 = vmatmul.mubr.f32.gmra.mxu0 %v569
    %v571 = vpop.f32.mrf.mxu0
    %v572 = vadd.f32 %v474, %v571
    %v573 = vpop.f32.mrf.mxu0
    %574 = vmatprep.mubr.f32.mxu0 0.0
    %v575 = vand.u32 %v171, 4294901760
    %v576 = vsub.f32 %v171, %v575
    %v577 = vand.u32 %v576, 4294901760
    %578 = vmatmul.mubr.f32.gmra.mxu0 %v577
    %v579 = vpop.f32.mrf.mxu0
    %v580 = vadd.f32 %v481, %v579
    %v581 = vpop.f32.mrf.mxu0
    %582 = vmatprep.mubr.f32.mxu0 0.0
    %v583 = vand.u32 %v174, 4294901760
    %v584 = vsub.f32 %v174, %v583
    %v585 = vand.u32 %v584, 4294901760
    %586 = vmatmul.mubr.f32.gmra.mxu0 %v585
    %v587 = vpop.f32.mrf.mxu0
    %v588 = vadd.f32 %v488, %v587
    %v589 = vpop.f32.mrf.mxu0
    %590 = vmatprep.mubr.f32.mxu0 0.0
    %v591 = vand.u32 %v177, 4294901760
    %v592 = vsub.f32 %v177, %v591
    %v593 = vand.u32 %v592, 4294901760
    %594 = vmatmul.mubr.f32.gmra.mxu0 %v593
    %v595 = vpop.f32.mrf.mxu0
    %v596 = vadd.f32 %v495, %v595
    %v597 = vpop.f32.mrf.mxu0
    %598 = vdwg.mxu0
    %599 = vmatprep.subr.mxu0 0.0
    %600 = vmatpush1.msra.mxu0 0.0
    %601 = vmatprep.subr.mxu0 0.0
    %602 = vmatpush1.msra.mxu0 0.0
    %603 = vmatprep.subr.mxu0 0.0
    %604 = vmatpush1.msra.mxu0 0.0
    %605 = vmatprep.subr.mxu0 0.0
    %606 = vmatpush1.msra.mxu0 0.0
    %607 = vmatprep.subr.mxu0 0.0
    %608 = vmatpush1.msra.mxu0 0.0
    %609 = vmatprep.subr.mxu0 0.0
    %610 = vmatpush1.msra.mxu0 0.0
    %611 = vmatprep.subr.mxu0 0.0
    %612 = vmatpush1.msra.mxu0 0.0
    %613 = vmatprep.subr.mxu0 0.0
    %614 = vmatpush1.msra.mxu0 0.0
    %615 = vmatprep.subr.mxu0 0.0
    %616 = vmatpush1.msra.mxu0 0.0
    %617 = vmatprep.subr.mxu0 0.0
    %618 = vmatpush1.msra.mxu0 0.0
    %619 = vmatprep.subr.mxu0 0.0
    %620 = vmatpush1.msra.mxu0 0.0
    %621 = vmatprep.subr.mxu0 0.0
    %622 = vmatpush1.msra.mxu0 0.0
    %623 = vmatprep.subr.mxu0 0.0
    %v624 = vand.u32 %v158, 4294901760
    %v625 = vsub.f32 %v158, %v624
    %v626 = vand.u32 %v625, 4294901760
    %627 = vmatpush1.msra.mxu0 %v626
    %628 = vmatprep.subr.mxu0 0.0
    %v629 = vand.u32 %v157, 4294901760
    %v630 = vsub.f32 %v157, %v629
    %v631 = vand.u32 %v630, 4294901760
    %632 = vmatpush1.msra.mxu0 %v631
    %633 = vmatprep.subr.mxu0 0.0
    %v634 = vand.u32 %v156, 4294901760
    %v635 = vsub.f32 %v156, %v634
    %v636 = vand.u32 %v635, 4294901760
    %637 = vmatpush1.msra.mxu0 %v636
    %638 = vmatprep.subr.mxu0 0.0
    %v639 = vand.u32 %v155, 4294901760
    %v640 = vsub.f32 %v155, %v639
    %v641 = vand.u32 %v640, 4294901760
    %642 = vmatpush1.msra.mxu0 %v641
    %643 = vmatprep.subr.mxu0 0.0
    %644 = vmatpush2.msra.mxu0 0.0
    %645 = vmatprep.subr.mxu0 0.0
    %646 = vmatpush2.msra.mxu0 0.0
    %647 = vmatprep.subr.mxu0 0.0
    %648 = vmatpush2.msra.mxu0 0.0
    %649 = vmatprep.subr.mxu0 0.0
    %650 = vmatpush2.msra.mxu0 0.0
    %651 = vmatprep.subr.mxu0 0.0
    %652 = vmatpush2.msra.mxu0 0.0
    %653 = vmatprep.subr.mxu0 0.0
    %654 = vmatpush2.msra.mxu0 0.0
    %655 = vmatprep.subr.mxu0 0.0
    %656 = vmatpush2.msra.mxu0 0.0
    %657 = vmatprep.subr.mxu0 0.0
    %658 = vmatpush2.msra.mxu0 0.0
    %659 = vmatprep.subr.mxu0 0.0
    %660 = vmatpush2.msra.mxu0 0.0
    %661 = vmatprep.subr.mxu0 0.0
    %662 = vmatpush2.msra.mxu0 0.0
    %663 = vmatprep.subr.mxu0 0.0
    %664 = vmatpush2.msra.mxu0 0.0
    %665 = vmatprep.subr.mxu0 0.0
    %666 = vmatpush2.msra.mxu0 0.0
    %667 = vmatprep.subr.mxu0 0.0
    %668 = vmatpush2.msra.mxu0 0.0
    %669 = vmatprep.subr.mxu0 0.0
    %670 = vmatpush2.msra.mxu0 0.0
    %671 = vmatprep.subr.mxu0 0.0
    %672 = vmatpush2.msra.mxu0 0.0
    %673 = vmatprep.subr.mxu0 0.0
    %674 = vmatpush2.msra.mxu0 0.0
    %675 = vmatprep.mubr.f32.mxu0 0.0
    %v676 = vand.u32 %v168, 4294901760
    %677 = vmatmul.mubr.f32.gmra.mxu0 %v676
    %v678 = vpop.f32.mrf.mxu0
    %v679 = vadd.f32 %v572, %v678
    %v680 = vpop.f32.mrf.mxu0
    %681 = vmatprep.mubr.f32.mxu0 0.0
    %v682 = vand.u32 %v171, 4294901760
    %683 = vmatmul.mubr.f32.gmra.mxu0 %v682
    %v684 = vpop.f32.mrf.mxu0
    %v685 = vadd.f32 %v580, %v684
    %v686 = vpop.f32.mrf.mxu0
    %687 = vmatprep.mubr.f32.mxu0 0.0
    %v688 = vand.u32 %v174, 4294901760
    %689 = vmatmul.mubr.f32.gmra.mxu0 %v688
    %v690 = vpop.f32.mrf.mxu0
    %v691 = vadd.f32 %v588, %v690
    %v692 = vpop.f32.mrf.mxu0
    %693 = vmatprep.mubr.f32.mxu0 0.0
    %v694 = vand.u32 %v177, 4294901760
    %695 = vmatmul.mubr.f32.gmra.mxu0 %v694
    %v696 = vpop.f32.mrf.mxu0
    %v697 = vadd.f32 %v596, %v696
    %v698 = vpop.f32.mrf.mxu0
    %699 = vdwg.mxu0
    %700 = vmatprep.subr.mxu0 0.0
    %701 = vmatpush1.msra.mxu0 0.0
    %702 = vmatprep.subr.mxu0 0.0
    %703 = vmatpush1.msra.mxu0 0.0
    %704 = vmatprep.subr.mxu0 0.0
    %705 = vmatpush1.msra.mxu0 0.0
    %706 = vmatprep.subr.mxu0 0.0
    %707 = vmatpush1.msra.mxu0 0.0
    %708 = vmatprep.subr.mxu0 0.0
    %709 = vmatpush1.msra.mxu0 0.0
    %710 = vmatprep.subr.mxu0 0.0
    %711 = vmatpush1.msra.mxu0 0.0
    %712 = vmatprep.subr.mxu0 0.0
    %713 = vmatpush1.msra.mxu0 0.0
    %714 = vmatprep.subr.mxu0 0.0
    %715 = vmatpush1.msra.mxu0 0.0
    %716 = vmatprep.subr.mxu0 0.0
    %717 = vmatpush1.msra.mxu0 0.0
    %718 = vmatprep.subr.mxu0 0.0
    %719 = vmatpush1.msra.mxu0 0.0
    %720 = vmatprep.subr.mxu0 0.0
    %721 = vmatpush1.msra.mxu0 0.0
    %722 = vmatprep.subr.mxu0 0.0
    %723 = vmatpush1.msra.mxu0 0.0
    %724 = vmatprep.subr.mxu0 0.0
    %v725 = vand.u32 %v158, 4294901760
    %726 = vmatpush1.msra.mxu0 %v725
    %727 = vmatprep.subr.mxu0 0.0
    %v728 = vand.u32 %v157, 4294901760
    %729 = vmatpush1.msra.mxu0 %v728
    %730 = vmatprep.subr.mxu0 0.0
    %v731 = vand.u32 %v156, 4294901760
    %732 = vmatpush1.msra.mxu0 %v731
    %733 = vmatprep.subr.mxu0 0.0
    %v734 = vand.u32 %v155, 4294901760
    %735 = vmatpush1.msra.mxu0 %v734
    %736 = vmatprep.subr.mxu0 0.0
    %737 = vmatpush2.msra.mxu0 0.0
    %738 = vmatprep.subr.mxu0 0.0
    %739 = vmatpush2.msra.mxu0 0.0
    %740 = vmatprep.subr.mxu0 0.0
    %741 = vmatpush2.msra.mxu0 0.0
    %742 = vmatprep.subr.mxu0 0.0
    %743 = vmatpush2.msra.mxu0 0.0
    %744 = vmatprep.subr.mxu0 0.0
    %745 = vmatpush2.msra.mxu0 0.0
    %746 = vmatprep.subr.mxu0 0.0
    %747 = vmatpush2.msra.mxu0 0.0
    %748 = vmatprep.subr.mxu0 0.0
    %749 = vmatpush2.msra.mxu0 0.0
    %750 = vmatprep.subr.mxu0 0.0
    %751 = vmatpush2.msra.mxu0 0.0
    %752 = vmatprep.subr.mxu0 0.0
    %753 = vmatpush2.msra.mxu0 0.0
    %754 = vmatprep.subr.mxu0 0.0
    %755 = vmatpush2.msra.mxu0 0.0
    %756 = vmatprep.subr.mxu0 0.0
    %757 = vmatpush2.msra.mxu0 0.0
    %758 = vmatprep.subr.mxu0 0.0
    %759 = vmatpush2.msra.mxu0 0.0
    %760 = vmatprep.subr.mxu0 0.0
    %761 = vmatpush2.msra.mxu0 0.0
    %762 = vmatprep.subr.mxu0 0.0
    %763 = vmatpush2.msra.mxu0 0.0
    %764 = vmatprep.subr.mxu0 0.0
    %765 = vmatpush2.msra.mxu0 0.0
    %766 = vmatprep.subr.mxu0 0.0
    %767 = vmatpush2.msra.mxu0 0.0
    %768 = vmatprep.mubr.f32.mxu0 0.0
    %v769 = vand.u32 %v168, 4294901760
    %770 = vmatmul.mubr.f32.gmra.mxu0 %v769
    %v771 = vpop.f32.mrf.mxu0
    %v772 = vadd.f32 %v679, %v771
    %v773 = vpop.f32.mrf.mxu0
    %774 = vmatprep.mubr.f32.mxu0 0.0
    %v775 = vand.u32 %v171, 4294901760
    %776 = vmatmul.mubr.f32.gmra.mxu0 %v775
    %v777 = vpop.f32.mrf.mxu0
    %v778 = vadd.f32 %v685, %v777
    %v779 = vpop.f32.mrf.mxu0
    %780 = vmatprep.mubr.f32.mxu0 0.0
    %v781 = vand.u32 %v174, 4294901760
    %782 = vmatmul.mubr.f32.gmra.mxu0 %v781
    %v783 = vpop.f32.mrf.mxu0
    %v784 = vadd.f32 %v691, %v783
    %v785 = vpop.f32.mrf.mxu0
    %786 = vmatprep.mubr.f32.mxu0 0.0
    %v787 = vand.u32 %v177, 4294901760
    %788 = vmatmul.mubr.f32.gmra.mxu0 %v787
    %v789 = vpop.f32.mrf.mxu0
    %v790 = vadd.f32 %v697, %v789
    %v791 = vpop.f32.mrf.mxu0
    %792 = vdwg.mxu0
    %v793 = vld [vmem:[#allocation5] sm:$0xff]
    %v794 = vld [vmem:[#allocation5 + $0x8] sm:$0xff]
    %v795 = vld [vmem:[#allocation5 + $0x10] sm:$0xff]
    %v796 = vld [vmem:[#allocation5 + $0x18] sm:$0xff]
    %v797 = vld [vmem:[#allocation11] sm:$0xff]
    %v798 = vld [vmem:[#allocation11 + $0x8] sm:$0xff]
    %v799 = vld [vmem:[#allocation11 + $0x10] sm:$0xff]
    %v800 = vld [vmem:[#allocation11 + $0x18] sm:$0xff]
    %v801 = vld [vmem:[%s7] sm:$0x1]
    %v803 = vlaneseq
    %v804 = vshrl.u32 %v803, 7
    %v805 = vsub.s32 0, %v804
    %v806 = vrot.slane %v801, %v805
    %v809 = vsel %vm166, %v793, 0
    %v812 = vsel %vm166, %v794, 0
    %v815 = vsel %vm166, %v795, 0
    %v818 = vsel %vm166, %v796, 0
    %820 = vmatprep.subr.mxu0 0.0
    %821 = vmatpush1.msra.mxu0 0.0
    %822 = vmatprep.subr.mxu0 0.0
    %823 = vmatpush1.msra.mxu0 0.0
    %824 = vmatprep.subr.mxu0 0.0
    %825 = vmatpush1.msra.mxu0 0.0
    %826 = vmatprep.subr.mxu0 0.0
    %827 = vmatpush1.msra.mxu0 0.0
    %828 = vmatprep.subr.mxu0 0.0
    %829 = vmatpush1.msra.mxu0 0.0
    %830 = vmatprep.subr.mxu0 0.0
    %831 = vmatpush1.msra.mxu0 0.0
    %832 = vmatprep.subr.mxu0 0.0
    %833 = vmatpush1.msra.mxu0 0.0
    %834 = vmatprep.subr.mxu0 0.0
    %835 = vmatpush1.msra.mxu0 0.0
    %836 = vmatprep.subr.mxu0 0.0
    %837 = vmatpush1.msra.mxu0 0.0
    %838 = vmatprep.subr.mxu0 0.0
    %839 = vmatpush1.msra.mxu0 0.0
    %840 = vmatprep.subr.mxu0 0.0
    %841 = vmatpush1.msra.mxu0 0.0
    %842 = vmatprep.subr.mxu0 0.0
    %843 = vmatpush1.msra.mxu0 0.0
    %844 = vmatprep.subr.mxu0 0.0
    %v845 = vand.u32 %v800, 4294901760
    %846 = vmatpush1.msra.mxu0 %v845
    %847 = vmatprep.subr.mxu0 0.0
    %v848 = vand.u32 %v799, 4294901760
    %849 = vmatpush1.msra.mxu0 %v848
    %850 = vmatprep.subr.mxu0 0.0
    %v851 = vand.u32 %v798, 4294901760
    %852 = vmatpush1.msra.mxu0 %v851
    %853 = vmatprep.subr.mxu0 0.0
    %v854 = vand.u32 %v797, 4294901760
    %855 = vmatpush1.msra.mxu0 %v854
    %856 = vmatprep.subr.mxu0 0.0
    %857 = vmatpush2.msra.mxu0 0.0
    %858 = vmatprep.subr.mxu0 0.0
    %859 = vmatpush2.msra.mxu0 0.0
    %860 = vmatprep.subr.mxu0 0.0
    %861 = vmatpush2.msra.mxu0 0.0
    %862 = vmatprep.subr.mxu0 0.0
    %863 = vmatpush2.msra.mxu0 0.0
    %864 = vmatprep.subr.mxu0 0.0
    %865 = vmatpush2.msra.mxu0 0.0
    %866 = vmatprep.subr.mxu0 0.0
    %867 = vmatpush2.msra.mxu0 0.0
    %868 = vmatprep.subr.mxu0 0.0
    %869 = vmatpush2.msra.mxu0 0.0
    %870 = vmatprep.subr.mxu0 0.0
    %871 = vmatpush2.msra.mxu0 0.0
    %872 = vmatprep.subr.mxu0 0.0
    %873 = vmatpush2.msra.mxu0 0.0
    %874 = vmatprep.subr.mxu0 0.0
    %875 = vmatpush2.msra.mxu0 0.0
    %876 = vmatprep.subr.mxu0 0.0
    %877 = vmatpush2.msra.mxu0 0.0
    %878 = vmatprep.subr.mxu0 0.0
    %879 = vmatpush2.msra.mxu0 0.0
    %880 = vmatprep.subr.mxu0 0.0
    %881 = vmatpush2.msra.mxu0 0.0
    %882 = vmatprep.subr.mxu0 0.0
    %883 = vmatpush2.msra.mxu0 0.0
    %884 = vmatprep.subr.mxu0 0.0
    %885 = vmatpush2.msra.mxu0 0.0
    %886 = vmatprep.subr.mxu0 0.0
    %887 = vmatpush2.msra.mxu0 0.0
    %888 = vmatprep.mubr.f32.mxu0 0.0
    %v889 = vand.u32 %v809, 4294901760
    %v890 = vsub.f32 %v809, %v889
    %v891 = vand.u32 %v890, 4294901760
    %v892 = vsub.f32 %v890, %v891
    %v893 = vand.u32 %v892, 4294901760
    %894 = vmatmul.mubr.f32.gmra.mxu0 %v893
    %v895 = vpop.f32.mrf.mxu0
    %v896 = vadd.f32 %v806, %v895
    %v897 = vpop.f32.mrf.mxu0
    %898 = vmatprep.mubr.f32.mxu0 0.0
    %v899 = vand.u32 %v812, 4294901760
    %v900 = vsub.f32 %v812, %v899
    %v901 = vand.u32 %v900, 4294901760
    %v902 = vsub.f32 %v900, %v901
    %v903 = vand.u32 %v902, 4294901760
    %904 = vmatmul.mubr.f32.gmra.mxu0 %v903
    %v905 = vpop.f32.mrf.mxu0
    %v906 = vadd.f32 %v806, %v905
    %v907 = vpop.f32.mrf.mxu0
    %908 = vmatprep.mubr.f32.mxu0 0.0
    %v909 = vand.u32 %v815, 4294901760
    %v910 = vsub.f32 %v815, %v909
    %v911 = vand.u32 %v910, 4294901760
    %v912 = vsub.f32 %v910, %v911
    %v913 = vand.u32 %v912, 4294901760
    %914 = vmatmul.mubr.f32.gmra.mxu0 %v913
    %v915 = vpop.f32.mrf.mxu0
    %v916 = vadd.f32 %v806, %v915
    %v917 = vpop.f32.mrf.mxu0
    %918 = vmatprep.mubr.f32.mxu0 0.0
    %v919 = vand.u32 %v818, 4294901760
    %v920 = vsub.f32 %v818, %v919
    %v921 = vand.u32 %v920, 4294901760
    %v922 = vsub.f32 %v920, %v921
    %v923 = vand.u32 %v922, 4294901760
    %924 = vmatmul.mubr.f32.gmra.mxu0 %v923
    %v925 = vpop.f32.mrf.mxu0
    %v926 = vadd.f32 %v806, %v925
    %v927 = vpop.f32.mrf.mxu0
    %928 = vdwg.mxu0
    %929 = vmatprep.subr.mxu0 0.0
    %930 = vmatpush1.msra.mxu0 0.0
    %931 = vmatprep.subr.mxu0 0.0
    %932 = vmatpush1.msra.mxu0 0.0
    %933 = vmatprep.subr.mxu0 0.0
    %934 = vmatpush1.msra.mxu0 0.0
    %935 = vmatprep.subr.mxu0 0.0
    %936 = vmatpush1.msra.mxu0 0.0
    %937 = vmatprep.subr.mxu0 0.0
    %938 = vmatpush1.msra.mxu0 0.0
    %939 = vmatprep.subr.mxu0 0.0
    %940 = vmatpush1.msra.mxu0 0.0
    %941 = vmatprep.subr.mxu0 0.0
    %942 = vmatpush1.msra.mxu0 0.0
    %943 = vmatprep.subr.mxu0 0.0
    %944 = vmatpush1.msra.mxu0 0.0
    %945 = vmatprep.subr.mxu0 0.0
    %946 = vmatpush1.msra.mxu0 0.0
    %947 = vmatprep.subr.mxu0 0.0
    %948 = vmatpush1.msra.mxu0 0.0
    %949 = vmatprep.subr.mxu0 0.0
    %950 = vmatpush1.msra.mxu0 0.0
    %951 = vmatprep.subr.mxu0 0.0
    %952 = vmatpush1.msra.mxu0 0.0
    %953 = vmatprep.subr.mxu0 0.0
    %v954 = vand.u32 %v800, 4294901760
    %v955 = vsub.f32 %v800, %v954
    %v956 = vand.u32 %v955, 4294901760
    %v957 = vsub.f32 %v955, %v956
    %v958 = vand.u32 %v957, 4294901760
    %959 = vmatpush1.msra.mxu0 %v958
    %960 = vmatprep.subr.mxu0 0.0
    %v961 = vand.u32 %v799, 4294901760
    %v962 = vsub.f32 %v799, %v961
    %v963 = vand.u32 %v962, 4294901760
    %v964 = vsub.f32 %v962, %v963
    %v965 = vand.u32 %v964, 4294901760
    %966 = vmatpush1.msra.mxu0 %v965
    %967 = vmatprep.subr.mxu0 0.0
    %v968 = vand.u32 %v798, 4294901760
    %v969 = vsub.f32 %v798, %v968
    %v970 = vand.u32 %v969, 4294901760
    %v971 = vsub.f32 %v969, %v970
    %v972 = vand.u32 %v971, 4294901760
    %973 = vmatpush1.msra.mxu0 %v972
    %974 = vmatprep.subr.mxu0 0.0
    %v975 = vand.u32 %v797, 4294901760
    %v976 = vsub.f32 %v797, %v975
    %v977 = vand.u32 %v976, 4294901760
    %v978 = vsub.f32 %v976, %v977
    %v979 = vand.u32 %v978, 4294901760
    %980 = vmatpush1.msra.mxu0 %v979
    %981 = vmatprep.subr.mxu0 0.0
    %982 = vmatpush2.msra.mxu0 0.0
    %983 = vmatprep.subr.mxu0 0.0
    %984 = vmatpush2.msra.mxu0 0.0
    %985 = vmatprep.subr.mxu0 0.0
    %986 = vmatpush2.msra.mxu0 0.0
    %987 = vmatprep.subr.mxu0 0.0
    %988 = vmatpush2.msra.mxu0 0.0
    %989 = vmatprep.subr.mxu0 0.0
    %990 = vmatpush2.msra.mxu0 0.0
    %991 = vmatprep.subr.mxu0 0.0
    %992 = vmatpush2.msra.mxu0 0.0
    %993 = vmatprep.subr.mxu0 0.0
    %994 = vmatpush2.msra.mxu0 0.0
    %995 = vmatprep.subr.mxu0 0.0
    %996 = vmatpush2.msra.mxu0 0.0
    %997 = vmatprep.subr.mxu0 0.0
    %998 = vmatpush2.msra.mxu0 0.0
    %999 = vmatprep.subr.mxu0 0.0
    %1000 = vmatpush2.msra.mxu0 0.0
    %1001 = vmatprep.subr.mxu0 0.0
    %1002 = vmatpush2.msra.mxu0 0.0
    %1003 = vmatprep.subr.mxu0 0.0
    %1004 = vmatpush2.msra.mxu0 0.0
    %1005 = vmatprep.subr.mxu0 0.0
    %1006 = vmatpush2.msra.mxu0 0.0
    %1007 = vmatprep.subr.mxu0 0.0
    %1008 = vmatpush2.msra.mxu0 0.0
    %1009 = vmatprep.subr.mxu0 0.0
    %1010 = vmatpush2.msra.mxu0 0.0
    %1011 = vmatprep.subr.mxu0 0.0
    %1012 = vmatpush2.msra.mxu0 0.0
    %1013 = vmatprep.mubr.f32.mxu0 0.0
    %v1014 = vand.u32 %v809, 4294901760
    %1015 = vmatmul.mubr.f32.gmra.mxu0 %v1014
    %v1016 = vpop.f32.mrf.mxu0
    %v1017 = vadd.f32 %v896, %v1016
    %v1018 = vpop.f32.mrf.mxu0
    %1019 = vmatprep.mubr.f32.mxu0 0.0
    %v1020 = vand.u32 %v812, 4294901760
    %1021 = vmatmul.mubr.f32.gmra.mxu0 %v1020
    %v1022 = vpop.f32.mrf.mxu0
    %v1023 = vadd.f32 %v906, %v1022
    %v1024 = vpop.f32.mrf.mxu0
    %1025 = vmatprep.mubr.f32.mxu0 0.0
    %v1026 = vand.u32 %v815, 4294901760
    %1027 = vmatmul.mubr.f32.gmra.mxu0 %v1026
    %v1028 = vpop.f32.mrf.mxu0
    %v1029 = vadd.f32 %v916, %v1028
    %v1030 = vpop.f32.mrf.mxu0
    %1031 = vmatprep.mubr.f32.mxu0 0.0
    %v1032 = vand.u32 %v818, 4294901760
    %1033 = vmatmul.mubr.f32.gmra.mxu0 %v1032
    %v1034 = vpop.f32.mrf.mxu0
    %v1035 = vadd.f32 %v926, %v1034
    %v1036 = vpop.f32.mrf.mxu0
    %1037 = vdwg.mxu0
    %1038 = vmatprep.subr.mxu0 0.0
    %1039 = vmatpush1.msra.mxu0 0.0
    %1040 = vmatprep.subr.mxu0 0.0
    %1041 = vmatpush1.msra.mxu0 0.0
    %1042 = vmatprep.subr.mxu0 0.0
    %1043 = vmatpush1.msra.mxu0 0.0
    %1044 = vmatprep.subr.mxu0 0.0
    %1045 = vmatpush1.msra.mxu0 0.0
    %1046 = vmatprep.subr.mxu0 0.0
    %1047 = vmatpush1.msra.mxu0 0.0
    %1048 = vmatprep.subr.mxu0 0.0
    %1049 = vmatpush1.msra.mxu0 0.0
    %1050 = vmatprep.subr.mxu0 0.0
    %1051 = vmatpush1.msra.mxu0 0.0
    %1052 = vmatprep.subr.mxu0 0.0
    %1053 = vmatpush1.msra.mxu0 0.0
    %1054 = vmatprep.subr.mxu0 0.0
    %1055 = vmatpush1.msra.mxu0 0.0
    %1056 = vmatprep.subr.mxu0 0.0
    %1057 = vmatpush1.msra.mxu0 0.0
    %1058 = vmatprep.subr.mxu0 0.0
    %1059 = vmatpush1.msra.mxu0 0.0
    %1060 = vmatprep.subr.mxu0 0.0
    %1061 = vmatpush1.msra.mxu0 0.0
    %1062 = vmatprep.subr.mxu0 0.0
    %v1063 = vand.u32 %v800, 4294901760
    %v1064 = vsub.f32 %v800, %v1063
    %1065 = vmatpush1.msra.mxu0 %v1064
    %1066 = vmatprep.subr.mxu0 0.0
    %v1067 = vand.u32 %v799, 4294901760
    %v1068 = vsub.f32 %v799, %v1067
    %1069 = vmatpush1.msra.mxu0 %v1068
    %1070 = vmatprep.subr.mxu0 0.0
    %v1071 = vand.u32 %v798, 4294901760
    %v1072 = vsub.f32 %v798, %v1071
    %1073 = vmatpush1.msra.mxu0 %v1072
    %1074 = vmatprep.subr.mxu0 0.0
    %v1075 = vand.u32 %v797, 4294901760
    %v1076 = vsub.f32 %v797, %v1075
    %1077 = vmatpush1.msra.mxu0 %v1076
    %1078 = vmatprep.subr.mxu0 0.0
    %1079 = vmatpush2.msra.mxu0 0.0
    %1080 = vmatprep.subr.mxu0 0.0
    %1081 = vmatpush2.msra.mxu0 0.0
    %1082 = vmatprep.subr.mxu0 0.0
    %1083 = vmatpush2.msra.mxu0 0.0
    %1084 = vmatprep.subr.mxu0 0.0
    %1085 = vmatpush2.msra.mxu0 0.0
    %1086 = vmatprep.subr.mxu0 0.0
    %1087 = vmatpush2.msra.mxu0 0.0
    %1088 = vmatprep.subr.mxu0 0.0
    %1089 = vmatpush2.msra.mxu0 0.0
    %1090 = vmatprep.subr.mxu0 0.0
    %1091 = vmatpush2.msra.mxu0 0.0
    %1092 = vmatprep.subr.mxu0 0.0
    %1093 = vmatpush2.msra.mxu0 0.0
    %1094 = vmatprep.subr.mxu0 0.0
    %1095 = vmatpush2.msra.mxu0 0.0
    %1096 = vmatprep.subr.mxu0 0.0
    %1097 = vmatpush2.msra.mxu0 0.0
    %1098 = vmatprep.subr.mxu0 0.0
    %1099 = vmatpush2.msra.mxu0 0.0
    %1100 = vmatprep.subr.mxu0 0.0
    %1101 = vmatpush2.msra.mxu0 0.0
    %1102 = vmatprep.subr.mxu0 0.0
    %1103 = vmatpush2.msra.mxu0 0.0
    %1104 = vmatprep.subr.mxu0 0.0
    %1105 = vmatpush2.msra.mxu0 0.0
    %1106 = vmatprep.subr.mxu0 0.0
    %1107 = vmatpush2.msra.mxu0 0.0
    %1108 = vmatprep.subr.mxu0 0.0
    %1109 = vmatpush2.msra.mxu0 0.0
    %1110 = vmatprep.mubr.f32.mxu0 0.0
    %v1111 = vand.u32 %v809, 4294901760
    %v1112 = vsub.f32 %v809, %v1111
    %1113 = vmatmul.mubr.f32.gmra.mxu0 %v1112
    %v1114 = vpop.f32.mrf.mxu0
    %v1115 = vadd.f32 %v1017, %v1114
    %v1116 = vpop.f32.mrf.mxu0
    %1117 = vmatprep.mubr.f32.mxu0 0.0
    %v1118 = vand.u32 %v812, 4294901760
    %v1119 = vsub.f32 %v812, %v1118
    %1120 = vmatmul.mubr.f32.gmra.mxu0 %v1119
    %v1121 = vpop.f32.mrf.mxu0
    %v1122 = vadd.f32 %v1023, %v1121
    %v1123 = vpop.f32.mrf.mxu0
    %1124 = vmatprep.mubr.f32.mxu0 0.0
    %v1125 = vand.u32 %v815, 4294901760
    %v1126 = vsub.f32 %v815, %v1125
    %1127 = vmatmul.mubr.f32.gmra.mxu0 %v1126
    %v1128 = vpop.f32.mrf.mxu0
    %v1129 = vadd.f32 %v1029, %v1128
    %v1130 = vpop.f32.mrf.mxu0
    %1131 = vmatprep.mubr.f32.mxu0 0.0
    %v1132 = vand.u32 %v818, 4294901760
    %v1133 = vsub.f32 %v818, %v1132
    %1134 = vmatmul.mubr.f32.gmra.mxu0 %v1133
    %v1135 = vpop.f32.mrf.mxu0
    %v1136 = vadd.f32 %v1035, %v1135
    %v1137 = vpop.f32.mrf.mxu0
    %1138 = vdwg.mxu0
    %1139 = vmatprep.subr.mxu0 0.0
    %1140 = vmatpush1.msra.mxu0 0.0
    %1141 = vmatprep.subr.mxu0 0.0
    %1142 = vmatpush1.msra.mxu0 0.0
    %1143 = vmatprep.subr.mxu0 0.0
    %1144 = vmatpush1.msra.mxu0 0.0
    %1145 = vmatprep.subr.mxu0 0.0
    %1146 = vmatpush1.msra.mxu0 0.0
    %1147 = vmatprep.subr.mxu0 0.0
    %1148 = vmatpush1.msra.mxu0 0.0
    %1149 = vmatprep.subr.mxu0 0.0
    %1150 = vmatpush1.msra.mxu0 0.0
    %1151 = vmatprep.subr.mxu0 0.0
    %1152 = vmatpush1.msra.mxu0 0.0
    %1153 = vmatprep.subr.mxu0 0.0
    %1154 = vmatpush1.msra.mxu0 0.0
    %1155 = vmatprep.subr.mxu0 0.0
    %1156 = vmatpush1.msra.mxu0 0.0
    %1157 = vmatprep.subr.mxu0 0.0
    %1158 = vmatpush1.msra.mxu0 0.0
    %1159 = vmatprep.subr.mxu0 0.0
    %1160 = vmatpush1.msra.mxu0 0.0
    %1161 = vmatprep.subr.mxu0 0.0
    %1162 = vmatpush1.msra.mxu0 0.0
    %1163 = vmatprep.subr.mxu0 0.0
    %v1164 = vand.u32 %v800, 4294901760
    %1165 = vmatpush1.msra.mxu0 %v1164
    %1166 = vmatprep.subr.mxu0 0.0
    %v1167 = vand.u32 %v799, 4294901760
    %1168 = vmatpush1.msra.mxu0 %v1167
    %1169 = vmatprep.subr.mxu0 0.0
    %v1170 = vand.u32 %v798, 4294901760
    %1171 = vmatpush1.msra.mxu0 %v1170
    %1172 = vmatprep.subr.mxu0 0.0
    %v1173 = vand.u32 %v797, 4294901760
    %1174 = vmatpush1.msra.mxu0 %v1173
    %1175 = vmatprep.subr.mxu0 0.0
    %1176 = vmatpush2.msra.mxu0 0.0
    %1177 = vmatprep.subr.mxu0 0.0
    %1178 = vmatpush2.msra.mxu0 0.0
    %1179 = vmatprep.subr.mxu0 0.0
    %1180 = vmatpush2.msra.mxu0 0.0
    %1181 = vmatprep.subr.mxu0 0.0
    %1182 = vmatpush2.msra.mxu0 0.0
    %1183 = vmatprep.subr.mxu0 0.0
    %1184 = vmatpush2.msra.mxu0 0.0
    %1185 = vmatprep.subr.mxu0 0.0
    %1186 = vmatpush2.msra.mxu0 0.0
    %1187 = vmatprep.subr.mxu0 0.0
    %1188 = vmatpush2.msra.mxu0 0.0
    %1189 = vmatprep.subr.mxu0 0.0
    %1190 = vmatpush2.msra.mxu0 0.0
    %1191 = vmatprep.subr.mxu0 0.0
    %1192 = vmatpush2.msra.mxu0 0.0
    %1193 = vmatprep.subr.mxu0 0.0
    %1194 = vmatpush2.msra.mxu0 0.0
    %1195 = vmatprep.subr.mxu0 0.0
    %1196 = vmatpush2.msra.mxu0 0.0
    %1197 = vmatprep.subr.mxu0 0.0
    %1198 = vmatpush2.msra.mxu0 0.0
    %1199 = vmatprep.subr.mxu0 0.0
    %1200 = vmatpush2.msra.mxu0 0.0
    %1201 = vmatprep.subr.mxu0 0.0
    %1202 = vmatpush2.msra.mxu0 0.0
    %1203 = vmatprep.subr.mxu0 0.0
    %1204 = vmatpush2.msra.mxu0 0.0
    %1205 = vmatprep.subr.mxu0 0.0
    %1206 = vmatpush2.msra.mxu0 0.0
    %1207 = vmatprep.mubr.f32.mxu0 0.0
    %v1208 = vand.u32 %v809, 4294901760
    %v1209 = vsub.f32 %v809, %v1208
    %v1210 = vand.u32 %v1209, 4294901760
    %1211 = vmatmul.mubr.f32.gmra.mxu0 %v1210
    %v1212 = vpop.f32.mrf.mxu0
    %v1213 = vadd.f32 %v1115, %v1212
    %v1214 = vpop.f32.mrf.mxu0
    %1215 = vmatprep.mubr.f32.mxu0 0.0
    %v1216 = vand.u32 %v812, 4294901760
    %v1217 = vsub.f32 %v812, %v1216
    %v1218 = vand.u32 %v1217, 4294901760
    %1219 = vmatmul.mubr.f32.gmra.mxu0 %v1218
    %v1220 = vpop.f32.mrf.mxu0
    %v1221 = vadd.f32 %v1122, %v1220
    %v1222 = vpop.f32.mrf.mxu0
    %1223 = vmatprep.mubr.f32.mxu0 0.0
    %v1224 = vand.u32 %v815, 4294901760
    %v1225 = vsub.f32 %v815, %v1224
    %v1226 = vand.u32 %v1225, 4294901760
    %1227 = vmatmul.mubr.f32.gmra.mxu0 %v1226
    %v1228 = vpop.f32.mrf.mxu0
    %v1229 = vadd.f32 %v1129, %v1228
    %v1230 = vpop.f32.mrf.mxu0
    %1231 = vmatprep.mubr.f32.mxu0 0.0
    %v1232 = vand.u32 %v818, 4294901760
    %v1233 = vsub.f32 %v818, %v1232
    %v1234 = vand.u32 %v1233, 4294901760
    %1235 = vmatmul.mubr.f32.gmra.mxu0 %v1234
    %v1236 = vpop.f32.mrf.mxu0
    %v1237 = vadd.f32 %v1136, %v1236
    %v1238 = vpop.f32.mrf.mxu0
    %1239 = vdwg.mxu0
    %1240 = vmatprep.subr.mxu0 0.0
    %1241 = vmatpush1.msra.mxu0 0.0
    %1242 = vmatprep.subr.mxu0 0.0
    %1243 = vmatpush1.msra.mxu0 0.0
    %1244 = vmatprep.subr.mxu0 0.0
    %1245 = vmatpush1.msra.mxu0 0.0
    %1246 = vmatprep.subr.mxu0 0.0
    %1247 = vmatpush1.msra.mxu0 0.0
    %1248 = vmatprep.subr.mxu0 0.0
    %1249 = vmatpush1.msra.mxu0 0.0
    %1250 = vmatprep.subr.mxu0 0.0
    %1251 = vmatpush1.msra.mxu0 0.0
    %1252 = vmatprep.subr.mxu0 0.0
    %1253 = vmatpush1.msra.mxu0 0.0
    %1254 = vmatprep.subr.mxu0 0.0
    %1255 = vmatpush1.msra.mxu0 0.0
    %1256 = vmatprep.subr.mxu0 0.0
    %1257 = vmatpush1.msra.mxu0 0.0
    %1258 = vmatprep.subr.mxu0 0.0
    %1259 = vmatpush1.msra.mxu0 0.0
    %1260 = vmatprep.subr.mxu0 0.0
    %1261 = vmatpush1.msra.mxu0 0.0
    %1262 = vmatprep.subr.mxu0 0.0
    %1263 = vmatpush1.msra.mxu0 0.0
    %1264 = vmatprep.subr.mxu0 0.0
    %v1265 = vand.u32 %v800, 4294901760
    %v1266 = vsub.f32 %v800, %v1265
    %v1267 = vand.u32 %v1266, 4294901760
    %1268 = vmatpush1.msra.mxu0 %v1267
    %1269 = vmatprep.subr.mxu0 0.0
    %v1270 = vand.u32 %v799, 4294901760
    %v1271 = vsub.f32 %v799, %v1270
    %v1272 = vand.u32 %v1271, 4294901760
    %1273 = vmatpush1.msra.mxu0 %v1272
    %1274 = vmatprep.subr.mxu0 0.0
    %v1275 = vand.u32 %v798, 4294901760
    %v1276 = vsub.f32 %v798, %v1275
    %v1277 = vand.u32 %v1276, 4294901760
    %1278 = vmatpush1.msra.mxu0 %v1277
    %1279 = vmatprep.subr.mxu0 0.0
    %v1280 = vand.u32 %v797, 4294901760
    %v1281 = vsub.f32 %v797, %v1280
    %v1282 = vand.u32 %v1281, 4294901760
    %1283 = vmatpush1.msra.mxu0 %v1282
    %1284 = vmatprep.subr.mxu0 0.0
    %1285 = vmatpush2.msra.mxu0 0.0
    %1286 = vmatprep.subr.mxu0 0.0
    %1287 = vmatpush2.msra.mxu0 0.0
    %1288 = vmatprep.subr.mxu0 0.0
    %1289 = vmatpush2.msra.mxu0 0.0
    %1290 = vmatprep.subr.mxu0 0.0
    %1291 = vmatpush2.msra.mxu0 0.0
    %1292 = vmatprep.subr.mxu0 0.0
    %1293 = vmatpush2.msra.mxu0 0.0
    %1294 = vmatprep.subr.mxu0 0.0
    %1295 = vmatpush2.msra.mxu0 0.0
    %1296 = vmatprep.subr.mxu0 0.0
    %1297 = vmatpush2.msra.mxu0 0.0
    %1298 = vmatprep.subr.mxu0 0.0
    %1299 = vmatpush2.msra.mxu0 0.0
    %1300 = vmatprep.subr.mxu0 0.0
    %1301 = vmatpush2.msra.mxu0 0.0
    %1302 = vmatprep.subr.mxu0 0.0
    %1303 = vmatpush2.msra.mxu0 0.0
    %1304 = vmatprep.subr.mxu0 0.0
    %1305 = vmatpush2.msra.mxu0 0.0
    %1306 = vmatprep.subr.mxu0 0.0
    %1307 = vmatpush2.msra.mxu0 0.0
    %1308 = vmatprep.subr.mxu0 0.0
    %1309 = vmatpush2.msra.mxu0 0.0
    %1310 = vmatprep.subr.mxu0 0.0
    %1311 = vmatpush2.msra.mxu0 0.0
    %1312 = vmatprep.subr.mxu0 0.0
    %1313 = vmatpush2.msra.mxu0 0.0
    %1314 = vmatprep.subr.mxu0 0.0
    %1315 = vmatpush2.msra.mxu0 0.0
    %1316 = vmatprep.mubr.f32.mxu0 0.0
    %v1317 = vand.u32 %v809, 4294901760
    %1318 = vmatmul.mubr.f32.gmra.mxu0 %v1317
    %v1319 = vpop.f32.mrf.mxu0
    %v1320 = vadd.f32 %v1213, %v1319
    %v1321 = vpop.f32.mrf.mxu0
    %1322 = vmatprep.mubr.f32.mxu0 0.0
    %v1323 = vand.u32 %v812, 4294901760
    %1324 = vmatmul.mubr.f32.gmra.mxu0 %v1323
    %v1325 = vpop.f32.mrf.mxu0
    %v1326 = vadd.f32 %v1221, %v1325
    %v1327 = vpop.f32.mrf.mxu0
    %1328 = vmatprep.mubr.f32.mxu0 0.0
    %v1329 = vand.u32 %v815, 4294901760
    %1330 = vmatmul.mubr.f32.gmra.mxu0 %v1329
    %v1331 = vpop.f32.mrf.mxu0
    %v1332 = vadd.f32 %v1229, %v1331
    %v1333 = vpop.f32.mrf.mxu0
    %1334 = vmatprep.mubr.f32.mxu0 0.0
    %v1335 = vand.u32 %v818, 4294901760
    %1336 = vmatmul.mubr.f32.gmra.mxu0 %v1335
    %v1337 = vpop.f32.mrf.mxu0
    %v1338 = vadd.f32 %v1237, %v1337
    %v1339 = vpop.f32.mrf.mxu0
    %1340 = vdwg.mxu0
    %1341 = vmatprep.subr.mxu0 0.0
    %1342 = vmatpush1.msra.mxu0 0.0
    %1343 = vmatprep.subr.mxu0 0.0
    %1344 = vmatpush1.msra.mxu0 0.0
    %1345 = vmatprep.subr.mxu0 0.0
    %1346 = vmatpush1.msra.mxu0 0.0
    %1347 = vmatprep.subr.mxu0 0.0
    %1348 = vmatpush1.msra.mxu0 0.0
    %1349 = vmatprep.subr.mxu0 0.0
    %1350 = vmatpush1.msra.mxu0 0.0
    %1351 = vmatprep.subr.mxu0 0.0
    %1352 = vmatpush1.msra.mxu0 0.0
    %1353 = vmatprep.subr.mxu0 0.0
    %1354 = vmatpush1.msra.mxu0 0.0
    %1355 = vmatprep.subr.mxu0 0.0
    %1356 = vmatpush1.msra.mxu0 0.0
    %1357 = vmatprep.subr.mxu0 0.0
    %1358 = vmatpush1.msra.mxu0 0.0
    %1359 = vmatprep.subr.mxu0 0.0
    %1360 = vmatpush1.msra.mxu0 0.0
    %1361 = vmatprep.subr.mxu0 0.0
    %1362 = vmatpush1.msra.mxu0 0.0
    %1363 = vmatprep.subr.mxu0 0.0
    %1364 = vmatpush1.msra.mxu0 0.0
    %1365 = vmatprep.subr.mxu0 0.0
    %v1366 = vand.u32 %v800, 4294901760
    %1367 = vmatpush1.msra.mxu0 %v1366
    %1368 = vmatprep.subr.mxu0 0.0
    %v1369 = vand.u32 %v799, 4294901760
    %1370 = vmatpush1.msra.mxu0 %v1369
    %1371 = vmatprep.subr.mxu0 0.0
    %v1372 = vand.u32 %v798, 4294901760
    %1373 = vmatpush1.msra.mxu0 %v1372
    %1374 = vmatprep.subr.mxu0 0.0
    %v1375 = vand.u32 %v797, 4294901760
    %1376 = vmatpush1.msra.mxu0 %v1375
    %1377 = vmatprep.subr.mxu0 0.0
    %1378 = vmatpush2.msra.mxu0 0.0
    %1379 = vmatprep.subr.mxu0 0.0
    %1380 = vmatpush2.msra.mxu0 0.0
    %1381 = vmatprep.subr.mxu0 0.0
    %1382 = vmatpush2.msra.mxu0 0.0
    %1383 = vmatprep.subr.mxu0 0.0
    %1384 = vmatpush2.msra.mxu0 0.0
    %1385 = vmatprep.subr.mxu0 0.0
    %1386 = vmatpush2.msra.mxu0 0.0
    %1387 = vmatprep.subr.mxu0 0.0
    %1388 = vmatpush2.msra.mxu0 0.0
    %1389 = vmatprep.subr.mxu0 0.0
    %1390 = vmatpush2.msra.mxu0 0.0
    %1391 = vmatprep.subr.mxu0 0.0
    %1392 = vmatpush2.msra.mxu0 0.0
    %1393 = vmatprep.subr.mxu0 0.0
    %1394 = vmatpush2.msra.mxu0 0.0
    %1395 = vmatprep.subr.mxu0 0.0
    %1396 = vmatpush2.msra.mxu0 0.0
    %1397 = vmatprep.subr.mxu0 0.0
    %1398 = vmatpush2.msra.mxu0 0.0
    %1399 = vmatprep.subr.mxu0 0.0
    %1400 = vmatpush2.msra.mxu0 0.0
    %1401 = vmatprep.subr.mxu0 0.0
    %1402 = vmatpush2.msra.mxu0 0.0
    %1403 = vmatprep.subr.mxu0 0.0
    %1404 = vmatpush2.msra.mxu0 0.0
    %1405 = vmatprep.subr.mxu0 0.0
    %1406 = vmatpush2.msra.mxu0 0.0
    %1407 = vmatprep.subr.mxu0 0.0
    %1408 = vmatpush2.msra.mxu0 0.0
    %1409 = vmatprep.mubr.f32.mxu0 0.0
    %v1410 = vand.u32 %v809, 4294901760
    %1411 = vmatmul.mubr.f32.gmra.mxu0 %v1410
    %v1412 = vpop.f32.mrf.mxu0
    %v1413 = vadd.f32 %v1320, %v1412
    %v1414 = vpop.f32.mrf.mxu0
    %1415 = vmatprep.mubr.f32.mxu0 0.0
    %v1416 = vand.u32 %v812, 4294901760
    %1417 = vmatmul.mubr.f32.gmra.mxu0 %v1416
    %v1418 = vpop.f32.mrf.mxu0
    %v1419 = vadd.f32 %v1326, %v1418
    %v1420 = vpop.f32.mrf.mxu0
    %1421 = vmatprep.mubr.f32.mxu0 0.0
    %v1422 = vand.u32 %v815, 4294901760
    %1423 = vmatmul.mubr.f32.gmra.mxu0 %v1422
    %v1424 = vpop.f32.mrf.mxu0
    %v1425 = vadd.f32 %v1332, %v1424
    %v1426 = vpop.f32.mrf.mxu0
    %1427 = vmatprep.mubr.f32.mxu0 0.0
    %v1428 = vand.u32 %v818, 4294901760
    %1429 = vmatmul.mubr.f32.gmra.mxu0 %v1428
    %v1430 = vpop.f32.mrf.mxu0
    %v1431 = vadd.f32 %v1338, %v1430
    %v1432 = vpop.f32.mrf.mxu0
    %1433 = vdwg.mxu0
    %v1434 = vld [vmem:[#allocation7] sm:$0xff]
    %v1435 = vld [vmem:[#allocation7 + $0x8] sm:$0xff]
    %v1436 = vld [vmem:[#allocation7 + $0x10] sm:$0xff]
    %v1437 = vld [vmem:[#allocation7 + $0x18] sm:$0xff]
    %v1438 = vld [vmem:[#allocation13] sm:$0xff]
    %v1439 = vld [vmem:[#allocation13 + $0x8] sm:$0xff]
    %v1440 = vld [vmem:[#allocation13 + $0x10] sm:$0xff]
    %v1441 = vld [vmem:[#allocation13 + $0x18] sm:$0xff]
    %v1442 = vld [vmem:[%s9] sm:$0x1]
    %v1444 = vlaneseq
    %v1445 = vshrl.u32 %v1444, 7
    %v1446 = vsub.s32 0, %v1445
    %v1447 = vrot.slane %v1442, %v1446
    %v1450 = vsel %vm166, %v1434, 0
    %v1453 = vsel %vm166, %v1435, 0
    %v1456 = vsel %vm166, %v1436, 0
    %v1459 = vsel %vm166, %v1437, 0
    %1461 = vmatprep.subr.mxu0 0.0
    %1462 = vmatpush1.msra.mxu0 0.0
    %1463 = vmatprep.subr.mxu0 0.0
    %1464 = vmatpush1.msra.mxu0 0.0
    %1465 = vmatprep.subr.mxu0 0.0
    %1466 = vmatpush1.msra.mxu0 0.0
    %1467 = vmatprep.subr.mxu0 0.0
    %1468 = vmatpush1.msra.mxu0 0.0
    %1469 = vmatprep.subr.mxu0 0.0
    %1470 = vmatpush1.msra.mxu0 0.0
    %1471 = vmatprep.subr.mxu0 0.0
    %1472 = vmatpush1.msra.mxu0 0.0
    %1473 = vmatprep.subr.mxu0 0.0
    %1474 = vmatpush1.msra.mxu0 0.0
    %1475 = vmatprep.subr.mxu0 0.0
    %1476 = vmatpush1.msra.mxu0 0.0
    %1477 = vmatprep.subr.mxu0 0.0
    %1478 = vmatpush1.msra.mxu0 0.0
    %1479 = vmatprep.subr.mxu0 0.0
    %1480 = vmatpush1.msra.mxu0 0.0
    %1481 = vmatprep.subr.mxu0 0.0
    %1482 = vmatpush1.msra.mxu0 0.0
    %1483 = vmatprep.subr.mxu0 0.0
    %1484 = vmatpush1.msra.mxu0 0.0
    %1485 = vmatprep.subr.mxu0 0.0
    %v1486 = vand.u32 %v1441, 4294901760
    %1487 = vmatpush1.msra.mxu0 %v1486
    %1488 = vmatprep.subr.mxu0 0.0
    %v1489 = vand.u32 %v1440, 4294901760
    %1490 = vmatpush1.msra.mxu0 %v1489
    %1491 = vmatprep.subr.mxu0 0.0
    %v1492 = vand.u32 %v1439, 4294901760
    %1493 = vmatpush1.msra.mxu0 %v1492
    %1494 = vmatprep.subr.mxu0 0.0
    %v1495 = vand.u32 %v1438, 4294901760
    %1496 = vmatpush1.msra.mxu0 %v1495
    %1497 = vmatprep.subr.mxu0 0.0
    %1498 = vmatpush2.msra.mxu0 0.0
    %1499 = vmatprep.subr.mxu0 0.0
    %1500 = vmatpush2.msra.mxu0 0.0
    %1501 = vmatprep.subr.mxu0 0.0
    %1502 = vmatpush2.msra.mxu0 0.0
    %1503 = vmatprep.subr.mxu0 0.0
    %1504 = vmatpush2.msra.mxu0 0.0
    %1505 = vmatprep.subr.mxu0 0.0
    %1506 = vmatpush2.msra.mxu0 0.0
    %1507 = vmatprep.subr.mxu0 0.0
    %1508 = vmatpush2.msra.mxu0 0.0
    %1509 = vmatprep.subr.mxu0 0.0
    %1510 = vmatpush2.msra.mxu0 0.0
    %1511 = vmatprep.subr.mxu0 0.0
    %1512 = vmatpush2.msra.mxu0 0.0
    %1513 = vmatprep.subr.mxu0 0.0
    %1514 = vmatpush2.msra.mxu0 0.0
    %1515 = vmatprep.subr.mxu0 0.0
    %1516 = vmatpush2.msra.mxu0 0.0
    %1517 = vmatprep.subr.mxu0 0.0
    %1518 = vmatpush2.msra.mxu0 0.0
    %1519 = vmatprep.subr.mxu0 0.0
    %1520 = vmatpush2.msra.mxu0 0.0
    %1521 = vmatprep.subr.mxu0 0.0
    %1522 = vmatpush2.msra.mxu0 0.0
    %1523 = vmatprep.subr.mxu0 0.0
    %1524 = vmatpush2.msra.mxu0 0.0
    %1525 = vmatprep.subr.mxu0 0.0
    %1526 = vmatpush2.msra.mxu0 0.0
    %1527 = vmatprep.subr.mxu0 0.0
    %1528 = vmatpush2.msra.mxu0 0.0
    %1529 = vmatprep.mubr.f32.mxu0 0.0
    %v1530 = vand.u32 %v1450, 4294901760
    %v1531 = vsub.f32 %v1450, %v1530
    %v1532 = vand.u32 %v1531, 4294901760
    %v1533 = vsub.f32 %v1531, %v1532
    %v1534 = vand.u32 %v1533, 4294901760
    %1535 = vmatmul.mubr.f32.gmra.mxu0 %v1534
    %v1536 = vpop.f32.mrf.mxu0
    %v1537 = vadd.f32 %v1447, %v1536
    %v1538 = vpop.f32.mrf.mxu0
    %1539 = vmatprep.mubr.f32.mxu0 0.0
    %v1540 = vand.u32 %v1453, 4294901760
    %v1541 = vsub.f32 %v1453, %v1540
    %v1542 = vand.u32 %v1541, 4294901760
    %v1543 = vsub.f32 %v1541, %v1542
    %v1544 = vand.u32 %v1543, 4294901760
    %1545 = vmatmul.mubr.f32.gmra.mxu0 %v1544
    %v1546 = vpop.f32.mrf.mxu0
    %v1547 = vadd.f32 %v1447, %v1546
    %v1548 = vpop.f32.mrf.mxu0
    %1549 = vmatprep.mubr.f32.mxu0 0.0
    %v1550 = vand.u32 %v1456, 4294901760
    %v1551 = vsub.f32 %v1456, %v1550
    %v1552 = vand.u32 %v1551, 4294901760
    %v1553 = vsub.f32 %v1551, %v1552
    %v1554 = vand.u32 %v1553, 4294901760
    %1555 = vmatmul.mubr.f32.gmra.mxu0 %v1554
    %v1556 = vpop.f32.mrf.mxu0
    %v1557 = vadd.f32 %v1447, %v1556
    %v1558 = vpop.f32.mrf.mxu0
    %1559 = vmatprep.mubr.f32.mxu0 0.0
    %v1560 = vand.u32 %v1459, 4294901760
    %v1561 = vsub.f32 %v1459, %v1560
    %v1562 = vand.u32 %v1561, 4294901760
    %v1563 = vsub.f32 %v1561, %v1562
    %v1564 = vand.u32 %v1563, 4294901760
    %1565 = vmatmul.mubr.f32.gmra.mxu0 %v1564
    %v1566 = vpop.f32.mrf.mxu0
    %v1567 = vadd.f32 %v1447, %v1566
    %v1568 = vpop.f32.mrf.mxu0
    %1569 = vdwg.mxu0
    %1570 = vmatprep.subr.mxu0 0.0
    %1571 = vmatpush1.msra.mxu0 0.0
    %1572 = vmatprep.subr.mxu0 0.0
    %1573 = vmatpush1.msra.mxu0 0.0
    %1574 = vmatprep.subr.mxu0 0.0
    %1575 = vmatpush1.msra.mxu0 0.0
    %1576 = vmatprep.subr.mxu0 0.0
    %1577 = vmatpush1.msra.mxu0 0.0
    %1578 = vmatprep.subr.mxu0 0.0
    %1579 = vmatpush1.msra.mxu0 0.0
    %1580 = vmatprep.subr.mxu0 0.0
    %1581 = vmatpush1.msra.mxu0 0.0
    %1582 = vmatprep.subr.mxu0 0.0
    %1583 = vmatpush1.msra.mxu0 0.0
    %1584 = vmatprep.subr.mxu0 0.0
    %1585 = vmatpush1.msra.mxu0 0.0
    %1586 = vmatprep.subr.mxu0 0.0
    %1587 = vmatpush1.msra.mxu0 0.0
    %1588 = vmatprep.subr.mxu0 0.0
    %1589 = vmatpush1.msra.mxu0 0.0
    %1590 = vmatprep.subr.mxu0 0.0
    %1591 = vmatpush1.msra.mxu0 0.0
    %1592 = vmatprep.subr.mxu0 0.0
    %1593 = vmatpush1.msra.mxu0 0.0
    %1594 = vmatprep.subr.mxu0 0.0
    %v1595 = vand.u32 %v1441, 4294901760
    %v1596 = vsub.f32 %v1441, %v1595
    %v1597 = vand.u32 %v1596, 4294901760
    %v1598 = vsub.f32 %v1596, %v1597
    %v1599 = vand.u32 %v1598, 4294901760
    %1600 = vmatpush1.msra.mxu0 %v1599
    %1601 = vmatprep.subr.mxu0 0.0
    %v1602 = vand.u32 %v1440, 4294901760
    %v1603 = vsub.f32 %v1440, %v1602
    %v1604 = vand.u32 %v1603, 4294901760
    %v1605 = vsub.f32 %v1603, %v1604
    %v1606 = vand.u32 %v1605, 4294901760
    %1607 = vmatpush1.msra.mxu0 %v1606
    %1608 = vmatprep.subr.mxu0 0.0
    %v1609 = vand.u32 %v1439, 4294901760
    %v1610 = vsub.f32 %v1439, %v1609
    %v1611 = vand.u32 %v1610, 4294901760
    %v1612 = vsub.f32 %v1610, %v1611
    %v1613 = vand.u32 %v1612, 4294901760
    %1614 = vmatpush1.msra.mxu0 %v1613
    %1615 = vmatprep.subr.mxu0 0.0
    %v1616 = vand.u32 %v1438, 4294901760
    %v1617 = vsub.f32 %v1438, %v1616
    %v1618 = vand.u32 %v1617, 4294901760
    %v1619 = vsub.f32 %v1617, %v1618
    %v1620 = vand.u32 %v1619, 4294901760
    %1621 = vmatpush1.msra.mxu0 %v1620
    %1622 = vmatprep.subr.mxu0 0.0
    %1623 = vmatpush2.msra.mxu0 0.0
    %1624 = vmatprep.subr.mxu0 0.0
    %1625 = vmatpush2.msra.mxu0 0.0
    %1626 = vmatprep.subr.mxu0 0.0
    %1627 = vmatpush2.msra.mxu0 0.0
    %1628 = vmatprep.subr.mxu0 0.0
    %1629 = vmatpush2.msra.mxu0 0.0
    %1630 = vmatprep.subr.mxu0 0.0
    %1631 = vmatpush2.msra.mxu0 0.0
    %1632 = vmatprep.subr.mxu0 0.0
    %1633 = vmatpush2.msra.mxu0 0.0
    %1634 = vmatprep.subr.mxu0 0.0
    %1635 = vmatpush2.msra.mxu0 0.0
    %1636 = vmatprep.subr.mxu0 0.0
    %1637 = vmatpush2.msra.mxu0 0.0
    %1638 = vmatprep.subr.mxu0 0.0
    %1639 = vmatpush2.msra.mxu0 0.0
    %1640 = vmatprep.subr.mxu0 0.0
    %1641 = vmatpush2.msra.mxu0 0.0
    %1642 = vmatprep.subr.mxu0 0.0
    %1643 = vmatpush2.msra.mxu0 0.0
    %1644 = vmatprep.subr.mxu0 0.0
    %1645 = vmatpush2.msra.mxu0 0.0
    %1646 = vmatprep.subr.mxu0 0.0
    %1647 = vmatpush2.msra.mxu0 0.0
    %1648 = vmatprep.subr.mxu0 0.0
    %1649 = vmatpush2.msra.mxu0 0.0
    %1650 = vmatprep.subr.mxu0 0.0
    %1651 = vmatpush2.msra.mxu0 0.0
    %1652 = vmatprep.subr.mxu0 0.0
    %1653 = vmatpush2.msra.mxu0 0.0
    %1654 = vmatprep.mubr.f32.mxu0 0.0
    %v1655 = vand.u32 %v1450, 4294901760
    %1656 = vmatmul.mubr.f32.gmra.mxu0 %v1655
    %v1657 = vpop.f32.mrf.mxu0
    %v1658 = vadd.f32 %v1537, %v1657
    %v1659 = vpop.f32.mrf.mxu0
    %1660 = vmatprep.mubr.f32.mxu0 0.0
    %v1661 = vand.u32 %v1453, 4294901760
    %1662 = vmatmul.mubr.f32.gmra.mxu0 %v1661
    %v1663 = vpop.f32.mrf.mxu0
    %v1664 = vadd.f32 %v1547, %v1663
    %v1665 = vpop.f32.mrf.mxu0
    %1666 = vmatprep.mubr.f32.mxu0 0.0
    %v1667 = vand.u32 %v1456, 4294901760
    %1668 = vmatmul.mubr.f32.gmra.mxu0 %v1667
    %v1669 = vpop.f32.mrf.mxu0
    %v1670 = vadd.f32 %v1557, %v1669
    %v1671 = vpop.f32.mrf.mxu0
    %1672 = vmatprep.mubr.f32.mxu0 0.0
    %v1673 = vand.u32 %v1459, 4294901760
    %1674 = vmatmul.mubr.f32.gmra.mxu0 %v1673
    %v1675 = vpop.f32.mrf.mxu0
    %v1676 = vadd.f32 %v1567, %v1675
    %v1677 = vpop.f32.mrf.mxu0
    %1678 = vdwg.mxu0
    %1679 = vmatprep.subr.mxu0 0.0
    %1680 = vmatpush1.msra.mxu0 0.0
    %1681 = vmatprep.subr.mxu0 0.0
    %1682 = vmatpush1.msra.mxu0 0.0
    %1683 = vmatprep.subr.mxu0 0.0
    %1684 = vmatpush1.msra.mxu0 0.0
    %1685 = vmatprep.subr.mxu0 0.0
    %1686 = vmatpush1.msra.mxu0 0.0
    %1687 = vmatprep.subr.mxu0 0.0
    %1688 = vmatpush1.msra.mxu0 0.0
    %1689 = vmatprep.subr.mxu0 0.0
    %1690 = vmatpush1.msra.mxu0 0.0
    %1691 = vmatprep.subr.mxu0 0.0
    %1692 = vmatpush1.msra.mxu0 0.0
    %1693 = vmatprep.subr.mxu0 0.0
    %1694 = vmatpush1.msra.mxu0 0.0
    %1695 = vmatprep.subr.mxu0 0.0
    %1696 = vmatpush1.msra.mxu0 0.0
    %1697 = vmatprep.subr.mxu0 0.0
    %1698 = vmatpush1.msra.mxu0 0.0
    %1699 = vmatprep.subr.mxu0 0.0
    %1700 = vmatpush1.msra.mxu0 0.0
    %1701 = vmatprep.subr.mxu0 0.0
    %1702 = vmatpush1.msra.mxu0 0.0
    %1703 = vmatprep.subr.mxu0 0.0
    %v1704 = vand.u32 %v1441, 4294901760
    %v1705 = vsub.f32 %v1441, %v1704
    %1706 = vmatpush1.msra.mxu0 %v1705
    %1707 = vmatprep.subr.mxu0 0.0
    %v1708 = vand.u32 %v1440, 4294901760
    %v1709 = vsub.f32 %v1440, %v1708
    %1710 = vmatpush1.msra.mxu0 %v1709
    %1711 = vmatprep.subr.mxu0 0.0
    %v1712 = vand.u32 %v1439, 4294901760
    %v1713 = vsub.f32 %v1439, %v1712
    %1714 = vmatpush1.msra.mxu0 %v1713
    %1715 = vmatprep.subr.mxu0 0.0
    %v1716 = vand.u32 %v1438, 4294901760
    %v1717 = vsub.f32 %v1438, %v1716
    %1718 = vmatpush1.msra.mxu0 %v1717
    %1719 = vmatprep.subr.mxu0 0.0
    %1720 = vmatpush2.msra.mxu0 0.0
    %1721 = vmatprep.subr.mxu0 0.0
    %1722 = vmatpush2.msra.mxu0 0.0
    %1723 = vmatprep.subr.mxu0 0.0
    %1724 = vmatpush2.msra.mxu0 0.0
    %1725 = vmatprep.subr.mxu0 0.0
    %1726 = vmatpush2.msra.mxu0 0.0
    %1727 = vmatprep.subr.mxu0 0.0
    %1728 = vmatpush2.msra.mxu0 0.0
    %1729 = vmatprep.subr.mxu0 0.0
    %1730 = vmatpush2.msra.mxu0 0.0
    %1731 = vmatprep.subr.mxu0 0.0
    %1732 = vmatpush2.msra.mxu0 0.0
    %1733 = vmatprep.subr.mxu0 0.0
    %1734 = vmatpush2.msra.mxu0 0.0
    %1735 = vmatprep.subr.mxu0 0.0
    %1736 = vmatpush2.msra.mxu0 0.0
    %1737 = vmatprep.subr.mxu0 0.0
    %1738 = vmatpush2.msra.mxu0 0.0
    %1739 = vmatprep.subr.mxu0 0.0
    %1740 = vmatpush2.msra.mxu0 0.0
    %1741 = vmatprep.subr.mxu0 0.0
    %1742 = vmatpush2.msra.mxu0 0.0
    %1743 = vmatprep.subr.mxu0 0.0
    %1744 = vmatpush2.msra.mxu0 0.0
    %1745 = vmatprep.subr.mxu0 0.0
    %1746 = vmatpush2.msra.mxu0 0.0
    %1747 = vmatprep.subr.mxu0 0.0
    %1748 = vmatpush2.msra.mxu0 0.0
    %1749 = vmatprep.subr.mxu0 0.0
    %1750 = vmatpush2.msra.mxu0 0.0
    %1751 = vmatprep.mubr.f32.mxu0 0.0
    %v1752 = vand.u32 %v1450, 4294901760
    %v1753 = vsub.f32 %v1450, %v1752
    %1754 = vmatmul.mubr.f32.gmra.mxu0 %v1753
    %v1755 = vpop.f32.mrf.mxu0
    %v1756 = vadd.f32 %v1658, %v1755
    %v1757 = vpop.f32.mrf.mxu0
    %1758 = vmatprep.mubr.f32.mxu0 0.0
    %v1759 = vand.u32 %v1453, 4294901760
    %v1760 = vsub.f32 %v1453, %v1759
    %1761 = vmatmul.mubr.f32.gmra.mxu0 %v1760
    %v1762 = vpop.f32.mrf.mxu0
    %v1763 = vadd.f32 %v1664, %v1762
    %v1764 = vpop.f32.mrf.mxu0
    %1765 = vmatprep.mubr.f32.mxu0 0.0
    %v1766 = vand.u32 %v1456, 4294901760
    %v1767 = vsub.f32 %v1456, %v1766
    %1768 = vmatmul.mubr.f32.gmra.mxu0 %v1767
    %v1769 = vpop.f32.mrf.mxu0
    %v1770 = vadd.f32 %v1670, %v1769
    %v1771 = vpop.f32.mrf.mxu0
    %1772 = vmatprep.mubr.f32.mxu0 0.0
    %v1773 = vand.u32 %v1459, 4294901760
    %v1774 = vsub.f32 %v1459, %v1773
    %1775 = vmatmul.mubr.f32.gmra.mxu0 %v1774
    %v1776 = vpop.f32.mrf.mxu0
    %v1777 = vadd.f32 %v1676, %v1776
    %v1778 = vpop.f32.mrf.mxu0
    %1779 = vdwg.mxu0
    %1780 = vmatprep.subr.mxu0 0.0
    %1781 = vmatpush1.msra.mxu0 0.0
    %1782 = vmatprep.subr.mxu0 0.0
    %1783 = vmatpush1.msra.mxu0 0.0
    %1784 = vmatprep.subr.mxu0 0.0
    %1785 = vmatpush1.msra.mxu0 0.0
    %1786 = vmatprep.subr.mxu0 0.0
    %1787 = vmatpush1.msra.mxu0 0.0
    %1788 = vmatprep.subr.mxu0 0.0
    %1789 = vmatpush1.msra.mxu0 0.0
    %1790 = vmatprep.subr.mxu0 0.0
    %1791 = vmatpush1.msra.mxu0 0.0
    %1792 = vmatprep.subr.mxu0 0.0
    %1793 = vmatpush1.msra.mxu0 0.0
    %1794 = vmatprep.subr.mxu0 0.0
    %1795 = vmatpush1.msra.mxu0 0.0
    %1796 = vmatprep.subr.mxu0 0.0
    %1797 = vmatpush1.msra.mxu0 0.0
    %1798 = vmatprep.subr.mxu0 0.0
    %1799 = vmatpush1.msra.mxu0 0.0
    %1800 = vmatprep.subr.mxu0 0.0
    %1801 = vmatpush1.msra.mxu0 0.0
    %1802 = vmatprep.subr.mxu0 0.0
    %1803 = vmatpush1.msra.mxu0 0.0
    %1804 = vmatprep.subr.mxu0 0.0
    %v1805 = vand.u32 %v1441, 4294901760
    %1806 = vmatpush1.msra.mxu0 %v1805
    %1807 = vmatprep.subr.mxu0 0.0
    %v1808 = vand.u32 %v1440, 4294901760
    %1809 = vmatpush1.msra.mxu0 %v1808
    %1810 = vmatprep.subr.mxu0 0.0
    %v1811 = vand.u32 %v1439, 4294901760
    %1812 = vmatpush1.msra.mxu0 %v1811
    %1813 = vmatprep.subr.mxu0 0.0
    %v1814 = vand.u32 %v1438, 4294901760
    %1815 = vmatpush1.msra.mxu0 %v1814
    %1816 = vmatprep.subr.mxu0 0.0
    %1817 = vmatpush2.msra.mxu0 0.0
    %1818 = vmatprep.subr.mxu0 0.0
    %1819 = vmatpush2.msra.mxu0 0.0
    %1820 = vmatprep.subr.mxu0 0.0
    %1821 = vmatpush2.msra.mxu0 0.0
    %1822 = vmatprep.subr.mxu0 0.0
    %1823 = vmatpush2.msra.mxu0 0.0
    %1824 = vmatprep.subr.mxu0 0.0
    %1825 = vmatpush2.msra.mxu0 0.0
    %1826 = vmatprep.subr.mxu0 0.0
    %1827 = vmatpush2.msra.mxu0 0.0
    %1828 = vmatprep.subr.mxu0 0.0
    %1829 = vmatpush2.msra.mxu0 0.0
    %1830 = vmatprep.subr.mxu0 0.0
    %1831 = vmatpush2.msra.mxu0 0.0
    %1832 = vmatprep.subr.mxu0 0.0
    %1833 = vmatpush2.msra.mxu0 0.0
    %1834 = vmatprep.subr.mxu0 0.0
    %1835 = vmatpush2.msra.mxu0 0.0
    %1836 = vmatprep.subr.mxu0 0.0
    %1837 = vmatpush2.msra.mxu0 0.0
    %1838 = vmatprep.subr.mxu0 0.0
    %1839 = vmatpush2.msra.mxu0 0.0
    %1840 = vmatprep.subr.mxu0 0.0
    %1841 = vmatpush2.msra.mxu0 0.0
    %1842 = vmatprep.subr.mxu0 0.0
    %1843 = vmatpush2.msra.mxu0 0.0
    %1844 = vmatprep.subr.mxu0 0.0
    %1845 = vmatpush2.msra.mxu0 0.0
    %1846 = vmatprep.subr.mxu0 0.0
    %1847 = vmatpush2.msra.mxu0 0.0
    %1848 = vmatprep.mubr.f32.mxu0 0.0
    %v1849 = vand.u32 %v1450, 4294901760
    %v1850 = vsub.f32 %v1450, %v1849
    %v1851 = vand.u32 %v1850, 4294901760
    %1852 = vmatmul.mubr.f32.gmra.mxu0 %v1851
    %v1853 = vpop.f32.mrf.mxu0
    %v1854 = vadd.f32 %v1756, %v1853
    %v1855 = vpop.f32.mrf.mxu0
    %1856 = vmatprep.mubr.f32.mxu0 0.0
    %v1857 = vand.u32 %v1453, 4294901760
    %v1858 = vsub.f32 %v1453, %v1857
    %v1859 = vand.u32 %v1858, 4294901760
    %1860 = vmatmul.mubr.f32.gmra.mxu0 %v1859
    %v1861 = vpop.f32.mrf.mxu0
    %v1862 = vadd.f32 %v1763, %v1861
    %v1863 = vpop.f32.mrf.mxu0
    %1864 = vmatprep.mubr.f32.mxu0 0.0
    %v1865 = vand.u32 %v1456, 4294901760
    %v1866 = vsub.f32 %v1456, %v1865
    %v1867 = vand.u32 %v1866, 4294901760
    %1868 = vmatmul.mubr.f32.gmra.mxu0 %v1867
    %v1869 = vpop.f32.mrf.mxu0
    %v1870 = vadd.f32 %v1770, %v1869
    %v1871 = vpop.f32.mrf.mxu0
    %1872 = vmatprep.mubr.f32.mxu0 0.0
    %v1873 = vand.u32 %v1459, 4294901760
    %v1874 = vsub.f32 %v1459, %v1873
    %v1875 = vand.u32 %v1874, 4294901760
    %1876 = vmatmul.mubr.f32.gmra.mxu0 %v1875
    %v1877 = vpop.f32.mrf.mxu0
    %v1878 = vadd.f32 %v1777, %v1877
    %v1879 = vpop.f32.mrf.mxu0
    %1880 = vdwg.mxu0
    %1881 = vmatprep.subr.mxu0 0.0
    %1882 = vmatpush1.msra.mxu0 0.0
    %1883 = vmatprep.subr.mxu0 0.0
    %1884 = vmatpush1.msra.mxu0 0.0
    %1885 = vmatprep.subr.mxu0 0.0
    %1886 = vmatpush1.msra.mxu0 0.0
    %1887 = vmatprep.subr.mxu0 0.0
    %1888 = vmatpush1.msra.mxu0 0.0
    %1889 = vmatprep.subr.mxu0 0.0
    %1890 = vmatpush1.msra.mxu0 0.0
    %1891 = vmatprep.subr.mxu0 0.0
    %1892 = vmatpush1.msra.mxu0 0.0
    %1893 = vmatprep.subr.mxu0 0.0
    %1894 = vmatpush1.msra.mxu0 0.0
    %1895 = vmatprep.subr.mxu0 0.0
    %1896 = vmatpush1.msra.mxu0 0.0
    %1897 = vmatprep.subr.mxu0 0.0
    %1898 = vmatpush1.msra.mxu0 0.0
    %1899 = vmatprep.subr.mxu0 0.0
    %1900 = vmatpush1.msra.mxu0 0.0
    %1901 = vmatprep.subr.mxu0 0.0
    %1902 = vmatpush1.msra.mxu0 0.0
    %1903 = vmatprep.subr.mxu0 0.0
    %1904 = vmatpush1.msra.mxu0 0.0
    %1905 = vmatprep.subr.mxu0 0.0
    %v1906 = vand.u32 %v1441, 4294901760
    %v1907 = vsub.f32 %v1441, %v1906
    %v1908 = vand.u32 %v1907, 4294901760
    %1909 = vmatpush1.msra.mxu0 %v1908
    %1910 = vmatprep.subr.mxu0 0.0
    %v1911 = vand.u32 %v1440, 4294901760
    %v1912 = vsub.f32 %v1440, %v1911
    %v1913 = vand.u32 %v1912, 4294901760
    %1914 = vmatpush1.msra.mxu0 %v1913
    %1915 = vmatprep.subr.mxu0 0.0
    %v1916 = vand.u32 %v1439, 4294901760
    %v1917 = vsub.f32 %v1439, %v1916
    %v1918 = vand.u32 %v1917, 4294901760
    %1919 = vmatpush1.msra.mxu0 %v1918
    %1920 = vmatprep.subr.mxu0 0.0
    %v1921 = vand.u32 %v1438, 4294901760
    %v1922 = vsub.f32 %v1438, %v1921
    %v1923 = vand.u32 %v1922, 4294901760
    %1924 = vmatpush1.msra.mxu0 %v1923
    %1925 = vmatprep.subr.mxu0 0.0
    %1926 = vmatpush2.msra.mxu0 0.0
    %1927 = vmatprep.subr.mxu0 0.0
    %1928 = vmatpush2.msra.mxu0 0.0
    %1929 = vmatprep.subr.mxu0 0.0
    %1930 = vmatpush2.msra.mxu0 0.0
    %1931 = vmatprep.subr.mxu0 0.0
    %1932 = vmatpush2.msra.mxu0 0.0
    %1933 = vmatprep.subr.mxu0 0.0
    %1934 = vmatpush2.msra.mxu0 0.0
    %1935 = vmatprep.subr.mxu0 0.0
    %1936 = vmatpush2.msra.mxu0 0.0
    %1937 = vmatprep.subr.mxu0 0.0
    %1938 = vmatpush2.msra.mxu0 0.0
    %1939 = vmatprep.subr.mxu0 0.0
    %1940 = vmatpush2.msra.mxu0 0.0
    %1941 = vmatprep.subr.mxu0 0.0
    %1942 = vmatpush2.msra.mxu0 0.0
    %1943 = vmatprep.subr.mxu0 0.0
    %1944 = vmatpush2.msra.mxu0 0.0
    %1945 = vmatprep.subr.mxu0 0.0
    %1946 = vmatpush2.msra.mxu0 0.0
    %1947 = vmatprep.subr.mxu0 0.0
    %1948 = vmatpush2.msra.mxu0 0.0
    %1949 = vmatprep.subr.mxu0 0.0
    %1950 = vmatpush2.msra.mxu0 0.0
    %1951 = vmatprep.subr.mxu0 0.0
    %1952 = vmatpush2.msra.mxu0 0.0
    %1953 = vmatprep.subr.mxu0 0.0
    %1954 = vmatpush2.msra.mxu0 0.0
    %1955 = vmatprep.subr.mxu0 0.0
    %1956 = vmatpush2.msra.mxu0 0.0
    %1957 = vmatprep.mubr.f32.mxu0 0.0
    %v1958 = vand.u32 %v1450, 4294901760
    %1959 = vmatmul.mubr.f32.gmra.mxu0 %v1958
    %v1960 = vpop.f32.mrf.mxu0
    %v1961 = vadd.f32 %v1854, %v1960
    %v1962 = vpop.f32.mrf.mxu0
    %1963 = vmatprep.mubr.f32.mxu0 0.0
    %v1964 = vand.u32 %v1453, 4294901760
    %1965 = vmatmul.mubr.f32.gmra.mxu0 %v1964
    %v1966 = vpop.f32.mrf.mxu0
    %v1967 = vadd.f32 %v1862, %v1966
    %v1968 = vpop.f32.mrf.mxu0
    %1969 = vmatprep.mubr.f32.mxu0 0.0
    %v1970 = vand.u32 %v1456, 4294901760
    %1971 = vmatmul.mubr.f32.gmra.mxu0 %v1970
    %v1972 = vpop.f32.mrf.mxu0
    %v1973 = vadd.f32 %v1870, %v1972
    %v1974 = vpop.f32.mrf.mxu0
    %1975 = vmatprep.mubr.f32.mxu0 0.0
    %v1976 = vand.u32 %v1459, 4294901760
    %1977 = vmatmul.mubr.f32.gmra.mxu0 %v1976
    %v1978 = vpop.f32.mrf.mxu0
    %v1979 = vadd.f32 %v1878, %v1978
    %v1980 = vpop.f32.mrf.mxu0
    %1981 = vdwg.mxu0
    %1982 = vmatprep.subr.mxu0 0.0
    %1983 = vmatpush1.msra.mxu0 0.0
    %1984 = vmatprep.subr.mxu0 0.0
    %1985 = vmatpush1.msra.mxu0 0.0
    %1986 = vmatprep.subr.mxu0 0.0
    %1987 = vmatpush1.msra.mxu0 0.0
    %1988 = vmatprep.subr.mxu0 0.0
    %1989 = vmatpush1.msra.mxu0 0.0
    %1990 = vmatprep.subr.mxu0 0.0
    %1991 = vmatpush1.msra.mxu0 0.0
    %1992 = vmatprep.subr.mxu0 0.0
    %1993 = vmatpush1.msra.mxu0 0.0
    %1994 = vmatprep.subr.mxu0 0.0
    %1995 = vmatpush1.msra.mxu0 0.0
    %1996 = vmatprep.subr.mxu0 0.0
    %1997 = vmatpush1.msra.mxu0 0.0
    %1998 = vmatprep.subr.mxu0 0.0
    %1999 = vmatpush1.msra.mxu0 0.0
    %2000 = vmatprep.subr.mxu0 0.0
    %2001 = vmatpush1.msra.mxu0 0.0
    %2002 = vmatprep.subr.mxu0 0.0
    %2003 = vmatpush1.msra.mxu0 0.0
    %2004 = vmatprep.subr.mxu0 0.0
    %2005 = vmatpush1.msra.mxu0 0.0
    %2006 = vmatprep.subr.mxu0 0.0
    %v2007 = vand.u32 %v1441, 4294901760
    %2008 = vmatpush1.msra.mxu0 %v2007
    %2009 = vmatprep.subr.mxu0 0.0
    %v2010 = vand.u32 %v1440, 4294901760
    %2011 = vmatpush1.msra.mxu0 %v2010
    %2012 = vmatprep.subr.mxu0 0.0
    %v2013 = vand.u32 %v1439, 4294901760
    %2014 = vmatpush1.msra.mxu0 %v2013
    %2015 = vmatprep.subr.mxu0 0.0
    %v2016 = vand.u32 %v1438, 4294901760
    %2017 = vmatpush1.msra.mxu0 %v2016
    %2018 = vmatprep.subr.mxu0 0.0
    %2019 = vmatpush2.msra.mxu0 0.0
    %2020 = vmatprep.subr.mxu0 0.0
    %2021 = vmatpush2.msra.mxu0 0.0
    %2022 = vmatprep.subr.mxu0 0.0
    %2023 = vmatpush2.msra.mxu0 0.0
    %2024 = vmatprep.subr.mxu0 0.0
    %2025 = vmatpush2.msra.mxu0 0.0
    %2026 = vmatprep.subr.mxu0 0.0
    %2027 = vmatpush2.msra.mxu0 0.0
    %2028 = vmatprep.subr.mxu0 0.0
    %2029 = vmatpush2.msra.mxu0 0.0
    %2030 = vmatprep.subr.mxu0 0.0
    %2031 = vmatpush2.msra.mxu0 0.0
    %2032 = vmatprep.subr.mxu0 0.0
    %2033 = vmatpush2.msra.mxu0 0.0
    %2034 = vmatprep.subr.mxu0 0.0
    %2035 = vmatpush2.msra.mxu0 0.0
    %2036 = vmatprep.subr.mxu0 0.0
    %2037 = vmatpush2.msra.mxu0 0.0
    %2038 = vmatprep.subr.mxu0 0.0
    %2039 = vmatpush2.msra.mxu0 0.0
    %2040 = vmatprep.subr.mxu0 0.0
    %2041 = vmatpush2.msra.mxu0 0.0
    %2042 = vmatprep.subr.mxu0 0.0
    %2043 = vmatpush2.msra.mxu0 0.0
    %2044 = vmatprep.subr.mxu0 0.0
    %2045 = vmatpush2.msra.mxu0 0.0
    %2046 = vmatprep.subr.mxu0 0.0
    %2047 = vmatpush2.msra.mxu0 0.0
    %2048 = vmatprep.subr.mxu0 0.0
    %2049 = vmatpush2.msra.mxu0 0.0
    %2050 = vmatprep.mubr.f32.mxu0 0.0
    %v2051 = vand.u32 %v1450, 4294901760
    %2052 = vmatmul.mubr.f32.gmra.mxu0 %v2051
    %v2053 = vpop.f32.mrf.mxu0
    %v2054 = vadd.f32 %v1961, %v2053
    %v2055 = vpop.f32.mrf.mxu0
    %2056 = vmatprep.mubr.f32.mxu0 0.0
    %v2057 = vand.u32 %v1453, 4294901760
    %2058 = vmatmul.mubr.f32.gmra.mxu0 %v2057
    %v2059 = vpop.f32.mrf.mxu0
    %v2060 = vadd.f32 %v1967, %v2059
    %v2061 = vpop.f32.mrf.mxu0
    %2062 = vmatprep.mubr.f32.mxu0 0.0
    %v2063 = vand.u32 %v1456, 4294901760
    %2064 = vmatmul.mubr.f32.gmra.mxu0 %v2063
    %v2065 = vpop.f32.mrf.mxu0
    %v2066 = vadd.f32 %v1973, %v2065
    %v2067 = vpop.f32.mrf.mxu0
    %2068 = vmatprep.mubr.f32.mxu0 0.0
    %v2069 = vand.u32 %v1459, 4294901760
    %2070 = vmatmul.mubr.f32.gmra.mxu0 %v2069
    %v2071 = vpop.f32.mrf.mxu0
    %v2072 = vadd.f32 %v1979, %v2071
    %v2073 = vpop.f32.mrf.mxu0
    %2074 = vdwg.mxu0
    %v2075 = vld [vmem:[#allocation8] sm:$0xff]
    %v2076 = vld [vmem:[#allocation8 + $0x8] sm:$0xff]
    %v2077 = vld [vmem:[#allocation8 + $0x10] sm:$0xff]
    %v2078 = vld [vmem:[#allocation8 + $0x18] sm:$0xff]
    %v2080 = vsel %vm166, %v772, 0
    %v2083 = vsel %vm166, %v778, 0
    %v2086 = vsel %vm166, %v784, 0
    %v2089 = vsel %vm166, %v790, 0
    %v2092 = vsel %vm166, %v1413, 0
    %v2095 = vsel %vm166, %v1419, 0
    %v2098 = vsel %vm166, %v1425, 0
    %v2101 = vsel %vm166, %v1431, 0
    %2103 = vmatprep.subr.mxu0 0.0
    %2104 = vmatpush1.xpose.msra.mxu0 0.0
    %2105 = vmatprep.subr.mxu0 0.0
    %2106 = vmatpush1.xpose.msra.mxu0 0.0
    %2107 = vmatprep.subr.mxu0 0.0
    %2108 = vmatpush1.xpose.msra.mxu0 0.0
    %2109 = vmatprep.subr.mxu0 0.0
    %2110 = vmatpush1.xpose.msra.mxu0 0.0
    %2111 = vmatprep.subr.mxu0 0.0
    %2112 = vmatpush1.xpose.msra.mxu0 0.0
    %2113 = vmatprep.subr.mxu0 0.0
    %2114 = vmatpush1.xpose.msra.mxu0 0.0
    %2115 = vmatprep.subr.mxu0 0.0
    %2116 = vmatpush1.xpose.msra.mxu0 0.0
    %2117 = vmatprep.subr.mxu0 0.0
    %2118 = vmatpush1.xpose.msra.mxu0 0.0
    %2119 = vmatprep.subr.mxu0 0.0
    %2120 = vmatpush1.xpose.msra.mxu0 0.0
    %2121 = vmatprep.subr.mxu0 0.0
    %2122 = vmatpush1.xpose.msra.mxu0 0.0
    %2123 = vmatprep.subr.mxu0 0.0
    %2124 = vmatpush1.xpose.msra.mxu0 0.0
    %2125 = vmatprep.subr.mxu0 0.0
    %2126 = vmatpush1.xpose.msra.mxu0 0.0
    %2127 = vmatprep.subr.mxu0 0.0
    %v2128 = vand.u32 %v2101, 4294901760
    %2129 = vmatpush1.xpose.msra.mxu0 %v2128
    %2130 = vmatprep.subr.mxu0 0.0
    %v2131 = vand.u32 %v2098, 4294901760
    %2132 = vmatpush1.xpose.msra.mxu0 %v2131
    %2133 = vmatprep.subr.mxu0 0.0
    %v2134 = vand.u32 %v2095, 4294901760
    %2135 = vmatpush1.xpose.msra.mxu0 %v2134
    %2136 = vmatprep.subr.mxu0 0.0
    %v2137 = vand.u32 %v2092, 4294901760
    %2138 = vmatpush1.xpose.msra.mxu0 %v2137
    %2139 = vmatprep.subr.mxu0 0.0
    %2140 = vmatpush2.xpose.msra.mxu0 0.0
    %2141 = vmatprep.subr.mxu0 0.0
    %2142 = vmatpush2.xpose.msra.mxu0 0.0
    %2143 = vmatprep.subr.mxu0 0.0
    %2144 = vmatpush2.xpose.msra.mxu0 0.0
    %2145 = vmatprep.subr.mxu0 0.0
    %2146 = vmatpush2.xpose.msra.mxu0 0.0
    %2147 = vmatprep.subr.mxu0 0.0
    %2148 = vmatpush2.xpose.msra.mxu0 0.0
    %2149 = vmatprep.subr.mxu0 0.0
    %2150 = vmatpush2.xpose.msra.mxu0 0.0
    %2151 = vmatprep.subr.mxu0 0.0
    %2152 = vmatpush2.xpose.msra.mxu0 0.0
    %2153 = vmatprep.subr.mxu0 0.0
    %2154 = vmatpush2.xpose.msra.mxu0 0.0
    %2155 = vmatprep.subr.mxu0 0.0
    %2156 = vmatpush2.xpose.msra.mxu0 0.0
    %2157 = vmatprep.subr.mxu0 0.0
    %2158 = vmatpush2.xpose.msra.mxu0 0.0
    %2159 = vmatprep.subr.mxu0 0.0
    %2160 = vmatpush2.xpose.msra.mxu0 0.0
    %2161 = vmatprep.subr.mxu0 0.0
    %2162 = vmatpush2.xpose.msra.mxu0 0.0
    %2163 = vmatprep.subr.mxu0 0.0
    %2164 = vmatpush2.xpose.msra.mxu0 0.0
    %2165 = vmatprep.subr.mxu0 0.0
    %2166 = vmatpush2.xpose.msra.mxu0 0.0
    %2167 = vmatprep.subr.mxu0 0.0
    %2168 = vmatpush2.xpose.msra.mxu0 0.0
    %2169 = vmatprep.subr.mxu0 0.0
    %2170 = vmatpush2.xpose.msra.mxu0 0.0
    %2171 = vmatprep.mubr.f32.mxu0 0.0
    %v2172 = vand.u32 %v2080, 4294901760
    %v2173 = vsub.f32 %v2080, %v2172
    %v2174 = vand.u32 %v2173, 4294901760
    %v2175 = vsub.f32 %v2173, %v2174
    %v2176 = vand.u32 %v2175, 4294901760
    %2177 = vmatmul.mubr.f32.gmra.mxu0 %v2176
    %v2178 = vpop.f32.mrf.mxu0
    %v2179 = vadd.f32 %v2075, %v2178
    %v2180 = vpop.f32.mrf.mxu0
    %2181 = vmatprep.mubr.f32.mxu0 0.0
    %v2182 = vand.u32 %v2083, 4294901760
    %v2183 = vsub.f32 %v2083, %v2182
    %v2184 = vand.u32 %v2183, 4294901760
    %v2185 = vsub.f32 %v2183, %v2184
    %v2186 = vand.u32 %v2185, 4294901760
    %2187 = vmatmul.mubr.f32.gmra.mxu0 %v2186
    %v2188 = vpop.f32.mrf.mxu0
    %v2189 = vadd.f32 %v2076, %v2188
    %v2190 = vpop.f32.mrf.mxu0
    %2191 = vmatprep.mubr.f32.mxu0 0.0
    %v2192 = vand.u32 %v2086, 4294901760
    %v2193 = vsub.f32 %v2086, %v2192
    %v2194 = vand.u32 %v2193, 4294901760
    %v2195 = vsub.f32 %v2193, %v2194
    %v2196 = vand.u32 %v2195, 4294901760
    %2197 = vmatmul.mubr.f32.gmra.mxu0 %v2196
    %v2198 = vpop.f32.mrf.mxu0
    %v2199 = vadd.f32 %v2077, %v2198
    %v2200 = vpop.f32.mrf.mxu0
    %2201 = vmatprep.mubr.f32.mxu0 0.0
    %v2202 = vand.u32 %v2089, 4294901760
    %v2203 = vsub.f32 %v2089, %v2202
    %v2204 = vand.u32 %v2203, 4294901760
    %v2205 = vsub.f32 %v2203, %v2204
    %v2206 = vand.u32 %v2205, 4294901760
    %2207 = vmatmul.mubr.f32.gmra.mxu0 %v2206
    %v2208 = vpop.f32.mrf.mxu0
    %v2209 = vadd.f32 %v2078, %v2208
    %v2210 = vpop.f32.mrf.mxu0
    %2211 = vdwg.mxu0
    %2212 = vmatprep.subr.mxu0 0.0
    %2213 = vmatpush1.xpose.msra.mxu0 0.0
    %2214 = vmatprep.subr.mxu0 0.0
    %2215 = vmatpush1.xpose.msra.mxu0 0.0
    %2216 = vmatprep.subr.mxu0 0.0
    %2217 = vmatpush1.xpose.msra.mxu0 0.0
    %2218 = vmatprep.subr.mxu0 0.0
    %2219 = vmatpush1.xpose.msra.mxu0 0.0
    %2220 = vmatprep.subr.mxu0 0.0
    %2221 = vmatpush1.xpose.msra.mxu0 0.0
    %2222 = vmatprep.subr.mxu0 0.0
    %2223 = vmatpush1.xpose.msra.mxu0 0.0
    %2224 = vmatprep.subr.mxu0 0.0
    %2225 = vmatpush1.xpose.msra.mxu0 0.0
    %2226 = vmatprep.subr.mxu0 0.0
    %2227 = vmatpush1.xpose.msra.mxu0 0.0
    %2228 = vmatprep.subr.mxu0 0.0
    %2229 = vmatpush1.xpose.msra.mxu0 0.0
    %2230 = vmatprep.subr.mxu0 0.0
    %2231 = vmatpush1.xpose.msra.mxu0 0.0
    %2232 = vmatprep.subr.mxu0 0.0
    %2233 = vmatpush1.xpose.msra.mxu0 0.0
    %2234 = vmatprep.subr.mxu0 0.0
    %2235 = vmatpush1.xpose.msra.mxu0 0.0
    %2236 = vmatprep.subr.mxu0 0.0
    %v2237 = vand.u32 %v2101, 4294901760
    %v2238 = vsub.f32 %v2101, %v2237
    %v2239 = vand.u32 %v2238, 4294901760
    %v2240 = vsub.f32 %v2238, %v2239
    %v2241 = vand.u32 %v2240, 4294901760
    %2242 = vmatpush1.xpose.msra.mxu0 %v2241
    %2243 = vmatprep.subr.mxu0 0.0
    %v2244 = vand.u32 %v2098, 4294901760
    %v2245 = vsub.f32 %v2098, %v2244
    %v2246 = vand.u32 %v2245, 4294901760
    %v2247 = vsub.f32 %v2245, %v2246
    %v2248 = vand.u32 %v2247, 4294901760
    %2249 = vmatpush1.xpose.msra.mxu0 %v2248
    %2250 = vmatprep.subr.mxu0 0.0
    %v2251 = vand.u32 %v2095, 4294901760
    %v2252 = vsub.f32 %v2095, %v2251
    %v2253 = vand.u32 %v2252, 4294901760
    %v2254 = vsub.f32 %v2252, %v2253
    %v2255 = vand.u32 %v2254, 4294901760
    %2256 = vmatpush1.xpose.msra.mxu0 %v2255
    %2257 = vmatprep.subr.mxu0 0.0
    %v2258 = vand.u32 %v2092, 4294901760
    %v2259 = vsub.f32 %v2092, %v2258
    %v2260 = vand.u32 %v2259, 4294901760
    %v2261 = vsub.f32 %v2259, %v2260
    %v2262 = vand.u32 %v2261, 4294901760
    %2263 = vmatpush1.xpose.msra.mxu0 %v2262
    %2264 = vmatprep.subr.mxu0 0.0
    %2265 = vmatpush2.xpose.msra.mxu0 0.0
    %2266 = vmatprep.subr.mxu0 0.0
    %2267 = vmatpush2.xpose.msra.mxu0 0.0
    %2268 = vmatprep.subr.mxu0 0.0
    %2269 = vmatpush2.xpose.msra.mxu0 0.0
    %2270 = vmatprep.subr.mxu0 0.0
    %2271 = vmatpush2.xpose.msra.mxu0 0.0
    %2272 = vmatprep.subr.mxu0 0.0
    %2273 = vmatpush2.xpose.msra.mxu0 0.0
    %2274 = vmatprep.subr.mxu0 0.0
    %2275 = vmatpush2.xpose.msra.mxu0 0.0
    %2276 = vmatprep.subr.mxu0 0.0
    %2277 = vmatpush2.xpose.msra.mxu0 0.0
    %2278 = vmatprep.subr.mxu0 0.0
    %2279 = vmatpush2.xpose.msra.mxu0 0.0
    %2280 = vmatprep.subr.mxu0 0.0
    %2281 = vmatpush2.xpose.msra.mxu0 0.0
    %2282 = vmatprep.subr.mxu0 0.0
    %2283 = vmatpush2.xpose.msra.mxu0 0.0
    %2284 = vmatprep.subr.mxu0 0.0
    %2285 = vmatpush2.xpose.msra.mxu0 0.0
    %2286 = vmatprep.subr.mxu0 0.0
    %2287 = vmatpush2.xpose.msra.mxu0 0.0
    %2288 = vmatprep.subr.mxu0 0.0
    %2289 = vmatpush2.xpose.msra.mxu0 0.0
    %2290 = vmatprep.subr.mxu0 0.0
    %2291 = vmatpush2.xpose.msra.mxu0 0.0
    %2292 = vmatprep.subr.mxu0 0.0
    %2293 = vmatpush2.xpose.msra.mxu0 0.0
    %2294 = vmatprep.subr.mxu0 0.0
    %2295 = vmatpush2.xpose.msra.mxu0 0.0
    %2296 = vmatprep.mubr.f32.mxu0 0.0
    %v2297 = vand.u32 %v2080, 4294901760
    %2298 = vmatmul.mubr.f32.gmra.mxu0 %v2297
    %v2299 = vpop.f32.mrf.mxu0
    %v2300 = vadd.f32 %v2179, %v2299
    %v2301 = vpop.f32.mrf.mxu0
    %2302 = vmatprep.mubr.f32.mxu0 0.0
    %v2303 = vand.u32 %v2083, 4294901760
    %2304 = vmatmul.mubr.f32.gmra.mxu0 %v2303
    %v2305 = vpop.f32.mrf.mxu0
    %v2306 = vadd.f32 %v2189, %v2305
    %v2307 = vpop.f32.mrf.mxu0
    %2308 = vmatprep.mubr.f32.mxu0 0.0
    %v2309 = vand.u32 %v2086, 4294901760
    %2310 = vmatmul.mubr.f32.gmra.mxu0 %v2309
    %v2311 = vpop.f32.mrf.mxu0
    %v2312 = vadd.f32 %v2199, %v2311
    %v2313 = vpop.f32.mrf.mxu0
    %2314 = vmatprep.mubr.f32.mxu0 0.0
    %v2315 = vand.u32 %v2089, 4294901760
    %2316 = vmatmul.mubr.f32.gmra.mxu0 %v2315
    %v2317 = vpop.f32.mrf.mxu0
    %v2318 = vadd.f32 %v2209, %v2317
    %v2319 = vpop.f32.mrf.mxu0
    %2320 = vdwg.mxu0
    %2321 = vmatprep.subr.mxu0 0.0
    %2322 = vmatpush1.xpose.msra.mxu0 0.0
    %2323 = vmatprep.subr.mxu0 0.0
    %2324 = vmatpush1.xpose.msra.mxu0 0.0
    %2325 = vmatprep.subr.mxu0 0.0
    %2326 = vmatpush1.xpose.msra.mxu0 0.0
    %2327 = vmatprep.subr.mxu0 0.0
    %2328 = vmatpush1.xpose.msra.mxu0 0.0
    %2329 = vmatprep.subr.mxu0 0.0
    %2330 = vmatpush1.xpose.msra.mxu0 0.0
    %2331 = vmatprep.subr.mxu0 0.0
    %2332 = vmatpush1.xpose.msra.mxu0 0.0
    %2333 = vmatprep.subr.mxu0 0.0
    %2334 = vmatpush1.xpose.msra.mxu0 0.0
    %2335 = vmatprep.subr.mxu0 0.0
    %2336 = vmatpush1.xpose.msra.mxu0 0.0
    %2337 = vmatprep.subr.mxu0 0.0
    %2338 = vmatpush1.xpose.msra.mxu0 0.0
    %2339 = vmatprep.subr.mxu0 0.0
    %2340 = vmatpush1.xpose.msra.mxu0 0.0
    %2341 = vmatprep.subr.mxu0 0.0
    %2342 = vmatpush1.xpose.msra.mxu0 0.0
    %2343 = vmatprep.subr.mxu0 0.0
    %2344 = vmatpush1.xpose.msra.mxu0 0.0
    %2345 = vmatprep.subr.mxu0 0.0
    %v2346 = vand.u32 %v2101, 4294901760
    %v2347 = vsub.f32 %v2101, %v2346
    %2348 = vmatpush1.xpose.msra.mxu0 %v2347
    %2349 = vmatprep.subr.mxu0 0.0
    %v2350 = vand.u32 %v2098, 4294901760
    %v2351 = vsub.f32 %v2098, %v2350
    %2352 = vmatpush1.xpose.msra.mxu0 %v2351
    %2353 = vmatprep.subr.mxu0 0.0
    %v2354 = vand.u32 %v2095, 4294901760
    %v2355 = vsub.f32 %v2095, %v2354
    %2356 = vmatpush1.xpose.msra.mxu0 %v2355
    %2357 = vmatprep.subr.mxu0 0.0
    %v2358 = vand.u32 %v2092, 4294901760
    %v2359 = vsub.f32 %v2092, %v2358
    %2360 = vmatpush1.xpose.msra.mxu0 %v2359
    %2361 = vmatprep.subr.mxu0 0.0
    %2362 = vmatpush2.xpose.msra.mxu0 0.0
    %2363 = vmatprep.subr.mxu0 0.0
    %2364 = vmatpush2.xpose.msra.mxu0 0.0
    %2365 = vmatprep.subr.mxu0 0.0
    %2366 = vmatpush2.xpose.msra.mxu0 0.0
    %2367 = vmatprep.subr.mxu0 0.0
    %2368 = vmatpush2.xpose.msra.mxu0 0.0
    %2369 = vmatprep.subr.mxu0 0.0
    %2370 = vmatpush2.xpose.msra.mxu0 0.0
    %2371 = vmatprep.subr.mxu0 0.0
    %2372 = vmatpush2.xpose.msra.mxu0 0.0
    %2373 = vmatprep.subr.mxu0 0.0
    %2374 = vmatpush2.xpose.msra.mxu0 0.0
    %2375 = vmatprep.subr.mxu0 0.0
    %2376 = vmatpush2.xpose.msra.mxu0 0.0
    %2377 = vmatprep.subr.mxu0 0.0
    %2378 = vmatpush2.xpose.msra.mxu0 0.0
    %2379 = vmatprep.subr.mxu0 0.0
    %2380 = vmatpush2.xpose.msra.mxu0 0.0
    %2381 = vmatprep.subr.mxu0 0.0
    %2382 = vmatpush2.xpose.msra.mxu0 0.0
    %2383 = vmatprep.subr.mxu0 0.0
    %2384 = vmatpush2.xpose.msra.mxu0 0.0
    %2385 = vmatprep.subr.mxu0 0.0
    %2386 = vmatpush2.xpose.msra.mxu0 0.0
    %2387 = vmatprep.subr.mxu0 0.0
    %2388 = vmatpush2.xpose.msra.mxu0 0.0
    %2389 = vmatprep.subr.mxu0 0.0
    %2390 = vmatpush2.xpose.msra.mxu0 0.0
    %2391 = vmatprep.subr.mxu0 0.0
    %2392 = vmatpush2.xpose.msra.mxu0 0.0
    %2393 = vmatprep.mubr.f32.mxu0 0.0
    %v2394 = vand.u32 %v2080, 4294901760
    %v2395 = vsub.f32 %v2080, %v2394
    %2396 = vmatmul.mubr.f32.gmra.mxu0 %v2395
    %v2397 = vpop.f32.mrf.mxu0
    %v2398 = vadd.f32 %v2300, %v2397
    %v2399 = vpop.f32.mrf.mxu0
    %2400 = vmatprep.mubr.f32.mxu0 0.0
    %v2401 = vand.u32 %v2083, 4294901760
    %v2402 = vsub.f32 %v2083, %v2401
    %2403 = vmatmul.mubr.f32.gmra.mxu0 %v2402
    %v2404 = vpop.f32.mrf.mxu0
    %v2405 = vadd.f32 %v2306, %v2404
    %v2406 = vpop.f32.mrf.mxu0
    %2407 = vmatprep.mubr.f32.mxu0 0.0
    %v2408 = vand.u32 %v2086, 4294901760
    %v2409 = vsub.f32 %v2086, %v2408
    %2410 = vmatmul.mubr.f32.gmra.mxu0 %v2409
    %v2411 = vpop.f32.mrf.mxu0
    %v2412 = vadd.f32 %v2312, %v2411
    %v2413 = vpop.f32.mrf.mxu0
    %2414 = vmatprep.mubr.f32.mxu0 0.0
    %v2415 = vand.u32 %v2089, 4294901760
    %v2416 = vsub.f32 %v2089, %v2415
    %2417 = vmatmul.mubr.f32.gmra.mxu0 %v2416
    %v2418 = vpop.f32.mrf.mxu0
    %v2419 = vadd.f32 %v2318, %v2418
    %v2420 = vpop.f32.mrf.mxu0
    %2421 = vdwg.mxu0
    %2422 = vmatprep.subr.mxu0 0.0
    %2423 = vmatpush1.xpose.msra.mxu0 0.0
    %2424 = vmatprep.subr.mxu0 0.0
    %2425 = vmatpush1.xpose.msra.mxu0 0.0
    %2426 = vmatprep.subr.mxu0 0.0
    %2427 = vmatpush1.xpose.msra.mxu0 0.0
    %2428 = vmatprep.subr.mxu0 0.0
    %2429 = vmatpush1.xpose.msra.mxu0 0.0
    %2430 = vmatprep.subr.mxu0 0.0
    %2431 = vmatpush1.xpose.msra.mxu0 0.0
    %2432 = vmatprep.subr.mxu0 0.0
    %2433 = vmatpush1.xpose.msra.mxu0 0.0
    %2434 = vmatprep.subr.mxu0 0.0
    %2435 = vmatpush1.xpose.msra.mxu0 0.0
    %2436 = vmatprep.subr.mxu0 0.0
    %2437 = vmatpush1.xpose.msra.mxu0 0.0
    %2438 = vmatprep.subr.mxu0 0.0
    %2439 = vmatpush1.xpose.msra.mxu0 0.0
    %2440 = vmatprep.subr.mxu0 0.0
    %2441 = vmatpush1.xpose.msra.mxu0 0.0
    %2442 = vmatprep.subr.mxu0 0.0
    %2443 = vmatpush1.xpose.msra.mxu0 0.0
    %2444 = vmatprep.subr.mxu0 0.0
    %2445 = vmatpush1.xpose.msra.mxu0 0.0
    %2446 = vmatprep.subr.mxu0 0.0
    %v2447 = vand.u32 %v2101, 4294901760
    %2448 = vmatpush1.xpose.msra.mxu0 %v2447
    %2449 = vmatprep.subr.mxu0 0.0
    %v2450 = vand.u32 %v2098, 4294901760
    %2451 = vmatpush1.xpose.msra.mxu0 %v2450
    %2452 = vmatprep.subr.mxu0 0.0
    %v2453 = vand.u32 %v2095, 4294901760
    %2454 = vmatpush1.xpose.msra.mxu0 %v2453
    %2455 = vmatprep.subr.mxu0 0.0
    %v2456 = vand.u32 %v2092, 4294901760
    %2457 = vmatpush1.xpose.msra.mxu0 %v2456
    %2458 = vmatprep.subr.mxu0 0.0
    %2459 = vmatpush2.xpose.msra.mxu0 0.0
    %2460 = vmatprep.subr.mxu0 0.0
    %2461 = vmatpush2.xpose.msra.mxu0 0.0
    %2462 = vmatprep.subr.mxu0 0.0
    %2463 = vmatpush2.xpose.msra.mxu0 0.0
    %2464 = vmatprep.subr.mxu0 0.0
    %2465 = vmatpush2.xpose.msra.mxu0 0.0
    %2466 = vmatprep.subr.mxu0 0.0
    %2467 = vmatpush2.xpose.msra.mxu0 0.0
    %2468 = vmatprep.subr.mxu0 0.0
    %2469 = vmatpush2.xpose.msra.mxu0 0.0
    %2470 = vmatprep.subr.mxu0 0.0
    %2471 = vmatpush2.xpose.msra.mxu0 0.0
    %2472 = vmatprep.subr.mxu0 0.0
    %2473 = vmatpush2.xpose.msra.mxu0 0.0
    %2474 = vmatprep.subr.mxu0 0.0
    %2475 = vmatpush2.xpose.msra.mxu0 0.0
    %2476 = vmatprep.subr.mxu0 0.0
    %2477 = vmatpush2.xpose.msra.mxu0 0.0
    %2478 = vmatprep.subr.mxu0 0.0
    %2479 = vmatpush2.xpose.msra.mxu0 0.0
    %2480 = vmatprep.subr.mxu0 0.0
    %2481 = vmatpush2.xpose.msra.mxu0 0.0
    %2482 = vmatprep.subr.mxu0 0.0
    %2483 = vmatpush2.xpose.msra.mxu0 0.0
    %2484 = vmatprep.subr.mxu0 0.0
    %2485 = vmatpush2.xpose.msra.mxu0 0.0
    %2486 = vmatprep.subr.mxu0 0.0
    %2487 = vmatpush2.xpose.msra.mxu0 0.0
    %2488 = vmatprep.subr.mxu0 0.0
    %2489 = vmatpush2.xpose.msra.mxu0 0.0
    %2490 = vmatprep.mubr.f32.mxu0 0.0
    %v2491 = vand.u32 %v2080, 4294901760
    %v2492 = vsub.f32 %v2080, %v2491
    %v2493 = vand.u32 %v2492, 4294901760
    %2494 = vmatmul.mubr.f32.gmra.mxu0 %v2493
    %v2495 = vpop.f32.mrf.mxu0
    %v2496 = vadd.f32 %v2398, %v2495
    %v2497 = vpop.f32.mrf.mxu0
    %2498 = vmatprep.mubr.f32.mxu0 0.0
    %v2499 = vand.u32 %v2083, 4294901760
    %v2500 = vsub.f32 %v2083, %v2499
    %v2501 = vand.u32 %v2500, 4294901760
    %2502 = vmatmul.mubr.f32.gmra.mxu0 %v2501
    %v2503 = vpop.f32.mrf.mxu0
    %v2504 = vadd.f32 %v2405, %v2503
    %v2505 = vpop.f32.mrf.mxu0
    %2506 = vmatprep.mubr.f32.mxu0 0.0
    %v2507 = vand.u32 %v2086, 4294901760
    %v2508 = vsub.f32 %v2086, %v2507
    %v2509 = vand.u32 %v2508, 4294901760
    %2510 = vmatmul.mubr.f32.gmra.mxu0 %v2509
    %v2511 = vpop.f32.mrf.mxu0
    %v2512 = vadd.f32 %v2412, %v2511
    %v2513 = vpop.f32.mrf.mxu0
    %2514 = vmatprep.mubr.f32.mxu0 0.0
    %v2515 = vand.u32 %v2089, 4294901760
    %v2516 = vsub.f32 %v2089, %v2515
    %v2517 = vand.u32 %v2516, 4294901760
    %2518 = vmatmul.mubr.f32.gmra.mxu0 %v2517
    %v2519 = vpop.f32.mrf.mxu0
    %v2520 = vadd.f32 %v2419, %v2519
    %v2521 = vpop.f32.mrf.mxu0
    %2522 = vdwg.mxu0
    %2523 = vmatprep.subr.mxu0 0.0
    %2524 = vmatpush1.xpose.msra.mxu0 0.0
    %2525 = vmatprep.subr.mxu0 0.0
    %2526 = vmatpush1.xpose.msra.mxu0 0.0
    %2527 = vmatprep.subr.mxu0 0.0
    %2528 = vmatpush1.xpose.msra.mxu0 0.0
    %2529 = vmatprep.subr.mxu0 0.0
    %2530 = vmatpush1.xpose.msra.mxu0 0.0
    %2531 = vmatprep.subr.mxu0 0.0
    %2532 = vmatpush1.xpose.msra.mxu0 0.0
    %2533 = vmatprep.subr.mxu0 0.0
    %2534 = vmatpush1.xpose.msra.mxu0 0.0
    %2535 = vmatprep.subr.mxu0 0.0
    %2536 = vmatpush1.xpose.msra.mxu0 0.0
    %2537 = vmatprep.subr.mxu0 0.0
    %2538 = vmatpush1.xpose.msra.mxu0 0.0
    %2539 = vmatprep.subr.mxu0 0.0
    %2540 = vmatpush1.xpose.msra.mxu0 0.0
    %2541 = vmatprep.subr.mxu0 0.0
    %2542 = vmatpush1.xpose.msra.mxu0 0.0
    %2543 = vmatprep.subr.mxu0 0.0
    %2544 = vmatpush1.xpose.msra.mxu0 0.0
    %2545 = vmatprep.subr.mxu0 0.0
    %2546 = vmatpush1.xpose.msra.mxu0 0.0
    %2547 = vmatprep.subr.mxu0 0.0
    %v2548 = vand.u32 %v2101, 4294901760
    %v2549 = vsub.f32 %v2101, %v2548
    %v2550 = vand.u32 %v2549, 4294901760
    %2551 = vmatpush1.xpose.msra.mxu0 %v2550
    %2552 = vmatprep.subr.mxu0 0.0
    %v2553 = vand.u32 %v2098, 4294901760
    %v2554 = vsub.f32 %v2098, %v2553
    %v2555 = vand.u32 %v2554, 4294901760
    %2556 = vmatpush1.xpose.msra.mxu0 %v2555
    %2557 = vmatprep.subr.mxu0 0.0
    %v2558 = vand.u32 %v2095, 4294901760
    %v2559 = vsub.f32 %v2095, %v2558
    %v2560 = vand.u32 %v2559, 4294901760
    %2561 = vmatpush1.xpose.msra.mxu0 %v2560
    %2562 = vmatprep.subr.mxu0 0.0
    %v2563 = vand.u32 %v2092, 4294901760
    %v2564 = vsub.f32 %v2092, %v2563
    %v2565 = vand.u32 %v2564, 4294901760
    %2566 = vmatpush1.xpose.msra.mxu0 %v2565
    %2567 = vmatprep.subr.mxu0 0.0
    %2568 = vmatpush2.xpose.msra.mxu0 0.0
    %2569 = vmatprep.subr.mxu0 0.0
    %2570 = vmatpush2.xpose.msra.mxu0 0.0
    %2571 = vmatprep.subr.mxu0 0.0
    %2572 = vmatpush2.xpose.msra.mxu0 0.0
    %2573 = vmatprep.subr.mxu0 0.0
    %2574 = vmatpush2.xpose.msra.mxu0 0.0
    %2575 = vmatprep.subr.mxu0 0.0
    %2576 = vmatpush2.xpose.msra.mxu0 0.0
    %2577 = vmatprep.subr.mxu0 0.0
    %2578 = vmatpush2.xpose.msra.mxu0 0.0
    %2579 = vmatprep.subr.mxu0 0.0
    %2580 = vmatpush2.xpose.msra.mxu0 0.0
    %2581 = vmatprep.subr.mxu0 0.0
    %2582 = vmatpush2.xpose.msra.mxu0 0.0
    %2583 = vmatprep.subr.mxu0 0.0
    %2584 = vmatpush2.xpose.msra.mxu0 0.0
    %2585 = vmatprep.subr.mxu0 0.0
    %2586 = vmatpush2.xpose.msra.mxu0 0.0
    %2587 = vmatprep.subr.mxu0 0.0
    %2588 = vmatpush2.xpose.msra.mxu0 0.0
    %2589 = vmatprep.subr.mxu0 0.0
    %2590 = vmatpush2.xpose.msra.mxu0 0.0
    %2591 = vmatprep.subr.mxu0 0.0
    %2592 = vmatpush2.xpose.msra.mxu0 0.0
    %2593 = vmatprep.subr.mxu0 0.0
    %2594 = vmatpush2.xpose.msra.mxu0 0.0
    %2595 = vmatprep.subr.mxu0 0.0
    %2596 = vmatpush2.xpose.msra.mxu0 0.0
    %2597 = vmatprep.subr.mxu0 0.0
    %2598 = vmatpush2.xpose.msra.mxu0 0.0
    %2599 = vmatprep.mubr.f32.mxu0 0.0
    %v2600 = vand.u32 %v2080, 4294901760
    %2601 = vmatmul.mubr.f32.gmra.mxu0 %v2600
    %v2602 = vpop.f32.mrf.mxu0
    %v2603 = vadd.f32 %v2496, %v2602
    %v2604 = vpop.f32.mrf.mxu0
    %2605 = vmatprep.mubr.f32.mxu0 0.0
    %v2606 = vand.u32 %v2083, 4294901760
    %2607 = vmatmul.mubr.f32.gmra.mxu0 %v2606
    %v2608 = vpop.f32.mrf.mxu0
    %v2609 = vadd.f32 %v2504, %v2608
    %v2610 = vpop.f32.mrf.mxu0
    %2611 = vmatprep.mubr.f32.mxu0 0.0
    %v2612 = vand.u32 %v2086, 4294901760
    %2613 = vmatmul.mubr.f32.gmra.mxu0 %v2612
    %v2614 = vpop.f32.mrf.mxu0
    %v2615 = vadd.f32 %v2512, %v2614
    %v2616 = vpop.f32.mrf.mxu0
    %2617 = vmatprep.mubr.f32.mxu0 0.0
    %v2618 = vand.u32 %v2089, 4294901760
    %2619 = vmatmul.mubr.f32.gmra.mxu0 %v2618
    %v2620 = vpop.f32.mrf.mxu0
    %v2621 = vadd.f32 %v2520, %v2620
    %v2622 = vpop.f32.mrf.mxu0
    %2623 = vdwg.mxu0
    %2624 = vmatprep.subr.mxu0 0.0
    %2625 = vmatpush1.xpose.msra.mxu0 0.0
    %2626 = vmatprep.subr.mxu0 0.0
    %2627 = vmatpush1.xpose.msra.mxu0 0.0
    %2628 = vmatprep.subr.mxu0 0.0
    %2629 = vmatpush1.xpose.msra.mxu0 0.0
    %2630 = vmatprep.subr.mxu0 0.0
    %2631 = vmatpush1.xpose.msra.mxu0 0.0
    %2632 = vmatprep.subr.mxu0 0.0
    %2633 = vmatpush1.xpose.msra.mxu0 0.0
    %2634 = vmatprep.subr.mxu0 0.0
    %2635 = vmatpush1.xpose.msra.mxu0 0.0
    %2636 = vmatprep.subr.mxu0 0.0
    %2637 = vmatpush1.xpose.msra.mxu0 0.0
    %2638 = vmatprep.subr.mxu0 0.0
    %2639 = vmatpush1.xpose.msra.mxu0 0.0
    %2640 = vmatprep.subr.mxu0 0.0
    %2641 = vmatpush1.xpose.msra.mxu0 0.0
    %2642 = vmatprep.subr.mxu0 0.0
    %2643 = vmatpush1.xpose.msra.mxu0 0.0
    %2644 = vmatprep.subr.mxu0 0.0
    %2645 = vmatpush1.xpose.msra.mxu0 0.0
    %2646 = vmatprep.subr.mxu0 0.0
    %2647 = vmatpush1.xpose.msra.mxu0 0.0
    %2648 = vmatprep.subr.mxu0 0.0
    %v2649 = vand.u32 %v2101, 4294901760
    %2650 = vmatpush1.xpose.msra.mxu0 %v2649
    %2651 = vmatprep.subr.mxu0 0.0
    %v2652 = vand.u32 %v2098, 4294901760
    %2653 = vmatpush1.xpose.msra.mxu0 %v2652
    %2654 = vmatprep.subr.mxu0 0.0
    %v2655 = vand.u32 %v2095, 4294901760
    %2656 = vmatpush1.xpose.msra.mxu0 %v2655
    %2657 = vmatprep.subr.mxu0 0.0
    %v2658 = vand.u32 %v2092, 4294901760
    %2659 = vmatpush1.xpose.msra.mxu0 %v2658
    %2660 = vmatprep.subr.mxu0 0.0
    %2661 = vmatpush2.xpose.msra.mxu0 0.0
    %2662 = vmatprep.subr.mxu0 0.0
    %2663 = vmatpush2.xpose.msra.mxu0 0.0
    %2664 = vmatprep.subr.mxu0 0.0
    %2665 = vmatpush2.xpose.msra.mxu0 0.0
    %2666 = vmatprep.subr.mxu0 0.0
    %2667 = vmatpush2.xpose.msra.mxu0 0.0
    %2668 = vmatprep.subr.mxu0 0.0
    %2669 = vmatpush2.xpose.msra.mxu0 0.0
    %2670 = vmatprep.subr.mxu0 0.0
    %2671 = vmatpush2.xpose.msra.mxu0 0.0
    %2672 = vmatprep.subr.mxu0 0.0
    %2673 = vmatpush2.xpose.msra.mxu0 0.0
    %2674 = vmatprep.subr.mxu0 0.0
    %2675 = vmatpush2.xpose.msra.mxu0 0.0
    %2676 = vmatprep.subr.mxu0 0.0
    %2677 = vmatpush2.xpose.msra.mxu0 0.0
    %2678 = vmatprep.subr.mxu0 0.0
    %2679 = vmatpush2.xpose.msra.mxu0 0.0
    %2680 = vmatprep.subr.mxu0 0.0
    %2681 = vmatpush2.xpose.msra.mxu0 0.0
    %2682 = vmatprep.subr.mxu0 0.0
    %2683 = vmatpush2.xpose.msra.mxu0 0.0
    %2684 = vmatprep.subr.mxu0 0.0
    %2685 = vmatpush2.xpose.msra.mxu0 0.0
    %2686 = vmatprep.subr.mxu0 0.0
    %2687 = vmatpush2.xpose.msra.mxu0 0.0
    %2688 = vmatprep.subr.mxu0 0.0
    %2689 = vmatpush2.xpose.msra.mxu0 0.0
    %2690 = vmatprep.subr.mxu0 0.0
    %2691 = vmatpush2.xpose.msra.mxu0 0.0
    %2692 = vmatprep.mubr.f32.mxu0 0.0
    %v2693 = vand.u32 %v2080, 4294901760
    %2694 = vmatmul.mubr.f32.gmra.mxu0 %v2693
    %v2695 = vpop.f32.mrf.mxu0
    %v2696 = vadd.f32 %v2603, %v2695
    %v2697 = vpop.f32.mrf.mxu0
    %2698 = vmatprep.mubr.f32.mxu0 0.0
    %v2699 = vand.u32 %v2083, 4294901760
    %2700 = vmatmul.mubr.f32.gmra.mxu0 %v2699
    %v2701 = vpop.f32.mrf.mxu0
    %v2702 = vadd.f32 %v2609, %v2701
    %v2703 = vpop.f32.mrf.mxu0
    %2704 = vmatprep.mubr.f32.mxu0 0.0
    %v2705 = vand.u32 %v2086, 4294901760
    %2706 = vmatmul.mubr.f32.gmra.mxu0 %v2705
    %v2707 = vpop.f32.mrf.mxu0
    %v2708 = vadd.f32 %v2615, %v2707
    %v2709 = vpop.f32.mrf.mxu0
    %2710 = vmatprep.mubr.f32.mxu0 0.0
    %v2711 = vand.u32 %v2089, 4294901760
    %2712 = vmatmul.mubr.f32.gmra.mxu0 %v2711
    %v2713 = vpop.f32.mrf.mxu0
    %v2714 = vadd.f32 %v2621, %v2713
    %v2715 = vpop.f32.mrf.mxu0
    %2716 = vdwg.mxu0
    %v2717 = vsel %vm166, %v2696, -inf
    %2718 = vmax.xlane.f32.xlu0 %v2717
    %v2719 = vpop.xlane.xlu0 %2718
    %v2720 = vsel %vm166, %v2702, -inf
    %2721 = vmax.xlane.f32.xlu0 %v2720
    %v2722 = vpop.xlane.xlu0 %2721
    %v2723 = vsel %vm166, %v2708, -inf
    %2724 = vmax.xlane.f32.xlu0 %v2723
    %v2725 = vpop.xlane.xlu0 %2724
    %v2726 = vsel %vm166, %v2714, -inf
    %2727 = vmax.xlane.f32.xlu0 %v2726
    %v2728 = vpop.xlane.xlu0 %2727
    %v2729 = vsub.f32 %v2696, %v2719
    %v2730 = vsub.f32 %v2702, %v2722
    %v2731 = vsub.f32 %v2708, %v2725
    %v2732 = vsub.f32 %v2714, %v2728
    %v2733 = vmul.f32 %v2729, 1.442695
    %v2734 = vpow.pop %v2733
    %v2735 = vmul.f32 %v2730, 1.442695
    %v2736 = vpow.pop %v2735
    %v2737 = vmul.f32 %v2731, 1.442695
    %v2738 = vpow.pop %v2737
    %v2739 = vmul.f32 %v2732, 1.442695
    %v2740 = vpow.pop %v2739
    %v2741 = vsel %vm166, %v2734, 0.0
    %2742 = vadd.xlane.f32.xlu0 %v2741
    %v2743 = vpop.xlane.xlu0 %2742
    %v2744 = vsel %vm166, %v2736, 0.0
    %2745 = vadd.xlane.f32.xlu0 %v2744
    %v2746 = vpop.xlane.xlu0 %2745
    %v2747 = vsel %vm166, %v2738, 0.0
    %2748 = vadd.xlane.f32.xlu0 %v2747
    %v2749 = vpop.xlane.xlu0 %2748
    %v2750 = vsel %vm166, %v2740, 0.0
    %2751 = vadd.xlane.f32.xlu0 %v2750
    %v2752 = vpop.xlane.xlu0 %2751
    %v2753 = vrcp.pop %v2743
    %v2754 = vmul.f32 %v2734, %v2753
    %v2755 = vrcp.pop %v2746
    %v2756 = vmul.f32 %v2736, %v2755
    %v2757 = vrcp.pop %v2749
    %v2758 = vmul.f32 %v2738, %v2757
    %v2759 = vrcp.pop %v2752
    %v2760 = vmul.f32 %v2740, %v2759
    %v2762 = vsel %vm166, %v2754, 0
    %v2765 = vsel %vm166, %v2756, 0
    %v2768 = vsel %vm166, %v2758, 0
    %v2771 = vsel %vm166, %v2760, 0
    %2773 = vmatprep.subr.mxu0 0.0
    %2774 = vmatpush1.msra.mxu0 0.0
    %2775 = vmatprep.subr.mxu0 0.0
    %2776 = vmatpush1.msra.mxu0 0.0
    %2777 = vmatprep.subr.mxu0 0.0
    %2778 = vmatpush1.msra.mxu0 0.0
    %2779 = vmatprep.subr.mxu0 0.0
    %2780 = vmatpush1.msra.mxu0 0.0
    %2781 = vmatprep.subr.mxu0 0.0
    %2782 = vmatpush1.msra.mxu0 0.0
    %2783 = vmatprep.subr.mxu0 0.0
    %2784 = vmatpush1.msra.mxu0 0.0
    %2785 = vmatprep.subr.mxu0 0.0
    %2786 = vmatpush1.msra.mxu0 0.0
    %2787 = vmatprep.subr.mxu0 0.0
    %2788 = vmatpush1.msra.mxu0 0.0
    %2789 = vmatprep.subr.mxu0 0.0
    %2790 = vmatpush1.msra.mxu0 0.0
    %2791 = vmatprep.subr.mxu0 0.0
    %2792 = vmatpush1.msra.mxu0 0.0
    %2793 = vmatprep.subr.mxu0 0.0
    %2794 = vmatpush1.msra.mxu0 0.0
    %2795 = vmatprep.subr.mxu0 0.0
    %2796 = vmatpush1.msra.mxu0 0.0
    %2797 = vmatprep.subr.mxu0 0.0
    %v2798 = vand.u32 %v2072, 4294901760
    %2799 = vmatpush1.msra.mxu0 %v2798
    %2800 = vmatprep.subr.mxu0 0.0
    %v2801 = vand.u32 %v2066, 4294901760
    %2802 = vmatpush1.msra.mxu0 %v2801
    %2803 = vmatprep.subr.mxu0 0.0
    %v2804 = vand.u32 %v2060, 4294901760
    %2805 = vmatpush1.msra.mxu0 %v2804
    %2806 = vmatprep.subr.mxu0 0.0
    %v2807 = vand.u32 %v2054, 4294901760
    %2808 = vmatpush1.msra.mxu0 %v2807
    %2809 = vmatprep.subr.mxu0 0.0
    %2810 = vmatpush2.msra.mxu0 0.0
    %2811 = vmatprep.subr.mxu0 0.0
    %2812 = vmatpush2.msra.mxu0 0.0
    %2813 = vmatprep.subr.mxu0 0.0
    %2814 = vmatpush2.msra.mxu0 0.0
    %2815 = vmatprep.subr.mxu0 0.0
    %2816 = vmatpush2.msra.mxu0 0.0
    %2817 = vmatprep.subr.mxu0 0.0
    %2818 = vmatpush2.msra.mxu0 0.0
    %2819 = vmatprep.subr.mxu0 0.0
    %2820 = vmatpush2.msra.mxu0 0.0
    %2821 = vmatprep.subr.mxu0 0.0
    %2822 = vmatpush2.msra.mxu0 0.0
    %2823 = vmatprep.subr.mxu0 0.0
    %2824 = vmatpush2.msra.mxu0 0.0
    %2825 = vmatprep.subr.mxu0 0.0
    %2826 = vmatpush2.msra.mxu0 0.0
    %2827 = vmatprep.subr.mxu0 0.0
    %2828 = vmatpush2.msra.mxu0 0.0
    %2829 = vmatprep.subr.mxu0 0.0
    %2830 = vmatpush2.msra.mxu0 0.0
    %2831 = vmatprep.subr.mxu0 0.0
    %2832 = vmatpush2.msra.mxu0 0.0
    %2833 = vmatprep.subr.mxu0 0.0
    %2834 = vmatpush2.msra.mxu0 0.0
    %2835 = vmatprep.subr.mxu0 0.0
    %2836 = vmatpush2.msra.mxu0 0.0
    %2837 = vmatprep.subr.mxu0 0.0
    %2838 = vmatpush2.msra.mxu0 0.0
    %2839 = vmatprep.subr.mxu0 0.0
    %2840 = vmatpush2.msra.mxu0 0.0
    %2841 = vmatprep.mubr.f32.mxu0 0.0
    %v2842 = vand.u32 %v2762, 4294901760
    %v2843 = vsub.f32 %v2762, %v2842
    %v2844 = vand.u32 %v2843, 4294901760
    %v2845 = vsub.f32 %v2843, %v2844
    %v2846 = vand.u32 %v2845, 4294901760
    %2847 = vmatmul.mubr.f32.gmra.mxu0 %v2846
    %v2848 = vpop.f32.mrf.mxu0
    %v2849 = vadd.f32 0.0, %v2848
    %v2850 = vpop.f32.mrf.mxu0
    %2851 = vmatprep.mubr.f32.mxu0 0.0
    %v2852 = vand.u32 %v2765, 4294901760
    %v2853 = vsub.f32 %v2765, %v2852
    %v2854 = vand.u32 %v2853, 4294901760
    %v2855 = vsub.f32 %v2853, %v2854
    %v2856 = vand.u32 %v2855, 4294901760
    %2857 = vmatmul.mubr.f32.gmra.mxu0 %v2856
    %v2858 = vpop.f32.mrf.mxu0
    %v2859 = vadd.f32 0.0, %v2858
    %v2860 = vpop.f32.mrf.mxu0
    %2861 = vmatprep.mubr.f32.mxu0 0.0
    %v2862 = vand.u32 %v2768, 4294901760
    %v2863 = vsub.f32 %v2768, %v2862
    %v2864 = vand.u32 %v2863, 4294901760
    %v2865 = vsub.f32 %v2863, %v2864
    %v2866 = vand.u32 %v2865, 4294901760
    %2867 = vmatmul.mubr.f32.gmra.mxu0 %v2866
    %v2868 = vpop.f32.mrf.mxu0
    %v2869 = vadd.f32 0.0, %v2868
    %v2870 = vpop.f32.mrf.mxu0
    %2871 = vmatprep.mubr.f32.mxu0 0.0
    %v2872 = vand.u32 %v2771, 4294901760
    %v2873 = vsub.f32 %v2771, %v2872
    %v2874 = vand.u32 %v2873, 4294901760
    %v2875 = vsub.f32 %v2873, %v2874
    %v2876 = vand.u32 %v2875, 4294901760
    %2877 = vmatmul.mubr.f32.gmra.mxu0 %v2876
    %v2878 = vpop.f32.mrf.mxu0
    %v2879 = vadd.f32 0.0, %v2878
    %v2880 = vpop.f32.mrf.mxu0
    %2881 = vdwg.mxu0
    %2882 = vmatprep.subr.mxu0 0.0
    %2883 = vmatpush1.msra.mxu0 0.0
    %2884 = vmatprep.subr.mxu0 0.0
    %2885 = vmatpush1.msra.mxu0 0.0
    %2886 = vmatprep.subr.mxu0 0.0
    %2887 = vmatpush1.msra.mxu0 0.0
    %2888 = vmatprep.subr.mxu0 0.0
    %2889 = vmatpush1.msra.mxu0 0.0
    %2890 = vmatprep.subr.mxu0 0.0
    %2891 = vmatpush1.msra.mxu0 0.0
    %2892 = vmatprep.subr.mxu0 0.0
    %2893 = vmatpush1.msra.mxu0 0.0
    %2894 = vmatprep.subr.mxu0 0.0
    %2895 = vmatpush1.msra.mxu0 0.0
    %2896 = vmatprep.subr.mxu0 0.0
    %2897 = vmatpush1.msra.mxu0 0.0
    %2898 = vmatprep.subr.mxu0 0.0
    %2899 = vmatpush1.msra.mxu0 0.0
    %2900 = vmatprep.subr.mxu0 0.0
    %2901 = vmatpush1.msra.mxu0 0.0
    %2902 = vmatprep.subr.mxu0 0.0
    %2903 = vmatpush1.msra.mxu0 0.0
    %2904 = vmatprep.subr.mxu0 0.0
    %2905 = vmatpush1.msra.mxu0 0.0
    %2906 = vmatprep.subr.mxu0 0.0
    %v2907 = vand.u32 %v2072, 4294901760
    %v2908 = vsub.f32 %v2072, %v2907
    %v2909 = vand.u32 %v2908, 4294901760
    %v2910 = vsub.f32 %v2908, %v2909
    %v2911 = vand.u32 %v2910, 4294901760
    %2912 = vmatpush1.msra.mxu0 %v2911
    %2913 = vmatprep.subr.mxu0 0.0
    %v2914 = vand.u32 %v2066, 4294901760
    %v2915 = vsub.f32 %v2066, %v2914
    %v2916 = vand.u32 %v2915, 4294901760
    %v2917 = vsub.f32 %v2915, %v2916
    %v2918 = vand.u32 %v2917, 4294901760
    %2919 = vmatpush1.msra.mxu0 %v2918
    %2920 = vmatprep.subr.mxu0 0.0
    %v2921 = vand.u32 %v2060, 4294901760
    %v2922 = vsub.f32 %v2060, %v2921
    %v2923 = vand.u32 %v2922, 4294901760
    %v2924 = vsub.f32 %v2922, %v2923
    %v2925 = vand.u32 %v2924, 4294901760
    %2926 = vmatpush1.msra.mxu0 %v2925
    %2927 = vmatprep.subr.mxu0 0.0
    %v2928 = vand.u32 %v2054, 4294901760
    %v2929 = vsub.f32 %v2054, %v2928
    %v2930 = vand.u32 %v2929, 4294901760
    %v2931 = vsub.f32 %v2929, %v2930
    %v2932 = vand.u32 %v2931, 4294901760
    %2933 = vmatpush1.msra.mxu0 %v2932
    %2934 = vmatprep.subr.mxu0 0.0
    %2935 = vmatpush2.msra.mxu0 0.0
    %2936 = vmatprep.subr.mxu0 0.0
    %2937 = vmatpush2.msra.mxu0 0.0
    %2938 = vmatprep.subr.mxu0 0.0
    %2939 = vmatpush2.msra.mxu0 0.0
    %2940 = vmatprep.subr.mxu0 0.0
    %2941 = vmatpush2.msra.mxu0 0.0
    %2942 = vmatprep.subr.mxu0 0.0
    %2943 = vmatpush2.msra.mxu0 0.0
    %2944 = vmatprep.subr.mxu0 0.0
    %2945 = vmatpush2.msra.mxu0 0.0
    %2946 = vmatprep.subr.mxu0 0.0
    %2947 = vmatpush2.msra.mxu0 0.0
    %2948 = vmatprep.subr.mxu0 0.0
    %2949 = vmatpush2.msra.mxu0 0.0
    %2950 = vmatprep.subr.mxu0 0.0
    %2951 = vmatpush2.msra.mxu0 0.0
    %2952 = vmatprep.subr.mxu0 0.0
    %2953 = vmatpush2.msra.mxu0 0.0
    %2954 = vmatprep.subr.mxu0 0.0
    %2955 = vmatpush2.msra.mxu0 0.0
    %2956 = vmatprep.subr.mxu0 0.0
    %2957 = vmatpush2.msra.mxu0 0.0
    %2958 = vmatprep.subr.mxu0 0.0
    %2959 = vmatpush2.msra.mxu0 0.0
    %2960 = vmatprep.subr.mxu0 0.0
    %2961 = vmatpush2.msra.mxu0 0.0
    %2962 = vmatprep.subr.mxu0 0.0
    %2963 = vmatpush2.msra.mxu0 0.0
    %2964 = vmatprep.subr.mxu0 0.0
    %2965 = vmatpush2.msra.mxu0 0.0
    %2966 = vmatprep.mubr.f32.mxu0 0.0
    %v2967 = vand.u32 %v2762, 4294901760
    %2968 = vmatmul.mubr.f32.gmra.mxu0 %v2967
    %v2969 = vpop.f32.mrf.mxu0
    %v2970 = vadd.f32 %v2849, %v2969
    %v2971 = vpop.f32.mrf.mxu0
    %2972 = vmatprep.mubr.f32.mxu0 0.0
    %v2973 = vand.u32 %v2765, 4294901760
    %2974 = vmatmul.mubr.f32.gmra.mxu0 %v2973
    %v2975 = vpop.f32.mrf.mxu0
    %v2976 = vadd.f32 %v2859, %v2975
    %v2977 = vpop.f32.mrf.mxu0
    %2978 = vmatprep.mubr.f32.mxu0 0.0
    %v2979 = vand.u32 %v2768, 4294901760
    %2980 = vmatmul.mubr.f32.gmra.mxu0 %v2979
    %v2981 = vpop.f32.mrf.mxu0
    %v2982 = vadd.f32 %v2869, %v2981
    %v2983 = vpop.f32.mrf.mxu0
    %2984 = vmatprep.mubr.f32.mxu0 0.0
    %v2985 = vand.u32 %v2771, 4294901760
    %2986 = vmatmul.mubr.f32.gmra.mxu0 %v2985
    %v2987 = vpop.f32.mrf.mxu0
    %v2988 = vadd.f32 %v2879, %v2987
    %v2989 = vpop.f32.mrf.mxu0
    %2990 = vdwg.mxu0
    %2991 = vmatprep.subr.mxu0 0.0
    %2992 = vmatpush1.msra.mxu0 0.0
    %2993 = vmatprep.subr.mxu0 0.0
    %2994 = vmatpush1.msra.mxu0 0.0
    %2995 = vmatprep.subr.mxu0 0.0
    %2996 = vmatpush1.msra.mxu0 0.0
    %2997 = vmatprep.subr.mxu0 0.0
    %2998 = vmatpush1.msra.mxu0 0.0
    %2999 = vmatprep.subr.mxu0 0.0
    %3000 = vmatpush1.msra.mxu0 0.0
    %3001 = vmatprep.subr.mxu0 0.0
    %3002 = vmatpush1.msra.mxu0 0.0
    %3003 = vmatprep.subr.mxu0 0.0
    %3004 = vmatpush1.msra.mxu0 0.0
    %3005 = vmatprep.subr.mxu0 0.0
    %3006 = vmatpush1.msra.mxu0 0.0
    %3007 = vmatprep.subr.mxu0 0.0
    %3008 = vmatpush1.msra.mxu0 0.0
    %3009 = vmatprep.subr.mxu0 0.0
    %3010 = vmatpush1.msra.mxu0 0.0
    %3011 = vmatprep.subr.mxu0 0.0
    %3012 = vmatpush1.msra.mxu0 0.0
    %3013 = vmatprep.subr.mxu0 0.0
    %3014 = vmatpush1.msra.mxu0 0.0
    %3015 = vmatprep.subr.mxu0 0.0
    %v3016 = vand.u32 %v2072, 4294901760
    %v3017 = vsub.f32 %v2072, %v3016
    %3018 = vmatpush1.msra.mxu0 %v3017
    %3019 = vmatprep.subr.mxu0 0.0
    %v3020 = vand.u32 %v2066, 4294901760
    %v3021 = vsub.f32 %v2066, %v3020
    %3022 = vmatpush1.msra.mxu0 %v3021
    %3023 = vmatprep.subr.mxu0 0.0
    %v3024 = vand.u32 %v2060, 4294901760
    %v3025 = vsub.f32 %v2060, %v3024
    %3026 = vmatpush1.msra.mxu0 %v3025
    %3027 = vmatprep.subr.mxu0 0.0
    %v3028 = vand.u32 %v2054, 4294901760
    %v3029 = vsub.f32 %v2054, %v3028
    %3030 = vmatpush1.msra.mxu0 %v3029
    %3031 = vmatprep.subr.mxu0 0.0
    %3032 = vmatpush2.msra.mxu0 0.0
    %3033 = vmatprep.subr.mxu0 0.0
    %3034 = vmatpush2.msra.mxu0 0.0
    %3035 = vmatprep.subr.mxu0 0.0
    %3036 = vmatpush2.msra.mxu0 0.0
    %3037 = vmatprep.subr.mxu0 0.0
    %3038 = vmatpush2.msra.mxu0 0.0
    %3039 = vmatprep.subr.mxu0 0.0
    %3040 = vmatpush2.msra.mxu0 0.0
    %3041 = vmatprep.subr.mxu0 0.0
    %3042 = vmatpush2.msra.mxu0 0.0
    %3043 = vmatprep.subr.mxu0 0.0
    %3044 = vmatpush2.msra.mxu0 0.0
    %3045 = vmatprep.subr.mxu0 0.0
    %3046 = vmatpush2.msra.mxu0 0.0
    %3047 = vmatprep.subr.mxu0 0.0
    %3048 = vmatpush2.msra.mxu0 0.0
    %3049 = vmatprep.subr.mxu0 0.0
    %3050 = vmatpush2.msra.mxu0 0.0
    %3051 = vmatprep.subr.mxu0 0.0
    %3052 = vmatpush2.msra.mxu0 0.0
    %3053 = vmatprep.subr.mxu0 0.0
    %3054 = vmatpush2.msra.mxu0 0.0
    %3055 = vmatprep.subr.mxu0 0.0
    %3056 = vmatpush2.msra.mxu0 0.0
    %3057 = vmatprep.subr.mxu0 0.0
    %3058 = vmatpush2.msra.mxu0 0.0
    %3059 = vmatprep.subr.mxu0 0.0
    %3060 = vmatpush2.msra.mxu0 0.0
    %3061 = vmatprep.subr.mxu0 0.0
    %3062 = vmatpush2.msra.mxu0 0.0
    %3063 = vmatprep.mubr.f32.mxu0 0.0
    %v3064 = vand.u32 %v2762, 4294901760
    %v3065 = vsub.f32 %v2762, %v3064
    %3066 = vmatmul.mubr.f32.gmra.mxu0 %v3065
    %v3067 = vpop.f32.mrf.mxu0
    %v3068 = vadd.f32 %v2970, %v3067
    %v3069 = vpop.f32.mrf.mxu0
    %3070 = vmatprep.mubr.f32.mxu0 0.0
    %v3071 = vand.u32 %v2765, 4294901760
    %v3072 = vsub.f32 %v2765, %v3071
    %3073 = vmatmul.mubr.f32.gmra.mxu0 %v3072
    %v3074 = vpop.f32.mrf.mxu0
    %v3075 = vadd.f32 %v2976, %v3074
    %v3076 = vpop.f32.mrf.mxu0
    %3077 = vmatprep.mubr.f32.mxu0 0.0
    %v3078 = vand.u32 %v2768, 4294901760
    %v3079 = vsub.f32 %v2768, %v3078
    %3080 = vmatmul.mubr.f32.gmra.mxu0 %v3079
    %v3081 = vpop.f32.mrf.mxu0
    %v3082 = vadd.f32 %v2982, %v3081
    %v3083 = vpop.f32.mrf.mxu0
    %3084 = vmatprep.mubr.f32.mxu0 0.0
    %v3085 = vand.u32 %v2771, 4294901760
    %v3086 = vsub.f32 %v2771, %v3085
    %3087 = vmatmul.mubr.f32.gmra.mxu0 %v3086
    %v3088 = vpop.f32.mrf.mxu0
    %v3089 = vadd.f32 %v2988, %v3088
    %v3090 = vpop.f32.mrf.mxu0
    %3091 = vdwg.mxu0
    %3092 = vmatprep.subr.mxu0 0.0
    %3093 = vmatpush1.msra.mxu0 0.0
    %3094 = vmatprep.subr.mxu0 0.0
    %3095 = vmatpush1.msra.mxu0 0.0
    %3096 = vmatprep.subr.mxu0 0.0
    %3097 = vmatpush1.msra.mxu0 0.0
    %3098 = vmatprep.subr.mxu0 0.0
    %3099 = vmatpush1.msra.mxu0 0.0
    %3100 = vmatprep.subr.mxu0 0.0
    %3101 = vmatpush1.msra.mxu0 0.0
    %3102 = vmatprep.subr.mxu0 0.0
    %3103 = vmatpush1.msra.mxu0 0.0
    %3104 = vmatprep.subr.mxu0 0.0
    %3105 = vmatpush1.msra.mxu0 0.0
    %3106 = vmatprep.subr.mxu0 0.0
    %3107 = vmatpush1.msra.mxu0 0.0
    %3108 = vmatprep.subr.mxu0 0.0
    %3109 = vmatpush1.msra.mxu0 0.0
    %3110 = vmatprep.subr.mxu0 0.0
    %3111 = vmatpush1.msra.mxu0 0.0
    %3112 = vmatprep.subr.mxu0 0.0
    %3113 = vmatpush1.msra.mxu0 0.0
    %3114 = vmatprep.subr.mxu0 0.0
    %3115 = vmatpush1.msra.mxu0 0.0
    %3116 = vmatprep.subr.mxu0 0.0
    %v3117 = vand.u32 %v2072, 4294901760
    %3118 = vmatpush1.msra.mxu0 %v3117
    %3119 = vmatprep.subr.mxu0 0.0
    %v3120 = vand.u32 %v2066, 4294901760
    %3121 = vmatpush1.msra.mxu0 %v3120
    %3122 = vmatprep.subr.mxu0 0.0
    %v3123 = vand.u32 %v2060, 4294901760
    %3124 = vmatpush1.msra.mxu0 %v3123
    %3125 = vmatprep.subr.mxu0 0.0
    %v3126 = vand.u32 %v2054, 4294901760
    %3127 = vmatpush1.msra.mxu0 %v3126
    %3128 = vmatprep.subr.mxu0 0.0
    %3129 = vmatpush2.msra.mxu0 0.0
    %3130 = vmatprep.subr.mxu0 0.0
    %3131 = vmatpush2.msra.mxu0 0.0
    %3132 = vmatprep.subr.mxu0 0.0
    %3133 = vmatpush2.msra.mxu0 0.0
    %3134 = vmatprep.subr.mxu0 0.0
    %3135 = vmatpush2.msra.mxu0 0.0
    %3136 = vmatprep.subr.mxu0 0.0
    %3137 = vmatpush2.msra.mxu0 0.0
    %3138 = vmatprep.subr.mxu0 0.0
    %3139 = vmatpush2.msra.mxu0 0.0
    %3140 = vmatprep.subr.mxu0 0.0
    %3141 = vmatpush2.msra.mxu0 0.0
    %3142 = vmatprep.subr.mxu0 0.0
    %3143 = vmatpush2.msra.mxu0 0.0
    %3144 = vmatprep.subr.mxu0 0.0
    %3145 = vmatpush2.msra.mxu0 0.0
    %3146 = vmatprep.subr.mxu0 0.0
    %3147 = vmatpush2.msra.mxu0 0.0
    %3148 = vmatprep.subr.mxu0 0.0
    %3149 = vmatpush2.msra.mxu0 0.0
    %3150 = vmatprep.subr.mxu0 0.0
    %3151 = vmatpush2.msra.mxu0 0.0
    %3152 = vmatprep.subr.mxu0 0.0
    %3153 = vmatpush2.msra.mxu0 0.0
    %3154 = vmatprep.subr.mxu0 0.0
    %3155 = vmatpush2.msra.mxu0 0.0
    %3156 = vmatprep.subr.mxu0 0.0
    %3157 = vmatpush2.msra.mxu0 0.0
    %3158 = vmatprep.subr.mxu0 0.0
    %3159 = vmatpush2.msra.mxu0 0.0
    %3160 = vmatprep.mubr.f32.mxu0 0.0
    %v3161 = vand.u32 %v2762, 4294901760
    %v3162 = vsub.f32 %v2762, %v3161
    %v3163 = vand.u32 %v3162, 4294901760
    %3164 = vmatmul.mubr.f32.gmra.mxu0 %v3163
    %v3165 = vpop.f32.mrf.mxu0
    %v3166 = vadd.f32 %v3068, %v3165
    %v3167 = vpop.f32.mrf.mxu0
    %3168 = vmatprep.mubr.f32.mxu0 0.0
    %v3169 = vand.u32 %v2765, 4294901760
    %v3170 = vsub.f32 %v2765, %v3169
    %v3171 = vand.u32 %v3170, 4294901760
    %3172 = vmatmul.mubr.f32.gmra.mxu0 %v3171
    %v3173 = vpop.f32.mrf.mxu0
    %v3174 = vadd.f32 %v3075, %v3173
    %v3175 = vpop.f32.mrf.mxu0
    %3176 = vmatprep.mubr.f32.mxu0 0.0
    %v3177 = vand.u32 %v2768, 4294901760
    %v3178 = vsub.f32 %v2768, %v3177
    %v3179 = vand.u32 %v3178, 4294901760
    %3180 = vmatmul.mubr.f32.gmra.mxu0 %v3179
    %v3181 = vpop.f32.mrf.mxu0
    %v3182 = vadd.f32 %v3082, %v3181
    %v3183 = vpop.f32.mrf.mxu0
    %3184 = vmatprep.mubr.f32.mxu0 0.0
    %v3185 = vand.u32 %v2771, 4294901760
    %v3186 = vsub.f32 %v2771, %v3185
    %v3187 = vand.u32 %v3186, 4294901760
    %3188 = vmatmul.mubr.f32.gmra.mxu0 %v3187
    %v3189 = vpop.f32.mrf.mxu0
    %v3190 = vadd.f32 %v3089, %v3189
    %v3191 = vpop.f32.mrf.mxu0
    %3192 = vdwg.mxu0
    %3193 = vmatprep.subr.mxu0 0.0
    %3194 = vmatpush1.msra.mxu0 0.0
    %3195 = vmatprep.subr.mxu0 0.0
    %3196 = vmatpush1.msra.mxu0 0.0
    %3197 = vmatprep.subr.mxu0 0.0
    %3198 = vmatpush1.msra.mxu0 0.0
    %3199 = vmatprep.subr.mxu0 0.0
    %3200 = vmatpush1.msra.mxu0 0.0
    %3201 = vmatprep.subr.mxu0 0.0
    %3202 = vmatpush1.msra.mxu0 0.0
    %3203 = vmatprep.subr.mxu0 0.0
    %3204 = vmatpush1.msra.mxu0 0.0
    %3205 = vmatprep.subr.mxu0 0.0
    %3206 = vmatpush1.msra.mxu0 0.0
    %3207 = vmatprep.subr.mxu0 0.0
    %3208 = vmatpush1.msra.mxu0 0.0
    %3209 = vmatprep.subr.mxu0 0.0
    %3210 = vmatpush1.msra.mxu0 0.0
    %3211 = vmatprep.subr.mxu0 0.0
    %3212 = vmatpush1.msra.mxu0 0.0
    %3213 = vmatprep.subr.mxu0 0.0
    %3214 = vmatpush1.msra.mxu0 0.0
    %3215 = vmatprep.subr.mxu0 0.0
    %3216 = vmatpush1.msra.mxu0 0.0
    %3217 = vmatprep.subr.mxu0 0.0
    %v3218 = vand.u32 %v2072, 4294901760
    %v3219 = vsub.f32 %v2072, %v3218
    %v3220 = vand.u32 %v3219, 4294901760
    %3221 = vmatpush1.msra.mxu0 %v3220
    %3222 = vmatprep.subr.mxu0 0.0
    %v3223 = vand.u32 %v2066, 4294901760
    %v3224 = vsub.f32 %v2066, %v3223
    %v3225 = vand.u32 %v3224, 4294901760
    %3226 = vmatpush1.msra.mxu0 %v3225
    %3227 = vmatprep.subr.mxu0 0.0
    %v3228 = vand.u32 %v2060, 4294901760
    %v3229 = vsub.f32 %v2060, %v3228
    %v3230 = vand.u32 %v3229, 4294901760
    %3231 = vmatpush1.msra.mxu0 %v3230
    %3232 = vmatprep.subr.mxu0 0.0
    %v3233 = vand.u32 %v2054, 4294901760
    %v3234 = vsub.f32 %v2054, %v3233
    %v3235 = vand.u32 %v3234, 4294901760
    %3236 = vmatpush1.msra.mxu0 %v3235
    %3237 = vmatprep.subr.mxu0 0.0
    %3238 = vmatpush2.msra.mxu0 0.0
    %3239 = vmatprep.subr.mxu0 0.0
    %3240 = vmatpush2.msra.mxu0 0.0
    %3241 = vmatprep.subr.mxu0 0.0
    %3242 = vmatpush2.msra.mxu0 0.0
    %3243 = vmatprep.subr.mxu0 0.0
    %3244 = vmatpush2.msra.mxu0 0.0
    %3245 = vmatprep.subr.mxu0 0.0
    %3246 = vmatpush2.msra.mxu0 0.0
    %3247 = vmatprep.subr.mxu0 0.0
    %3248 = vmatpush2.msra.mxu0 0.0
    %3249 = vmatprep.subr.mxu0 0.0
    %3250 = vmatpush2.msra.mxu0 0.0
    %3251 = vmatprep.subr.mxu0 0.0
    %3252 = vmatpush2.msra.mxu0 0.0
    %3253 = vmatprep.subr.mxu0 0.0
    %3254 = vmatpush2.msra.mxu0 0.0
    %3255 = vmatprep.subr.mxu0 0.0
    %3256 = vmatpush2.msra.mxu0 0.0
    %3257 = vmatprep.subr.mxu0 0.0
    %3258 = vmatpush2.msra.mxu0 0.0
    %3259 = vmatprep.subr.mxu0 0.0
    %3260 = vmatpush2.msra.mxu0 0.0
    %3261 = vmatprep.subr.mxu0 0.0
    %3262 = vmatpush2.msra.mxu0 0.0
    %3263 = vmatprep.subr.mxu0 0.0
    %3264 = vmatpush2.msra.mxu0 0.0
    %3265 = vmatprep.subr.mxu0 0.0
    %3266 = vmatpush2.msra.mxu0 0.0
    %3267 = vmatprep.subr.mxu0 0.0
    %3268 = vmatpush2.msra.mxu0 0.0
    %3269 = vmatprep.mubr.f32.mxu0 0.0
    %v3270 = vand.u32 %v2762, 4294901760
    %3271 = vmatmul.mubr.f32.gmra.mxu0 %v3270
    %v3272 = vpop.f32.mrf.mxu0
    %v3273 = vadd.f32 %v3166, %v3272
    %v3274 = vpop.f32.mrf.mxu0
    %3275 = vmatprep.mubr.f32.mxu0 0.0
    %v3276 = vand.u32 %v2765, 4294901760
    %3277 = vmatmul.mubr.f32.gmra.mxu0 %v3276
    %v3278 = vpop.f32.mrf.mxu0
    %v3279 = vadd.f32 %v3174, %v3278
    %v3280 = vpop.f32.mrf.mxu0
    %3281 = vmatprep.mubr.f32.mxu0 0.0
    %v3282 = vand.u32 %v2768, 4294901760
    %3283 = vmatmul.mubr.f32.gmra.mxu0 %v3282
    %v3284 = vpop.f32.mrf.mxu0
    %v3285 = vadd.f32 %v3182, %v3284
    %v3286 = vpop.f32.mrf.mxu0
    %3287 = vmatprep.mubr.f32.mxu0 0.0
    %v3288 = vand.u32 %v2771, 4294901760
    %3289 = vmatmul.mubr.f32.gmra.mxu0 %v3288
    %v3290 = vpop.f32.mrf.mxu0
    %v3291 = vadd.f32 %v3190, %v3290
    %v3292 = vpop.f32.mrf.mxu0
    %3293 = vdwg.mxu0
    %3294 = vmatprep.subr.mxu0 0.0
    %3295 = vmatpush1.msra.mxu0 0.0
    %3296 = vmatprep.subr.mxu0 0.0
    %3297 = vmatpush1.msra.mxu0 0.0
    %3298 = vmatprep.subr.mxu0 0.0
    %3299 = vmatpush1.msra.mxu0 0.0
    %3300 = vmatprep.subr.mxu0 0.0
    %3301 = vmatpush1.msra.mxu0 0.0
    %3302 = vmatprep.subr.mxu0 0.0
    %3303 = vmatpush1.msra.mxu0 0.0
    %3304 = vmatprep.subr.mxu0 0.0
    %3305 = vmatpush1.msra.mxu0 0.0
    %3306 = vmatprep.subr.mxu0 0.0
    %3307 = vmatpush1.msra.mxu0 0.0
    %3308 = vmatprep.subr.mxu0 0.0
    %3309 = vmatpush1.msra.mxu0 0.0
    %3310 = vmatprep.subr.mxu0 0.0
    %3311 = vmatpush1.msra.mxu0 0.0
    %3312 = vmatprep.subr.mxu0 0.0
    %3313 = vmatpush1.msra.mxu0 0.0
    %3314 = vmatprep.subr.mxu0 0.0
    %3315 = vmatpush1.msra.mxu0 0.0
    %3316 = vmatprep.subr.mxu0 0.0
    %3317 = vmatpush1.msra.mxu0 0.0
    %3318 = vmatprep.subr.mxu0 0.0
    %v3319 = vand.u32 %v2072, 4294901760
    %3320 = vmatpush1.msra.mxu0 %v3319
    %3321 = vmatprep.subr.mxu0 0.0
    %v3322 = vand.u32 %v2066, 4294901760
    %3323 = vmatpush1.msra.mxu0 %v3322
    %3324 = vmatprep.subr.mxu0 0.0
    %v3325 = vand.u32 %v2060, 4294901760
    %3326 = vmatpush1.msra.mxu0 %v3325
    %3327 = vmatprep.subr.mxu0 0.0
    %v3328 = vand.u32 %v2054, 4294901760
    %3329 = vmatpush1.msra.mxu0 %v3328
    %3330 = vmatprep.subr.mxu0 0.0
    %3331 = vmatpush2.msra.mxu0 0.0
    %3332 = vmatprep.subr.mxu0 0.0
    %3333 = vmatpush2.msra.mxu0 0.0
    %3334 = vmatprep.subr.mxu0 0.0
    %3335 = vmatpush2.msra.mxu0 0.0
    %3336 = vmatprep.subr.mxu0 0.0
    %3337 = vmatpush2.msra.mxu0 0.0
    %3338 = vmatprep.subr.mxu0 0.0
    %3339 = vmatpush2.msra.mxu0 0.0
    %3340 = vmatprep.subr.mxu0 0.0
    %3341 = vmatpush2.msra.mxu0 0.0
    %3342 = vmatprep.subr.mxu0 0.0
    %3343 = vmatpush2.msra.mxu0 0.0
    %3344 = vmatprep.subr.mxu0 0.0
    %3345 = vmatpush2.msra.mxu0 0.0
    %3346 = vmatprep.subr.mxu0 0.0
    %3347 = vmatpush2.msra.mxu0 0.0
    %3348 = vmatprep.subr.mxu0 0.0
    %3349 = vmatpush2.msra.mxu0 0.0
    %3350 = vmatprep.subr.mxu0 0.0
    %3351 = vmatpush2.msra.mxu0 0.0
    %3352 = vmatprep.subr.mxu0 0.0
    %3353 = vmatpush2.msra.mxu0 0.0
    %3354 = vmatprep.subr.mxu0 0.0
    %3355 = vmatpush2.msra.mxu0 0.0
    %3356 = vmatprep.subr.mxu0 0.0
    %3357 = vmatpush2.msra.mxu0 0.0
    %3358 = vmatprep.subr.mxu0 0.0
    %3359 = vmatpush2.msra.mxu0 0.0
    %3360 = vmatprep.subr.mxu0 0.0
    %3361 = vmatpush2.msra.mxu0 0.0
    %3362 = vmatprep.mubr.f32.mxu0 0.0
    %v3363 = vand.u32 %v2762, 4294901760
    %3364 = vmatmul.mubr.f32.gmra.mxu0 %v3363
    %v3365 = vpop.f32.mrf.mxu0
    %v3366 = vadd.f32 %v3273, %v3365
    %v3367 = vpop.f32.mrf.mxu0
    %3368 = vmatprep.mubr.f32.mxu0 0.0
    %v3369 = vand.u32 %v2765, 4294901760
    %3370 = vmatmul.mubr.f32.gmra.mxu0 %v3369
    %v3371 = vpop.f32.mrf.mxu0
    %v3372 = vadd.f32 %v3279, %v3371
    %v3373 = vpop.f32.mrf.mxu0
    %3374 = vmatprep.mubr.f32.mxu0 0.0
    %v3375 = vand.u32 %v2768, 4294901760
    %3376 = vmatmul.mubr.f32.gmra.mxu0 %v3375
    %v3377 = vpop.f32.mrf.mxu0
    %v3378 = vadd.f32 %v3285, %v3377
    %v3379 = vpop.f32.mrf.mxu0
    %3380 = vmatprep.mubr.f32.mxu0 0.0
    %v3381 = vand.u32 %v2771, 4294901760
    %3382 = vmatmul.mubr.f32.gmra.mxu0 %v3381
    %v3383 = vpop.f32.mrf.mxu0
    %v3384 = vadd.f32 %v3291, %v3383
    %v3385 = vpop.f32.mrf.mxu0
    %3386 = vdwg.mxu0
    %v3387 = vld [vmem:[#allocation14] sm:$0xff]
    %v3388 = vld [vmem:[#allocation14 + $0x8] sm:$0xff]
    %v3389 = vld [vmem:[#allocation14 + $0x10] sm:$0xff]
    %v3390 = vld [vmem:[#allocation14 + $0x18] sm:$0xff]
    %v3391 = vld [vmem:[%s11] sm:$0x1]
    %v3393 = vlaneseq
    %v3394 = vshrl.u32 %v3393, 7
    %v3395 = vsub.s32 0, %v3394
    %v3396 = vrot.slane %v3391, %v3395
    %v3399 = vsel %vm166, %v3366, 0
    %v3402 = vsel %vm166, %v3372, 0
    %v3405 = vsel %vm166, %v3378, 0
    %v3408 = vsel %vm166, %v3384, 0
    %3410 = vmatprep.subr.mxu0 0.0
    %3411 = vmatpush1.msra.mxu0 0.0
    %3412 = vmatprep.subr.mxu0 0.0
    %3413 = vmatpush1.msra.mxu0 0.0
    %3414 = vmatprep.subr.mxu0 0.0
    %3415 = vmatpush1.msra.mxu0 0.0
    %3416 = vmatprep.subr.mxu0 0.0
    %3417 = vmatpush1.msra.mxu0 0.0
    %3418 = vmatprep.subr.mxu0 0.0
    %3419 = vmatpush1.msra.mxu0 0.0
    %3420 = vmatprep.subr.mxu0 0.0
    %3421 = vmatpush1.msra.mxu0 0.0
    %3422 = vmatprep.subr.mxu0 0.0
    %3423 = vmatpush1.msra.mxu0 0.0
    %3424 = vmatprep.subr.mxu0 0.0
    %3425 = vmatpush1.msra.mxu0 0.0
    %3426 = vmatprep.subr.mxu0 0.0
    %3427 = vmatpush1.msra.mxu0 0.0
    %3428 = vmatprep.subr.mxu0 0.0
    %3429 = vmatpush1.msra.mxu0 0.0
    %3430 = vmatprep.subr.mxu0 0.0
    %3431 = vmatpush1.msra.mxu0 0.0
    %3432 = vmatprep.subr.mxu0 0.0
    %3433 = vmatpush1.msra.mxu0 0.0
    %3434 = vmatprep.subr.mxu0 0.0
    %v3435 = vand.u32 %v3390, 4294901760
    %3436 = vmatpush1.msra.mxu0 %v3435
    %3437 = vmatprep.subr.mxu0 0.0
    %v3438 = vand.u32 %v3389, 4294901760
    %3439 = vmatpush1.msra.mxu0 %v3438
    %3440 = vmatprep.subr.mxu0 0.0
    %v3441 = vand.u32 %v3388, 4294901760
    %3442 = vmatpush1.msra.mxu0 %v3441
    %3443 = vmatprep.subr.mxu0 0.0
    %v3444 = vand.u32 %v3387, 4294901760
    %3445 = vmatpush1.msra.mxu0 %v3444
    %3446 = vmatprep.subr.mxu0 0.0
    %3447 = vmatpush2.msra.mxu0 0.0
    %3448 = vmatprep.subr.mxu0 0.0
    %3449 = vmatpush2.msra.mxu0 0.0
    %3450 = vmatprep.subr.mxu0 0.0
    %3451 = vmatpush2.msra.mxu0 0.0
    %3452 = vmatprep.subr.mxu0 0.0
    %3453 = vmatpush2.msra.mxu0 0.0
    %3454 = vmatprep.subr.mxu0 0.0
    %3455 = vmatpush2.msra.mxu0 0.0
    %3456 = vmatprep.subr.mxu0 0.0
    %3457 = vmatpush2.msra.mxu0 0.0
    %3458 = vmatprep.subr.mxu0 0.0
    %3459 = vmatpush2.msra.mxu0 0.0
    %3460 = vmatprep.subr.mxu0 0.0
    %3461 = vmatpush2.msra.mxu0 0.0
    %3462 = vmatprep.subr.mxu0 0.0
    %3463 = vmatpush2.msra.mxu0 0.0
    %3464 = vmatprep.subr.mxu0 0.0
    %3465 = vmatpush2.msra.mxu0 0.0
    %3466 = vmatprep.subr.mxu0 0.0
    %3467 = vmatpush2.msra.mxu0 0.0
    %3468 = vmatprep.subr.mxu0 0.0
    %3469 = vmatpush2.msra.mxu0 0.0
    %3470 = vmatprep.subr.mxu0 0.0
    %3471 = vmatpush2.msra.mxu0 0.0
    %3472 = vmatprep.subr.mxu0 0.0
    %3473 = vmatpush2.msra.mxu0 0.0
    %3474 = vmatprep.subr.mxu0 0.0
    %3475 = vmatpush2.msra.mxu0 0.0
    %3476 = vmatprep.subr.mxu0 0.0
    %3477 = vmatpush2.msra.mxu0 0.0
    %3478 = vmatprep.mubr.f32.mxu0 0.0
    %v3479 = vand.u32 %v3399, 4294901760
    %v3480 = vsub.f32 %v3399, %v3479
    %v3481 = vand.u32 %v3480, 4294901760
    %v3482 = vsub.f32 %v3480, %v3481
    %v3483 = vand.u32 %v3482, 4294901760
    %3484 = vmatmul.mubr.f32.gmra.mxu0 %v3483
    %v3485 = vpop.f32.mrf.mxu0
    %v3486 = vadd.f32 %v3396, %v3485
    %v3487 = vpop.f32.mrf.mxu0
    %3488 = vmatprep.mubr.f32.mxu0 0.0
    %v3489 = vand.u32 %v3402, 4294901760
    %v3490 = vsub.f32 %v3402, %v3489
    %v3491 = vand.u32 %v3490, 4294901760
    %v3492 = vsub.f32 %v3490, %v3491
    %v3493 = vand.u32 %v3492, 4294901760
    %3494 = vmatmul.mubr.f32.gmra.mxu0 %v3493
    %v3495 = vpop.f32.mrf.mxu0
    %v3496 = vadd.f32 %v3396, %v3495
    %v3497 = vpop.f32.mrf.mxu0
    %3498 = vmatprep.mubr.f32.mxu0 0.0
    %v3499 = vand.u32 %v3405, 4294901760
    %v3500 = vsub.f32 %v3405, %v3499
    %v3501 = vand.u32 %v3500, 4294901760
    %v3502 = vsub.f32 %v3500, %v3501
    %v3503 = vand.u32 %v3502, 4294901760
    %3504 = vmatmul.mubr.f32.gmra.mxu0 %v3503
    %v3505 = vpop.f32.mrf.mxu0
    %v3506 = vadd.f32 %v3396, %v3505
    %v3507 = vpop.f32.mrf.mxu0
    %3508 = vmatprep.mubr.f32.mxu0 0.0
    %v3509 = vand.u32 %v3408, 4294901760
    %v3510 = vsub.f32 %v3408, %v3509
    %v3511 = vand.u32 %v3510, 4294901760
    %v3512 = vsub.f32 %v3510, %v3511
    %v3513 = vand.u32 %v3512, 4294901760
    %3514 = vmatmul.mubr.f32.gmra.mxu0 %v3513
    %v3515 = vpop.f32.mrf.mxu0
    %v3516 = vadd.f32 %v3396, %v3515
    %v3517 = vpop.f32.mrf.mxu0
    %3518 = vdwg.mxu0
    %3519 = vmatprep.subr.mxu0 0.0
    %3520 = vmatpush1.msra.mxu0 0.0
    %3521 = vmatprep.subr.mxu0 0.0
    %3522 = vmatpush1.msra.mxu0 0.0
    %3523 = vmatprep.subr.mxu0 0.0
    %3524 = vmatpush1.msra.mxu0 0.0
    %3525 = vmatprep.subr.mxu0 0.0
    %3526 = vmatpush1.msra.mxu0 0.0
    %3527 = vmatprep.subr.mxu0 0.0
    %3528 = vmatpush1.msra.mxu0 0.0
    %3529 = vmatprep.subr.mxu0 0.0
    %3530 = vmatpush1.msra.mxu0 0.0
    %3531 = vmatprep.subr.mxu0 0.0
    %3532 = vmatpush1.msra.mxu0 0.0
    %3533 = vmatprep.subr.mxu0 0.0
    %3534 = vmatpush1.msra.mxu0 0.0
    %3535 = vmatprep.subr.mxu0 0.0
    %3536 = vmatpush1.msra.mxu0 0.0
    %3537 = vmatprep.subr.mxu0 0.0
    %3538 = vmatpush1.msra.mxu0 0.0
    %3539 = vmatprep.subr.mxu0 0.0
    %3540 = vmatpush1.msra.mxu0 0.0
    %3541 = vmatprep.subr.mxu0 0.0
    %3542 = vmatpush1.msra.mxu0 0.0
    %3543 = vmatprep.subr.mxu0 0.0
    %v3544 = vand.u32 %v3390, 4294901760
    %v3545 = vsub.f32 %v3390, %v3544
    %v3546 = vand.u32 %v3545, 4294901760
    %v3547 = vsub.f32 %v3545, %v3546
    %v3548 = vand.u32 %v3547, 4294901760
    %3549 = vmatpush1.msra.mxu0 %v3548
    %3550 = vmatprep.subr.mxu0 0.0
    %v3551 = vand.u32 %v3389, 4294901760
    %v3552 = vsub.f32 %v3389, %v3551
    %v3553 = vand.u32 %v3552, 4294901760
    %v3554 = vsub.f32 %v3552, %v3553
    %v3555 = vand.u32 %v3554, 4294901760
    %3556 = vmatpush1.msra.mxu0 %v3555
    %3557 = vmatprep.subr.mxu0 0.0
    %v3558 = vand.u32 %v3388, 4294901760
    %v3559 = vsub.f32 %v3388, %v3558
    %v3560 = vand.u32 %v3559, 4294901760
    %v3561 = vsub.f32 %v3559, %v3560
    %v3562 = vand.u32 %v3561, 4294901760
    %3563 = vmatpush1.msra.mxu0 %v3562
    %3564 = vmatprep.subr.mxu0 0.0
    %v3565 = vand.u32 %v3387, 4294901760
    %v3566 = vsub.f32 %v3387, %v3565
    %v3567 = vand.u32 %v3566, 4294901760
    %v3568 = vsub.f32 %v3566, %v3567
    %v3569 = vand.u32 %v3568, 4294901760
    %3570 = vmatpush1.msra.mxu0 %v3569
    %3571 = vmatprep.subr.mxu0 0.0
    %3572 = vmatpush2.msra.mxu0 0.0
    %3573 = vmatprep.subr.mxu0 0.0
    %3574 = vmatpush2.msra.mxu0 0.0
    %3575 = vmatprep.subr.mxu0 0.0
    %3576 = vmatpush2.msra.mxu0 0.0
    %3577 = vmatprep.subr.mxu0 0.0
    %3578 = vmatpush2.msra.mxu0 0.0
    %3579 = vmatprep.subr.mxu0 0.0
    %3580 = vmatpush2.msra.mxu0 0.0
    %3581 = vmatprep.subr.mxu0 0.0
    %3582 = vmatpush2.msra.mxu0 0.0
    %3583 = vmatprep.subr.mxu0 0.0
    %3584 = vmatpush2.msra.mxu0 0.0
    %3585 = vmatprep.subr.mxu0 0.0
    %3586 = vmatpush2.msra.mxu0 0.0
    %3587 = vmatprep.subr.mxu0 0.0
    %3588 = vmatpush2.msra.mxu0 0.0
    %3589 = vmatprep.subr.mxu0 0.0
    %3590 = vmatpush2.msra.mxu0 0.0
    %3591 = vmatprep.subr.mxu0 0.0
    %3592 = vmatpush2.msra.mxu0 0.0
    %3593 = vmatprep.subr.mxu0 0.0
    %3594 = vmatpush2.msra.mxu0 0.0
    %3595 = vmatprep.subr.mxu0 0.0
    %3596 = vmatpush2.msra.mxu0 0.0
    %3597 = vmatprep.subr.mxu0 0.0
    %3598 = vmatpush2.msra.mxu0 0.0
    %3599 = vmatprep.subr.mxu0 0.0
    %3600 = vmatpush2.msra.mxu0 0.0
    %3601 = vmatprep.subr.mxu0 0.0
    %3602 = vmatpush2.msra.mxu0 0.0
    %3603 = vmatprep.mubr.f32.mxu0 0.0
    %v3604 = vand.u32 %v3399, 4294901760
    %3605 = vmatmul.mubr.f32.gmra.mxu0 %v3604
    %v3606 = vpop.f32.mrf.mxu0
    %v3607 = vadd.f32 %v3486, %v3606
    %v3608 = vpop.f32.mrf.mxu0
    %3609 = vmatprep.mubr.f32.mxu0 0.0
    %v3610 = vand.u32 %v3402, 4294901760
    %3611 = vmatmul.mubr.f32.gmra.mxu0 %v3610
    %v3612 = vpop.f32.mrf.mxu0
    %v3613 = vadd.f32 %v3496, %v3612
    %v3614 = vpop.f32.mrf.mxu0
    %3615 = vmatprep.mubr.f32.mxu0 0.0
    %v3616 = vand.u32 %v3405, 4294901760
    %3617 = vmatmul.mubr.f32.gmra.mxu0 %v3616
    %v3618 = vpop.f32.mrf.mxu0
    %v3619 = vadd.f32 %v3506, %v3618
    %v3620 = vpop.f32.mrf.mxu0
    %3621 = vmatprep.mubr.f32.mxu0 0.0
    %v3622 = vand.u32 %v3408, 4294901760
    %3623 = vmatmul.mubr.f32.gmra.mxu0 %v3622
    %v3624 = vpop.f32.mrf.mxu0
    %v3625 = vadd.f32 %v3516, %v3624
    %v3626 = vpop.f32.mrf.mxu0
    %3627 = vdwg.mxu0
    %3628 = vmatprep.subr.mxu0 0.0
    %3629 = vmatpush1.msra.mxu0 0.0
    %3630 = vmatprep.subr.mxu0 0.0
    %3631 = vmatpush1.msra.mxu0 0.0
    %3632 = vmatprep.subr.mxu0 0.0
    %3633 = vmatpush1.msra.mxu0 0.0
    %3634 = vmatprep.subr.mxu0 0.0
    %3635 = vmatpush1.msra.mxu0 0.0
    %3636 = vmatprep.subr.mxu0 0.0
    %3637 = vmatpush1.msra.mxu0 0.0
    %3638 = vmatprep.subr.mxu0 0.0
    %3639 = vmatpush1.msra.mxu0 0.0
    %3640 = vmatprep.subr.mxu0 0.0
    %3641 = vmatpush1.msra.mxu0 0.0
    %3642 = vmatprep.subr.mxu0 0.0
    %3643 = vmatpush1.msra.mxu0 0.0
    %3644 = vmatprep.subr.mxu0 0.0
    %3645 = vmatpush1.msra.mxu0 0.0
    %3646 = vmatprep.subr.mxu0 0.0
    %3647 = vmatpush1.msra.mxu0 0.0
    %3648 = vmatprep.subr.mxu0 0.0
    %3649 = vmatpush1.msra.mxu0 0.0
    %3650 = vmatprep.subr.mxu0 0.0
    %3651 = vmatpush1.msra.mxu0 0.0
    %3652 = vmatprep.subr.mxu0 0.0
    %v3653 = vand.u32 %v3390, 4294901760
    %v3654 = vsub.f32 %v3390, %v3653
    %3655 = vmatpush1.msra.mxu0 %v3654
    %3656 = vmatprep.subr.mxu0 0.0
    %v3657 = vand.u32 %v3389, 4294901760
    %v3658 = vsub.f32 %v3389, %v3657
    %3659 = vmatpush1.msra.mxu0 %v3658
    %3660 = vmatprep.subr.mxu0 0.0
    %v3661 = vand.u32 %v3388, 4294901760
    %v3662 = vsub.f32 %v3388, %v3661
    %3663 = vmatpush1.msra.mxu0 %v3662
    %3664 = vmatprep.subr.mxu0 0.0
    %v3665 = vand.u32 %v3387, 4294901760
    %v3666 = vsub.f32 %v3387, %v3665
    %3667 = vmatpush1.msra.mxu0 %v3666
    %3668 = vmatprep.subr.mxu0 0.0
    %3669 = vmatpush2.msra.mxu0 0.0
    %3670 = vmatprep.subr.mxu0 0.0
    %3671 = vmatpush2.msra.mxu0 0.0
    %3672 = vmatprep.subr.mxu0 0.0
    %3673 = vmatpush2.msra.mxu0 0.0
    %3674 = vmatprep.subr.mxu0 0.0
    %3675 = vmatpush2.msra.mxu0 0.0
    %3676 = vmatprep.subr.mxu0 0.0
    %3677 = vmatpush2.msra.mxu0 0.0
    %3678 = vmatprep.subr.mxu0 0.0
    %3679 = vmatpush2.msra.mxu0 0.0
    %3680 = vmatprep.subr.mxu0 0.0
    %3681 = vmatpush2.msra.mxu0 0.0
    %3682 = vmatprep.subr.mxu0 0.0
    %3683 = vmatpush2.msra.mxu0 0.0
    %3684 = vmatprep.subr.mxu0 0.0
    %3685 = vmatpush2.msra.mxu0 0.0
    %3686 = vmatprep.subr.mxu0 0.0
    %3687 = vmatpush2.msra.mxu0 0.0
    %3688 = vmatprep.subr.mxu0 0.0
    %3689 = vmatpush2.msra.mxu0 0.0
    %3690 = vmatprep.subr.mxu0 0.0
    %3691 = vmatpush2.msra.mxu0 0.0
    %3692 = vmatprep.subr.mxu0 0.0
    %3693 = vmatpush2.msra.mxu0 0.0
    %3694 = vmatprep.subr.mxu0 0.0
    %3695 = vmatpush2.msra.mxu0 0.0
    %3696 = vmatprep.subr.mxu0 0.0
    %3697 = vmatpush2.msra.mxu0 0.0
    %3698 = vmatprep.subr.mxu0 0.0
    %3699 = vmatpush2.msra.mxu0 0.0
    %3700 = vmatprep.mubr.f32.mxu0 0.0
    %v3701 = vand.u32 %v3399, 4294901760
    %v3702 = vsub.f32 %v3399, %v3701
    %3703 = vmatmul.mubr.f32.gmra.mxu0 %v3702
    %v3704 = vpop.f32.mrf.mxu0
    %v3705 = vadd.f32 %v3607, %v3704
    %v3706 = vpop.f32.mrf.mxu0
    %3707 = vmatprep.mubr.f32.mxu0 0.0
    %v3708 = vand.u32 %v3402, 4294901760
    %v3709 = vsub.f32 %v3402, %v3708
    %3710 = vmatmul.mubr.f32.gmra.mxu0 %v3709
    %v3711 = vpop.f32.mrf.mxu0
    %v3712 = vadd.f32 %v3613, %v3711
    %v3713 = vpop.f32.mrf.mxu0
    %3714 = vmatprep.mubr.f32.mxu0 0.0
    %v3715 = vand.u32 %v3405, 4294901760
    %v3716 = vsub.f32 %v3405, %v3715
    %3717 = vmatmul.mubr.f32.gmra.mxu0 %v3716
    %v3718 = vpop.f32.mrf.mxu0
    %v3719 = vadd.f32 %v3619, %v3718
    %v3720 = vpop.f32.mrf.mxu0
    %3721 = vmatprep.mubr.f32.mxu0 0.0
    %v3722 = vand.u32 %v3408, 4294901760
    %v3723 = vsub.f32 %v3408, %v3722
    %3724 = vmatmul.mubr.f32.gmra.mxu0 %v3723
    %v3725 = vpop.f32.mrf.mxu0
    %v3726 = vadd.f32 %v3625, %v3725
    %v3727 = vpop.f32.mrf.mxu0
    %3728 = vdwg.mxu0
    %3729 = vmatprep.subr.mxu0 0.0
    %3730 = vmatpush1.msra.mxu0 0.0
    %3731 = vmatprep.subr.mxu0 0.0
    %3732 = vmatpush1.msra.mxu0 0.0
    %3733 = vmatprep.subr.mxu0 0.0
    %3734 = vmatpush1.msra.mxu0 0.0
    %3735 = vmatprep.subr.mxu0 0.0
    %3736 = vmatpush1.msra.mxu0 0.0
    %3737 = vmatprep.subr.mxu0 0.0
    %3738 = vmatpush1.msra.mxu0 0.0
    %3739 = vmatprep.subr.mxu0 0.0
    %3740 = vmatpush1.msra.mxu0 0.0
    %3741 = vmatprep.subr.mxu0 0.0
    %3742 = vmatpush1.msra.mxu0 0.0
    %3743 = vmatprep.subr.mxu0 0.0
    %3744 = vmatpush1.msra.mxu0 0.0
    %3745 = vmatprep.subr.mxu0 0.0
    %3746 = vmatpush1.msra.mxu0 0.0
    %3747 = vmatprep.subr.mxu0 0.0
    %3748 = vmatpush1.msra.mxu0 0.0
    %3749 = vmatprep.subr.mxu0 0.0
    %3750 = vmatpush1.msra.mxu0 0.0
    %3751 = vmatprep.subr.mxu0 0.0
    %3752 = vmatpush1.msra.mxu0 0.0
    %3753 = vmatprep.subr.mxu0 0.0
    %v3754 = vand.u32 %v3390, 4294901760
    %3755 = vmatpush1.msra.mxu0 %v3754
    %3756 = vmatprep.subr.mxu0 0.0
    %v3757 = vand.u32 %v3389, 4294901760
    %3758 = vmatpush1.msra.mxu0 %v3757
    %3759 = vmatprep.subr.mxu0 0.0
    %v3760 = vand.u32 %v3388, 4294901760
    %3761 = vmatpush1.msra.mxu0 %v3760
    %3762 = vmatprep.subr.mxu0 0.0
    %v3763 = vand.u32 %v3387, 4294901760
    %3764 = vmatpush1.msra.mxu0 %v3763
    %3765 = vmatprep.subr.mxu0 0.0
    %3766 = vmatpush2.msra.mxu0 0.0
    %3767 = vmatprep.subr.mxu0 0.0
    %3768 = vmatpush2.msra.mxu0 0.0
    %3769 = vmatprep.subr.mxu0 0.0
    %3770 = vmatpush2.msra.mxu0 0.0
    %3771 = vmatprep.subr.mxu0 0.0
    %3772 = vmatpush2.msra.mxu0 0.0
    %3773 = vmatprep.subr.mxu0 0.0
    %3774 = vmatpush2.msra.mxu0 0.0
    %3775 = vmatprep.subr.mxu0 0.0
    %3776 = vmatpush2.msra.mxu0 0.0
    %3777 = vmatprep.subr.mxu0 0.0
    %3778 = vmatpush2.msra.mxu0 0.0
    %3779 = vmatprep.subr.mxu0 0.0
    %3780 = vmatpush2.msra.mxu0 0.0
    %3781 = vmatprep.subr.mxu0 0.0
    %3782 = vmatpush2.msra.mxu0 0.0
    %3783 = vmatprep.subr.mxu0 0.0
    %3784 = vmatpush2.msra.mxu0 0.0
    %3785 = vmatprep.subr.mxu0 0.0
    %3786 = vmatpush2.msra.mxu0 0.0
    %3787 = vmatprep.subr.mxu0 0.0
    %3788 = vmatpush2.msra.mxu0 0.0
    %3789 = vmatprep.subr.mxu0 0.0
    %3790 = vmatpush2.msra.mxu0 0.0
    %3791 = vmatprep.subr.mxu0 0.0
    %3792 = vmatpush2.msra.mxu0 0.0
    %3793 = vmatprep.subr.mxu0 0.0
    %3794 = vmatpush2.msra.mxu0 0.0
    %3795 = vmatprep.subr.mxu0 0.0
    %3796 = vmatpush2.msra.mxu0 0.0
    %3797 = vmatprep.mubr.f32.mxu0 0.0
    %v3798 = vand.u32 %v3399, 4294901760
    %v3799 = vsub.f32 %v3399, %v3798
    %v3800 = vand.u32 %v3799, 4294901760
    %3801 = vmatmul.mubr.f32.gmra.mxu0 %v3800
    %v3802 = vpop.f32.mrf.mxu0
    %v3803 = vadd.f32 %v3705, %v3802
    %v3804 = vpop.f32.mrf.mxu0
    %3805 = vmatprep.mubr.f32.mxu0 0.0
    %v3806 = vand.u32 %v3402, 4294901760
    %v3807 = vsub.f32 %v3402, %v3806
    %v3808 = vand.u32 %v3807, 4294901760
    %3809 = vmatmul.mubr.f32.gmra.mxu0 %v3808
    %v3810 = vpop.f32.mrf.mxu0
    %v3811 = vadd.f32 %v3712, %v3810
    %v3812 = vpop.f32.mrf.mxu0
    %3813 = vmatprep.mubr.f32.mxu0 0.0
    %v3814 = vand.u32 %v3405, 4294901760
    %v3815 = vsub.f32 %v3405, %v3814
    %v3816 = vand.u32 %v3815, 4294901760
    %3817 = vmatmul.mubr.f32.gmra.mxu0 %v3816
    %v3818 = vpop.f32.mrf.mxu0
    %v3819 = vadd.f32 %v3719, %v3818
    %v3820 = vpop.f32.mrf.mxu0
    %3821 = vmatprep.mubr.f32.mxu0 0.0
    %v3822 = vand.u32 %v3408, 4294901760
    %v3823 = vsub.f32 %v3408, %v3822
    %v3824 = vand.u32 %v3823, 4294901760
    %3825 = vmatmul.mubr.f32.gmra.mxu0 %v3824
    %v3826 = vpop.f32.mrf.mxu0
    %v3827 = vadd.f32 %v3726, %v3826
    %v3828 = vpop.f32.mrf.mxu0
    %3829 = vdwg.mxu0
    %3830 = vmatprep.subr.mxu0 0.0
    %3831 = vmatpush1.msra.mxu0 0.0
    %3832 = vmatprep.subr.mxu0 0.0
    %3833 = vmatpush1.msra.mxu0 0.0
    %3834 = vmatprep.subr.mxu0 0.0
    %3835 = vmatpush1.msra.mxu0 0.0
    %3836 = vmatprep.subr.mxu0 0.0
    %3837 = vmatpush1.msra.mxu0 0.0
    %3838 = vmatprep.subr.mxu0 0.0
    %3839 = vmatpush1.msra.mxu0 0.0
    %3840 = vmatprep.subr.mxu0 0.0
    %3841 = vmatpush1.msra.mxu0 0.0
    %3842 = vmatprep.subr.mxu0 0.0
    %3843 = vmatpush1.msra.mxu0 0.0
    %3844 = vmatprep.subr.mxu0 0.0
    %3845 = vmatpush1.msra.mxu0 0.0
    %3846 = vmatprep.subr.mxu0 0.0
    %3847 = vmatpush1.msra.mxu0 0.0
    %3848 = vmatprep.subr.mxu0 0.0
    %3849 = vmatpush1.msra.mxu0 0.0
    %3850 = vmatprep.subr.mxu0 0.0
    %3851 = vmatpush1.msra.mxu0 0.0
    %3852 = vmatprep.subr.mxu0 0.0
    %3853 = vmatpush1.msra.mxu0 0.0
    %3854 = vmatprep.subr.mxu0 0.0
    %v3855 = vand.u32 %v3390, 4294901760
    %v3856 = vsub.f32 %v3390, %v3855
    %v3857 = vand.u32 %v3856, 4294901760
    %3858 = vmatpush1.msra.mxu0 %v3857
    %3859 = vmatprep.subr.mxu0 0.0
    %v3860 = vand.u32 %v3389, 4294901760
    %v3861 = vsub.f32 %v3389, %v3860
    %v3862 = vand.u32 %v3861, 4294901760
    %3863 = vmatpush1.msra.mxu0 %v3862
    %3864 = vmatprep.subr.mxu0 0.0
    %v3865 = vand.u32 %v3388, 4294901760
    %v3866 = vsub.f32 %v3388, %v3865
    %v3867 = vand.u32 %v3866, 4294901760
    %3868 = vmatpush1.msra.mxu0 %v3867
    %3869 = vmatprep.subr.mxu0 0.0
    %v3870 = vand.u32 %v3387, 4294901760
    %v3871 = vsub.f32 %v3387, %v3870
    %v3872 = vand.u32 %v3871, 4294901760
    %3873 = vmatpush1.msra.mxu0 %v3872
    %3874 = vmatprep.subr.mxu0 0.0
    %3875 = vmatpush2.msra.mxu0 0.0
    %3876 = vmatprep.subr.mxu0 0.0
    %3877 = vmatpush2.msra.mxu0 0.0
    %3878 = vmatprep.subr.mxu0 0.0
    %3879 = vmatpush2.msra.mxu0 0.0
    %3880 = vmatprep.subr.mxu0 0.0
    %3881 = vmatpush2.msra.mxu0 0.0
    %3882 = vmatprep.subr.mxu0 0.0
    %3883 = vmatpush2.msra.mxu0 0.0
    %3884 = vmatprep.subr.mxu0 0.0
    %3885 = vmatpush2.msra.mxu0 0.0
    %3886 = vmatprep.subr.mxu0 0.0
    %3887 = vmatpush2.msra.mxu0 0.0
    %3888 = vmatprep.subr.mxu0 0.0
    %3889 = vmatpush2.msra.mxu0 0.0
    %3890 = vmatprep.subr.mxu0 0.0
    %3891 = vmatpush2.msra.mxu0 0.0
    %3892 = vmatprep.subr.mxu0 0.0
    %3893 = vmatpush2.msra.mxu0 0.0
    %3894 = vmatprep.subr.mxu0 0.0
    %3895 = vmatpush2.msra.mxu0 0.0
    %3896 = vmatprep.subr.mxu0 0.0
    %3897 = vmatpush2.msra.mxu0 0.0
    %3898 = vmatprep.subr.mxu0 0.0
    %3899 = vmatpush2.msra.mxu0 0.0
    %3900 = vmatprep.subr.mxu0 0.0
    %3901 = vmatpush2.msra.mxu0 0.0
    %3902 = vmatprep.subr.mxu0 0.0
    %3903 = vmatpush2.msra.mxu0 0.0
    %3904 = vmatprep.subr.mxu0 0.0
    %3905 = vmatpush2.msra.mxu0 0.0
    %3906 = vmatprep.mubr.f32.mxu0 0.0
    %v3907 = vand.u32 %v3399, 4294901760
    %3908 = vmatmul.mubr.f32.gmra.mxu0 %v3907
    %v3909 = vpop.f32.mrf.mxu0
    %v3910 = vadd.f32 %v3803, %v3909
    %v3911 = vpop.f32.mrf.mxu0
    %3912 = vmatprep.mubr.f32.mxu0 0.0
    %v3913 = vand.u32 %v3402, 4294901760
    %3914 = vmatmul.mubr.f32.gmra.mxu0 %v3913
    %v3915 = vpop.f32.mrf.mxu0
    %v3916 = vadd.f32 %v3811, %v3915
    %v3917 = vpop.f32.mrf.mxu0
    %3918 = vmatprep.mubr.f32.mxu0 0.0
    %v3919 = vand.u32 %v3405, 4294901760
    %3920 = vmatmul.mubr.f32.gmra.mxu0 %v3919
    %v3921 = vpop.f32.mrf.mxu0
    %v3922 = vadd.f32 %v3819, %v3921
    %v3923 = vpop.f32.mrf.mxu0
    %3924 = vmatprep.mubr.f32.mxu0 0.0
    %v3925 = vand.u32 %v3408, 4294901760
    %3926 = vmatmul.mubr.f32.gmra.mxu0 %v3925
    %v3927 = vpop.f32.mrf.mxu0
    %v3928 = vadd.f32 %v3827, %v3927
    %v3929 = vpop.f32.mrf.mxu0
    %3930 = vdwg.mxu0
    %3931 = vmatprep.subr.mxu0 0.0
    %3932 = vmatpush1.msra.mxu0 0.0
    %3933 = vmatprep.subr.mxu0 0.0
    %3934 = vmatpush1.msra.mxu0 0.0
    %3935 = vmatprep.subr.mxu0 0.0
    %3936 = vmatpush1.msra.mxu0 0.0
    %3937 = vmatprep.subr.mxu0 0.0
    %3938 = vmatpush1.msra.mxu0 0.0
    %3939 = vmatprep.subr.mxu0 0.0
    %3940 = vmatpush1.msra.mxu0 0.0
    %3941 = vmatprep.subr.mxu0 0.0
    %3942 = vmatpush1.msra.mxu0 0.0
    %3943 = vmatprep.subr.mxu0 0.0
    %3944 = vmatpush1.msra.mxu0 0.0
    %3945 = vmatprep.subr.mxu0 0.0
    %3946 = vmatpush1.msra.mxu0 0.0
    %3947 = vmatprep.subr.mxu0 0.0
    %3948 = vmatpush1.msra.mxu0 0.0
    %3949 = vmatprep.subr.mxu0 0.0
    %3950 = vmatpush1.msra.mxu0 0.0
    %3951 = vmatprep.subr.mxu0 0.0
    %3952 = vmatpush1.msra.mxu0 0.0
    %3953 = vmatprep.subr.mxu0 0.0
    %3954 = vmatpush1.msra.mxu0 0.0
    %3955 = vmatprep.subr.mxu0 0.0
    %v3956 = vand.u32 %v3390, 4294901760
    %3957 = vmatpush1.msra.mxu0 %v3956
    %3958 = vmatprep.subr.mxu0 0.0
    %v3959 = vand.u32 %v3389, 4294901760
    %3960 = vmatpush1.msra.mxu0 %v3959
    %3961 = vmatprep.subr.mxu0 0.0
    %v3962 = vand.u32 %v3388, 4294901760
    %3963 = vmatpush1.msra.mxu0 %v3962
    %3964 = vmatprep.subr.mxu0 0.0
    %v3965 = vand.u32 %v3387, 4294901760
    %3966 = vmatpush1.msra.mxu0 %v3965
    %3967 = vmatprep.subr.mxu0 0.0
    %3968 = vmatpush2.msra.mxu0 0.0
    %3969 = vmatprep.subr.mxu0 0.0
    %3970 = vmatpush2.msra.mxu0 0.0
    %3971 = vmatprep.subr.mxu0 0.0
    %3972 = vmatpush2.msra.mxu0 0.0
    %3973 = vmatprep.subr.mxu0 0.0
    %3974 = vmatpush2.msra.mxu0 0.0
    %3975 = vmatprep.subr.mxu0 0.0
    %3976 = vmatpush2.msra.mxu0 0.0
    %3977 = vmatprep.subr.mxu0 0.0
    %3978 = vmatpush2.msra.mxu0 0.0
    %3979 = vmatprep.subr.mxu0 0.0
    %3980 = vmatpush2.msra.mxu0 0.0
    %3981 = vmatprep.subr.mxu0 0.0
    %3982 = vmatpush2.msra.mxu0 0.0
    %3983 = vmatprep.subr.mxu0 0.0
    %3984 = vmatpush2.msra.mxu0 0.0
    %3985 = vmatprep.subr.mxu0 0.0
    %3986 = vmatpush2.msra.mxu0 0.0
    %3987 = vmatprep.subr.mxu0 0.0
    %3988 = vmatpush2.msra.mxu0 0.0
    %3989 = vmatprep.subr.mxu0 0.0
    %3990 = vmatpush2.msra.mxu0 0.0
    %3991 = vmatprep.subr.mxu0 0.0
    %3992 = vmatpush2.msra.mxu0 0.0
    %3993 = vmatprep.subr.mxu0 0.0
    %3994 = vmatpush2.msra.mxu0 0.0
    %3995 = vmatprep.subr.mxu0 0.0
    %3996 = vmatpush2.msra.mxu0 0.0
    %3997 = vmatprep.subr.mxu0 0.0
    %3998 = vmatpush2.msra.mxu0 0.0
    %3999 = vmatprep.mubr.f32.mxu0 0.0
    %v4000 = vand.u32 %v3399, 4294901760
    %4001 = vmatmul.mubr.f32.gmra.mxu0 %v4000
    %v4002 = vpop.f32.mrf.mxu0
    %v4003 = vadd.f32 %v3910, %v4002
    %v4004 = vpop.f32.mrf.mxu0
    %4005 = vmatprep.mubr.f32.mxu0 0.0
    %v4006 = vand.u32 %v3402, 4294901760
    %4007 = vmatmul.mubr.f32.gmra.mxu0 %v4006
    %v4008 = vpop.f32.mrf.mxu0
    %v4009 = vadd.f32 %v3916, %v4008
    %v4010 = vpop.f32.mrf.mxu0
    %4011 = vmatprep.mubr.f32.mxu0 0.0
    %v4012 = vand.u32 %v3405, 4294901760
    %4013 = vmatmul.mubr.f32.gmra.mxu0 %v4012
    %v4014 = vpop.f32.mrf.mxu0
    %v4015 = vadd.f32 %v3922, %v4014
    %v4016 = vpop.f32.mrf.mxu0
    %4017 = vmatprep.mubr.f32.mxu0 0.0
    %v4018 = vand.u32 %v3408, 4294901760
    %4019 = vmatmul.mubr.f32.gmra.mxu0 %v4018
    %v4020 = vpop.f32.mrf.mxu0
    %v4021 = vadd.f32 %v3928, %v4020
    %v4022 = vpop.f32.mrf.mxu0
    %4023 = vdwg.mxu0
    %4024 = vst.msk [vmem:[#allocation16] sm:$0xff] %vm166, %v4003
    %4025 = vst.msk [vmem:[#allocation16 + $0x8] sm:$0xff] %vm166, %v4009
    %4026 = vst.msk [vmem:[#allocation16 + $0x10] sm:$0xff] %vm166, %v4015
    %4027 = vst.msk [vmem:[#allocation16 + $0x18] sm:$0xff] %vm166, %v4021
    // Predicated region
    $region82: #{tpu_custom_call.1} parent=1 // pred_check
      _
    $region83: #{tpu_custom_call.1} parent=1 // pred_check_branch
      %4029 = sbr.rel (0) target = $region85
    $region84: #{tpu_custom_call.1} parent=1 // pred_region
      %s4031 = ssub.s32 512, 512
      %4032 = vsyncadd [#allocation4], %s4031
      %s4033 = sshll.u32 [#allocation16], 4
      %s4034 = int_to_ptr.vmem [resolvable:$true] %s4033
      %4039 = dma.vmem_to_hbm [thread:$0]  %s4034, 512, %s12, [#allocation4], 128, 128, 8
    $region85: #{tpu_custom_call.1} parent=1 // pred_fallthru
      _
    // Predicated region
    $region86: #{tpu_custom_call.1} parent=1 // pred_check
      _
    $region87: #{tpu_custom_call.1} parent=1 // pred_check_branch
      %4041 = sbr.rel (0) target = $region89
    $region88: #{tpu_custom_call.1} parent=1 // pred_region
      %4042 = dma.done [#allocation4], 512
    $region89: #{tpu_custom_call.1} parent=1 // pred_fallthru
      _
    %4043 = vsyncpa [#allocation3], 1
    %4044 = vsyncpa [#allocation6], 1
    %4045 = vsyncpa [#allocation9], 1
    %4046 = vsyncpa [#allocation12], 1
    %4047 = vsyncpa [#allocation15], 1
    %4048 = vsyncpa [#allocation4], 1

</llo_original>
